<compile_context>
chip_gen: v7x
topology: tpu7x:2x2x1
jax: 0.10.0
libtpu: 0.0.40
codegen_flags: <defaults>
</compile_context>

<pallas_src>
import functools

import jax
import jax.numpy as jnp
from jax.experimental import pallas as pl
from jax.experimental.pallas import tpu as pltpu

LN_EPS = 1e-12  # DistilBERT layer-norm epsilon


# ----------------------------------------------------------------------------- kernel
def fused_forward_kernel(x_ref, eg_ref, eb_ref,
                         wq_ref, wk_ref, wv_ref, wo_ref,
                         w1_ref, w2_ref, vec_ref, b1_ref,
                         cw_ref, cb_ref,
                         o_ref, h_ref, *, num_heads, b_blk, seq_len):
    """One (batch-block b, layer l) grid step. h_ref carries the f32 activation across l."""
    l = pl.program_id(1)
    S = seq_len
    D = h_ref.shape[-1]
    M = b_blk * S
    H = num_heads
    dh = D // H
    scale = 1.0 / float(dh) ** 0.5

    def layer_norm(v, g, b):
        mu = jnp.mean(v, axis=-1, keepdims=True)
        var = jnp.mean((v - mu) ** 2, axis=-1, keepdims=True)
        return (v - mu) * jax.lax.rsqrt(var + LN_EPS) * g + b

    @pl.when(l == 0)
    def _():
        # Embedding LayerNorm folded into the first layer step (no extra HBM round trip).
        h_ref[...] = layer_norm(x_ref[...].reshape(M, D).astype(jnp.float32),
                                eg_ref[...], eb_ref[...])

    # Packed per-layer (9, D) bias / LN vectors: [bq, bk, bv, bo, g1, b1n, b2, g2, b2n]
    vec = vec_ref[0]
    bq, bk, bv, bo = vec[0:1], vec[1:2], vec[2:3], vec[3:4]
    g1, bt1, b2, g2, bt2 = vec[4:5], vec[5:6], vec[6:7], vec[7:8], vec[8:9]

    x = h_ref[...]                                    # (M, D) f32 activation carry
    xb = x.astype(jnp.bfloat16)

    # Q/K/V projections: full-width bf16 matmuls, f32 accumulation.
    # 1/sqrt(dh) folded into q (much cheaper than scaling the (H,S,S) scores).
    q = (jnp.dot(xb, wq_ref[0], preferred_element_type=jnp.float32) + bq) * scale
    k = jnp.dot(xb, wk_ref[0], preferred_element_type=jnp.float32) + bk
    v = jnp.dot(xb, wv_ref[0], preferred_element_type=jnp.float32) + bv
    qb = q.astype(jnp.bfloat16)
    kb = k.astype(jnp.bfloat16)
    vb = v.astype(jnp.bfloat16)

    def split_heads(t2d):
        # (S, D) -> (H, S, dh): one reshape + one permute relayout (not H lane slices).
        return pltpu.einshape("shd->hsd", t2d.reshape(S, H, dh))

    ctx_rows = []
    for b in range(b_blk):                            # static, small batch block
        r = slice(b * S, (b + 1) * S)
        qh, kh, vh = split_heads(qb[r]), split_heads(kb[r]), split_heads(vb[r])
        s = jnp.einsum('hqd,hkd->hqk', qh, kh,
                       preferred_element_type=jnp.float32)            # (H, S, S)
        # TODO(synk): no attention/padding mask (reference forward takes only input_ids).
        s = s - jnp.max(s, axis=-1, keepdims=True)
        p = jnp.exp(s)
        inv = pl.reciprocal(jnp.sum(p, axis=-1, keepdims=True), approx=True)
        p = (p * inv).astype(jnp.bfloat16)
        ctx = jnp.einsum('hqk,hkd->hqd', p, vh,
                         preferred_element_type=jnp.float32)           # (H, S, dh)
        # Merge heads back onto the lane axis: one relayout per batch element.
        ctx_rows.append(pltpu.einshape("hsd->shd",
                                       ctx.astype(jnp.bfloat16)).reshape(S, D))
    ctx_all = ctx_rows[0] if b_blk == 1 else jnp.concatenate(ctx_rows, axis=0)  # (M, D)

    # Output projection: single full-width contraction (K = D); no per-head sum, no
    # in-kernel slicing of Wo.
    attn = jnp.dot(ctx_all, wo_ref[0], preferred_element_type=jnp.float32) + bo

    # residual + LayerNorm 1  (dropout = identity in eval mode)
    h1 = layer_norm(x + attn, g1, bt1)

    # FFN: Linear -> GELU -> Linear (bf16 operands, f32 accumulation)
    f = jnp.dot(h1.astype(jnp.bfloat16), w1_ref[0],
                preferred_element_type=jnp.float32) + b1_ref[0]
    # TODO(synk): DistilBERT uses exact (erf) GELU; tanh approximation used here.
    f = jax.nn.gelu(f)
    f = jnp.dot(f.astype(jnp.bfloat16), w2_ref[0],
                preferred_element_type=jnp.float32) + b2

    # residual + LayerNorm 2
    h2 = layer_norm(h1 + f, g2, bt2)
    h_ref[...] = h2                                   # carry to next layer (VMEM-resident)

    @pl.when(l == pl.num_programs(1) - 1)
    def _():
        # Classifier fused into the final layer step: only CLS rows ever leave the kernel.
        if b_blk == 1:
            cls = h2[0:1, :]
        else:
            cls = jnp.concatenate([h2[b * S:b * S + 1, :] for b in range(b_blk)], axis=0)
        logits = jnp.dot(cls, cw_ref[...], preferred_element_type=jnp.float32) + cb_ref[...]
        o_ref[...] = logits.astype(o_ref.dtype)


# ----------------------------------------------------------------------------- sizing
def _vmem_capacity_bytes():
    try:
        return int(pltpu.get_tpu_info().vmem_capacity_bytes)
    except Exception:
        return 64 << 20          # conservative fallback (v7x per-core VMEM)


def _vmem_estimate(b_blk, S, D, F, H, labels):
    w_bf16 = (4 * D * D + 2 * D * F) * 2              # per-layer matmul weights (bf16)
    w_f32 = (9 * D + F) * 4                           # packed vectors + ffn b1 (f32)
    consts = (2 * D + D * labels + 2 * labels) * 4
    carry = b_blk * S * D * 4                         # f32 activation carry scratch
    x_in = 2 * b_blk * S * D * 4                      # double-buffered input block
    acts = b_blk * S * (12 * D + 4 * F) * 4 + 3 * H * S * S * 4
    return 2 * (w_bf16 + w_f32) + consts + carry + x_in + acts + (2 << 20)


def _pick_b_blk(B, S, D, F, H, labels, cap):
    """Largest divisor of B (<=8) whose working set fits comfortably in VMEM."""
    budget = max(cap - (16 << 20), 16 << 20)
    best = 1
    for cand in range(1, min(B, 8) + 1):
        if B % cand == 0 and _vmem_estimate(cand, S, D, F, H, labels) <= budget:
            best = cand
    return best


# ----------------------------------------------------------------------------- wrapper
def distilbert_fused_call(x, params, num_heads):
    """Embedding LN + all transformer layers + classifier head in a single pallas_call."""
    B, S, D = x.shape
    lp = params["layers"]
    L = lp["wq"].shape[0]
    F = lp["w1"].shape[2]
    labels = params["cls_w"].shape[1]

    cap = _vmem_capacity_bytes()
    b_blk = _pick_b_blk(B, S, D, F, num_heads, labels, cap)
    # TODO(synk): at production sizes (D=768, F=3072, S=512) on v7x (64 MiB VMEM) the FFN
    # should additionally be K-chunked and attention query-blocked (online softmax); not
    # needed at these shapes.
    vmem_limit = int(max(16 << 20,
                         min(_vmem_estimate(b_blk, S, D, F, num_heads, labels) + (4 << 20),
                             cap - (8 << 20))))

    def per_layer(*rest):      # stacked [L, ...] param, block indexed by layer l
        return pl.BlockSpec((1,) + tuple(rest), lambda b, l: (l,) + (0,) * len(rest))

    def const(*shape):         # constant over the whole grid
        return pl.BlockSpec(tuple(shape), lambda b, l: (0,) * len(shape))

    kernel = functools.partial(fused_forward_kernel, num_heads=num_heads,
                               b_blk=b_blk, seq_len=S)
    return pl.pallas_call(
        kernel,
        out_shape=jax.ShapeDtypeStruct((B, labels), jnp.float32),
        grid_spec=pltpu.PrefetchScalarGridSpec(
            num_scalar_prefetch=0, grid=(B // b_blk, L),
            in_specs=[
                pl.BlockSpec((b_blk, S, D), lambda b, l: (b, 0, 0)),   # x (resident over l)
                const(1, D), const(1, D),                              # embedding LN g/b
                per_layer(D, D), per_layer(D, D),                      # wq, wk
                per_layer(D, D), per_layer(D, D),                      # wv, wo
                per_layer(D, F), per_layer(F, D),                      # ffn w1, w2
                per_layer(9, D), per_layer(1, F),                      # packed vecs, ffn b1
                const(D, labels), const(1, labels),                    # classifier w, b
            ],
            out_specs=pl.BlockSpec((b_blk, labels), lambda b, l: (b, 0)),
            scratch_shapes=[pltpu.VMEM((b_blk * S, D), jnp.float32)]),
        compiler_params=pltpu.CompilerParams(
            dimension_semantics=("parallel", "arbitrary"),
            vmem_limit_bytes=vmem_limit),
    )(x, params["emb_ln_g"], params["emb_ln_b"],
      lp["wq"], lp["wk"], lp["wv"], lp["wo"],
      lp["w1"], lp["w2"], lp["vecs"], lp["b1"],
      params["cls_w"], params["cls_b"])


# ----------------------------------------------------------------------------- model
def init_params(key, vocab_size, embed_dim, max_seq_len, num_layers, num_heads,
                ff_dim, num_labels):
    D, F, L = embed_dim, ff_dim, num_layers

    def nrm(k, shape, dtype=jnp.float32):
        return (jax.random.normal(k, shape, jnp.float32) * 0.02).astype(dtype)

    keys = jax.random.split(key, 9)
    zeros_d = jnp.zeros((L, 1, D), jnp.float32)
    ones_d = jnp.ones((L, 1, D), jnp.float32)
    # Packed per-layer D-sized vectors; order matches the kernel's unpacking:
    #   [bq, bk, bv, bo, ln1_g, ln1_b, ffn_b2, ln2_g, ln2_b]
    vecs = jnp.concatenate([zeros_d, zeros_d, zeros_d, zeros_d,
                            ones_d, zeros_d, zeros_d, ones_d, zeros_d], axis=1)
    return {
        "tok_emb": nrm(keys[0], (vocab_size, D)),
        "pos_emb": nrm(keys[1], (max_seq_len, D)),
        "emb_ln_g": jnp.ones((1, D), jnp.float32),
        "emb_ln_b": jnp.zeros((1, D), jnp.float32),
        "cls_w": nrm(keys[2], (D, num_labels)),
        "cls_b": jnp.zeros((1, num_labels), jnp.float32),
        # Per-layer weights stacked on a leading L axis; matmul weights in bf16
        # (MXU-native), biases / LN params in f32 (packed).
        "layers": {
            "wq": nrm(keys[3], (L, D, D), jnp.bfloat16),
            "wk": nrm(keys[4], (L, D, D), jnp.bfloat16),
            "wv": nrm(keys[5], (L, D, D), jnp.bfloat16),
            "wo": nrm(keys[6], (L, D, D), jnp.bfloat16),
            "w1": nrm(keys[7], (L, D, F), jnp.bfloat16),
            "w2": nrm(keys[8], (L, F, D), jnp.bfloat16),
            "vecs": vecs,                                  # (L, 9, D) f32
            "b1": jnp.zeros((L, 1, F), jnp.float32),       # (L, 1, F) f32
        },
    }


def distilbert_forward(params, input_ids, num_heads):
    B, S = input_ids.shape
    positions = jnp.arange(S)
    # Embedding table gathers stay in plain JAX (dropout = identity in eval mode).
    x = params["tok_emb"][input_ids] + params["pos_emb"][positions][None, :, :]   # (B,S,D)
    # Embedding LN + all transformer blocks + classifier: ONE fused Pallas call.
    logits = distilbert_fused_call(x, params, num_heads)                           # (B, L)
    return logits


# ----------------------------------------------------------------------------- main
if __name__ == "__main__":
    vocab_size, embed_dim, max_seq_len = 100, 32, 16
    num_layers, num_heads, ff_dim, num_labels = 2, 4, 64, 2
    batch, seq_len = 2, 8

    key = jax.random.PRNGKey(0)
    k_param, k_ids = jax.random.split(key)
    params = init_params(k_param, vocab_size, embed_dim, max_seq_len,
                         num_layers, num_heads, ff_dim, num_labels)
    input_ids = jax.random.randint(k_ids, (batch, seq_len), 0, vocab_size,
                                   dtype=jnp.int32)

    logits = distilbert_forward(params, input_ids, num_heads)
    jax.block_until_ready(logits)
    assert logits.shape == (batch, num_labels), logits.shape
    print("KERNEL_OK")
</pallas_src>

<mosaic_0001>
module attributes {stable_mosaic.version = 11 : i64} {
  func.func @fused_forward_kernel(%arg0: i32, %arg1: i32, %arg2: memref<2x8x32xf32, #tpu.memory_space<vmem>>, %arg3: memref<1x32xf32, #tpu.memory_space<vmem>>, %arg4: memref<1x32xf32, #tpu.memory_space<vmem>>, %arg5: memref<1x32x32xbf16, #tpu.memory_space<vmem>>, %arg6: memref<1x32x32xbf16, #tpu.memory_space<vmem>>, %arg7: memref<1x32x32xbf16, #tpu.memory_space<vmem>>, %arg8: memref<1x32x32xbf16, #tpu.memory_space<vmem>>, %arg9: memref<1x32x64xbf16, #tpu.memory_space<vmem>>, %arg10: memref<1x64x32xbf16, #tpu.memory_space<vmem>>, %arg11: memref<1x9x32xf32, #tpu.memory_space<vmem>>, %arg12: memref<1x1x64xf32, #tpu.memory_space<vmem>>, %arg13: memref<32x2xf32, #tpu.memory_space<vmem>>, %arg14: memref<1x2xf32, #tpu.memory_space<vmem>>, %arg15: memref<2x2xf32, #tpu.memory_space<vmem>>, %arg16: memref<16x32xf32, #tpu.memory_space<vmem>>) attributes {dimension_semantics = [#tpu.dimension_semantics<parallel>, #tpu.dimension_semantics<arbitrary>], iteration_bounds = array<i64: 1, 2>, scalar_prefetch = 0 : i64, scratch_operands = 1 : i64, tpu.core_type = #tpu.core_type<tc>, window_params = [{transform_indices = @transform_0, window_bounds = array<i64: 2, 8, 32>}, {pipeline_mode = #tpu.pipeline_mode<synchronous>, transform_indices = @transform_1, window_bounds = array<i64: 1, 32>}, {pipeline_mode = #tpu.pipeline_mode<synchronous>, transform_indices = @transform_2, window_bounds = array<i64: 1, 32>}, {transform_indices = @transform_3, window_bounds = array<i64: 1, 32, 32>}, {transform_indices = @transform_4, window_bounds = array<i64: 1, 32, 32>}, {transform_indices = @transform_5, window_bounds = array<i64: 1, 32, 32>}, {transform_indices = @transform_6, window_bounds = array<i64: 1, 32, 32>}, {transform_indices = @transform_7, window_bounds = array<i64: 1, 32, 64>}, {transform_indices = @transform_8, window_bounds = array<i64: 1, 64, 32>}, {transform_indices = @transform_9, window_bounds = array<i64: 1, 9, 32>}, {transform_indices = @transform_10, window_bounds = array<i64: 1, 1, 64>}, {pipeline_mode = #tpu.pipeline_mode<synchronous>, transform_indices = @transform_11, window_bounds = array<i64: 32, 2>}, {pipeline_mode = #tpu.pipeline_mode<synchronous>, transform_indices = @transform_12, window_bounds = array<i64: 1, 2>}, {transform_indices = @transform_13, window_bounds = array<i64: 2, 2>}]} {
    %c0_i32 = arith.constant 0 : i32
    %0 = arith.cmpi eq, %arg1, %c0_i32 : i32
    %1 = arith.extui %0 : i1 to i32
    %c0_i32_0 = arith.constant 0 : i32
    %2 = arith.cmpi ne, %1, %c0_i32_0 : i32
    scf.if %2 {
      %c0_57 = arith.constant 0 : index
      %c0_58 = arith.constant 0 : index
      %c0_59 = arith.constant 0 : index
      %169 = vector.load %arg2[%c0_57, %c0_58, %c0_59] : memref<2x8x32xf32, #tpu.memory_space<vmem>>, vector<2x8x32xf32>
      %170 = vector.shape_cast %169 : vector<2x8x32xf32> to vector<16x32xf32>
      %c0_60 = arith.constant 0 : index
      %c0_61 = arith.constant 0 : index
      %171 = vector.load %arg3[%c0_60, %c0_61] : memref<1x32xf32, #tpu.memory_space<vmem>>, vector<1x32xf32>
      %c0_62 = arith.constant 0 : index
      %c0_63 = arith.constant 0 : index
      %172 = vector.load %arg4[%c0_62, %c0_63] : memref<1x32xf32, #tpu.memory_space<vmem>>, vector<1x32xf32>
      %cst_64 = arith.constant dense<0.000000e+00> : vector<16xf32>
      %173 = vector.multi_reduction <add>, %170, %cst_64 [1] : vector<16x32xf32> to vector<16xf32>
      %174 = vector.shape_cast %173 : vector<16xf32> to vector<16x1xf32>
      %cst_65 = arith.constant 3.200000e+01 : f32
      %175 = vector.broadcast %cst_65 : f32 to vector<16x1xf32>
      %176 = arith.divf %174, %175 : vector<16x1xf32>
      %177 = vector.broadcast %176 : vector<16x1xf32> to vector<16x32xf32>
      %178 = arith.subf %170, %177 : vector<16x32xf32>
      %179 = arith.mulf %178, %178 : vector<16x32xf32>
      %cst_66 = arith.constant dense<0.000000e+00> : vector<16xf32>
      %180 = vector.multi_reduction <add>, %179, %cst_66 [1] : vector<16x32xf32> to vector<16xf32>
      %181 = vector.shape_cast %180 : vector<16xf32> to vector<16x1xf32>
      %cst_67 = arith.constant 3.200000e+01 : f32
      %182 = vector.broadcast %cst_67 : f32 to vector<16x1xf32>
      %183 = arith.divf %181, %182 : vector<16x1xf32>
      %184 = vector.broadcast %176 : vector<16x1xf32> to vector<16x32xf32>
      %185 = arith.subf %170, %184 : vector<16x32xf32>
      %cst_68 = arith.constant 9.99999996E-13 : f32
      %186 = vector.broadcast %cst_68 : f32 to vector<16x1xf32>
      %187 = arith.addf %183, %186 : vector<16x1xf32>
      %188 = math.rsqrt %187 : vector<16x1xf32>
      %189 = vector.broadcast %188 : vector<16x1xf32> to vector<16x32xf32>
      %190 = arith.mulf %185, %189 : vector<16x32xf32>
      %191 = vector.broadcast %171 : vector<1x32xf32> to vector<16x32xf32>
      %192 = arith.mulf %190, %191 : vector<16x32xf32>
      %193 = vector.broadcast %172 : vector<1x32xf32> to vector<16x32xf32>
      %194 = arith.addf %192, %193 : vector<16x32xf32>
      %c0_69 = arith.constant 0 : index
      %c0_70 = arith.constant 0 : index
      %195 = vector.load %arg16[%c0_69, %c0_70] : memref<16x32xf32, #tpu.memory_space<vmem>>, vector<16x32xf32>
      tpu.vector_store %arg16[%c0_69, %c0_70], %194 {strides = array<i32>} : memref<16x32xf32, #tpu.memory_space<vmem>>, vector<16x32xf32>,
    } else {
    }
    %c0 = arith.constant 0 : index
    %c0_1 = arith.constant 0 : index
    %c0_2 = arith.constant 0 : index
    %3 = vector.load %arg11[%c0, %c0_1, %c0_2] : memref<1x9x32xf32, #tpu.memory_space<vmem>>, vector<1x9x32xf32>
    %4 = vector.shape_cast %3 : vector<1x9x32xf32> to vector<9x32xf32>
    %5 = vector.extract_strided_slice %4 {offsets = [0, 0], sizes = [1, 32], strides = [1, 1]} : vector<9x32xf32> to vector<1x32xf32>
    %6 = vector.extract_strided_slice %4 {offsets = [1, 0], sizes = [1, 32], strides = [1, 1]} : vector<9x32xf32> to vector<1x32xf32>
    %7 = vector.extract_strided_slice %4 {offsets = [2, 0], sizes = [1, 32], strides = [1, 1]} : vector<9x32xf32> to vector<1x32xf32>
    %8 = vector.extract_strided_slice %4 {offsets = [3, 0], sizes = [1, 32], strides = [1, 1]} : vector<9x32xf32> to vector<1x32xf32>
    %9 = vector.extract_strided_slice %4 {offsets = [4, 0], sizes = [1, 32], strides = [1, 1]} : vector<9x32xf32> to vector<1x32xf32>
    %10 = vector.extract_strided_slice %4 {offsets = [5, 0], sizes = [1, 32], strides = [1, 1]} : vector<9x32xf32> to vector<1x32xf32>
    %11 = vector.extract_strided_slice %4 {offsets = [6, 0], sizes = [1, 32], strides = [1, 1]} : vector<9x32xf32> to vector<1x32xf32>
    %12 = vector.extract_strided_slice %4 {offsets = [7, 0], sizes = [1, 32], strides = [1, 1]} : vector<9x32xf32> to vector<1x32xf32>
    %13 = vector.extract_strided_slice %4 {offsets = [8, 0], sizes = [1, 32], strides = [1, 1]} : vector<9x32xf32> to vector<1x32xf32>
    %c0_3 = arith.constant 0 : index
    %c0_4 = arith.constant 0 : index
    %14 = vector.load %arg16[%c0_3, %c0_4] : memref<16x32xf32, #tpu.memory_space<vmem>>, vector<16x32xf32>
    %15 = arith.truncf %14 : vector<16x32xf32> to vector<16x32xbf16>
    %c0_5 = arith.constant 0 : index
    %c0_6 = arith.constant 0 : index
    %c0_7 = arith.constant 0 : index
    %16 = vector.load %arg5[%c0_5, %c0_6, %c0_7] : memref<1x32x32xbf16, #tpu.memory_space<vmem>>, vector<1x32x32xbf16>
    %17 = vector.shape_cast %16 : vector<1x32x32xbf16> to vector<32x32xbf16>
    %cst = arith.constant dense<0.000000e+00> : vector<16x32xf32>
    %18 = tpu.matmul %15, %17, %cst {dimension_numbers = #tpu.dot_dimension_numbers<[1], [0], [0], [1], [0, 0, 1, 1], [], []>} : vector<16x32xbf16>, vector<32x32xbf16>, vector<16x32xf32> -> vector<16x32xf32>
    %19 = vector.broadcast %5 : vector<1x32xf32> to vector<16x32xf32>
    %20 = arith.addf %18, %19 : vector<16x32xf32>
    %cst_8 = arith.constant 0.353553385 : f32
    %21 = vector.broadcast %cst_8 : f32 to vector<16x32xf32>
    %22 = arith.mulf %20, %21 : vector<16x32xf32>
    %c0_9 = arith.constant 0 : index
    %c0_10 = arith.constant 0 : index
    %c0_11 = arith.constant 0 : index
    %23 = vector.load %arg6[%c0_9, %c0_10, %c0_11] : memref<1x32x32xbf16, #tpu.memory_space<vmem>>, vector<1x32x32xbf16>
    %24 = vector.shape_cast %23 : vector<1x32x32xbf16> to vector<32x32xbf16>
    %cst_12 = arith.constant dense<0.000000e+00> : vector<16x32xf32>
    %25 = tpu.matmul %15, %24, %cst_12 {dimension_numbers = #tpu.dot_dimension_numbers<[1], [0], [0], [1], [0, 0, 1, 1], [], []>} : vector<16x32xbf16>, vector<32x32xbf16>, vector<16x32xf32> -> vector<16x32xf32>
    %26 = vector.broadcast %6 : vector<1x32xf32> to vector<16x32xf32>
    %27 = arith.addf %25, %26 : vector<16x32xf32>
    %c0_13 = arith.constant 0 : index
    %c0_14 = arith.constant 0 : index
    %c0_15 = arith.constant 0 : index
    %28 = vector.load %arg7[%c0_13, %c0_14, %c0_15] : memref<1x32x32xbf16, #tpu.memory_space<vmem>>, vector<1x32x32xbf16>
    %29 = vector.shape_cast %28 : vector<1x32x32xbf16> to vector<32x32xbf16>
    %cst_16 = arith.constant dense<0.000000e+00> : vector<16x32xf32>
    %30 = tpu.matmul %15, %29, %cst_16 {dimension_numbers = #tpu.dot_dimension_numbers<[1], [0], [0], [1], [0, 0, 1, 1], [], []>} : vector<16x32xbf16>, vector<32x32xbf16>, vector<16x32xf32> -> vector<16x32xf32>
    %31 = vector.broadcast %7 : vector<1x32xf32> to vector<16x32xf32>
    %32 = arith.addf %30, %31 : vector<16x32xf32>
    %33 = arith.truncf %22 : vector<16x32xf32> to vector<16x32xbf16>
    %34 = arith.truncf %27 : vector<16x32xf32> to vector<16x32xbf16>
    %35 = arith.truncf %32 : vector<16x32xf32> to vector<16x32xbf16>
    %36 = vector.extract_strided_slice %33 {offsets = [0, 0], sizes = [8, 32], strides = [1, 1]} : vector<16x32xbf16> to vector<8x32xbf16>
    %37 = vector.shape_cast %36 : vector<8x32xbf16> to vector<8x4x8xbf16>
    %38 = tpu.transpose %37, [1, 0, 2] : vector<8x4x8xbf16> -> vector<4x8x8xbf16>
    %39 = vector.extract_strided_slice %34 {offsets = [0, 0], sizes = [8, 32], strides = [1, 1]} : vector<16x32xbf16> to vector<8x32xbf16>
    %40 = vector.shape_cast %39 : vector<8x32xbf16> to vector<8x4x8xbf16>
    %41 = tpu.transpose %40, [1, 0, 2] : vector<8x4x8xbf16> -> vector<4x8x8xbf16>
    %42 = vector.extract_strided_slice %35 {offsets = [0, 0], sizes = [8, 32], strides = [1, 1]} : vector<16x32xbf16> to vector<8x32xbf16>
    %43 = vector.shape_cast %42 : vector<8x32xbf16> to vector<8x4x8xbf16>
    %44 = tpu.transpose %43, [1, 0, 2] : vector<8x4x8xbf16> -> vector<4x8x8xbf16>
    "tpu.trace_start"() <{level = 10 : i32, message = "hqd,hkd->hqk"}> : () -> ()
    %cst_17 = arith.constant dense<0.000000e+00> : vector<4x8x8xf32>
    %45 = tpu.matmul %38, %41, %cst_17 {dimension_numbers = #tpu.dot_dimension_numbers<[2], [2], [1], [1], [0, 0, 0, 1, 1, 1], [0], [0]>} : vector<4x8x8xbf16>, vector<4x8x8xbf16>, vector<4x8x8xf32> -> vector<4x8x8xf32>
    "tpu.trace_stop"() : () -> ()
    %cst_18 = arith.constant dense<0xFF800000> : vector<4x8xf32>
    %46 = vector.multi_reduction <maximumf>, %45, %cst_18 [2] : vector<4x8x8xf32> to vector<4x8xf32>
    %47 = vector.shape_cast %46 : vector<4x8xf32> to vector<4x8x1xf32>
    %48 = vector.broadcast %47 : vector<4x8x1xf32> to vector<4x8x8xf32>
    %49 = arith.subf %45, %48 : vector<4x8x8xf32>
    %50 = math.exp %49 : vector<4x8x8xf32>
    %cst_19 = arith.constant dense<0.000000e+00> : vector<4x8xf32>
    %51 = vector.multi_reduction <add>, %50, %cst_19 [2] : vector<4x8x8xf32> to vector<4x8xf32>
    %52 = vector.shape_cast %51 : vector<4x8xf32> to vector<4x8x1xf32>
    %53 = tpu.reciprocal %52 {approx = true} : vector<4x8x1xf32> -> vector<4x8x1xf32>
    %54 = vector.broadcast %53 : vector<4x8x1xf32> to vector<4x8x8xf32>
    %55 = arith.mulf %50, %54 : vector<4x8x8xf32>
    %56 = arith.truncf %55 : vector<4x8x8xf32> to vector<4x8x8xbf16>
    "tpu.trace_start"() <{level = 10 : i32, message = "hqk,hkd->hqd"}> : () -> ()
    %cst_20 = arith.constant dense<0.000000e+00> : vector<4x8x8xf32>
    %57 = tpu.matmul %56, %44, %cst_20 {dimension_numbers = #tpu.dot_dimension_numbers<[2], [1], [1], [2], [0, 0, 0, 1, 1, 2], [0], [0]>} : vector<4x8x8xbf16>, vector<4x8x8xbf16>, vector<4x8x8xf32> -> vector<4x8x8xf32>
    "tpu.trace_stop"() : () -> ()
    %58 = arith.truncf %57 : vector<4x8x8xf32> to vector<4x8x8xbf16>
    %59 = tpu.transpose %58, [1, 0, 2] : vector<4x8x8xbf16> -> vector<8x4x8xbf16>
    %60 = vector.shape_cast %59 : vector<8x4x8xbf16> to vector<8x32xbf16>
    %61 = vector.extract_strided_slice %33 {offsets = [8, 0], sizes = [8, 32], strides = [1, 1]} : vector<16x32xbf16> to vector<8x32xbf16>
    %62 = vector.shape_cast %61 : vector<8x32xbf16> to vector<8x4x8xbf16>
    %63 = tpu.transpose %62, [1, 0, 2] : vector<8x4x8xbf16> -> vector<4x8x8xbf16>
    %64 = vector.extract_strided_slice %34 {offsets = [8, 0], sizes = [8, 32], strides = [1, 1]} : vector<16x32xbf16> to vector<8x32xbf16>
    %65 = vector.shape_cast %64 : vector<8x32xbf16> to vector<8x4x8xbf16>
    %66 = tpu.transpose %65, [1, 0, 2] : vector<8x4x8xbf16> -> vector<4x8x8xbf16>
    %67 = vector.extract_strided_slice %35 {offsets = [8, 0], sizes = [8, 32], strides = [1, 1]} : vector<16x32xbf16> to vector<8x32xbf16>
    %68 = vector.shape_cast %67 : vector<8x32xbf16> to vector<8x4x8xbf16>
    %69 = tpu.transpose %68, [1, 0, 2] : vector<8x4x8xbf16> -> vector<4x8x8xbf16>
    "tpu.trace_start"() <{level = 10 : i32, message = "hqd,hkd->hqk"}> : () -> ()
    %cst_21 = arith.constant dense<0.000000e+00> : vector<4x8x8xf32>
    %70 = tpu.matmul %63, %66, %cst_21 {dimension_numbers = #tpu.dot_dimension_numbers<[2], [2], [1], [1], [0, 0, 0, 1, 1, 1], [0], [0]>} : vector<4x8x8xbf16>, vector<4x8x8xbf16>, vector<4x8x8xf32> -> vector<4x8x8xf32>
    "tpu.trace_stop"() : () -> ()
    %cst_22 = arith.constant dense<0xFF800000> : vector<4x8xf32>
    %71 = vector.multi_reduction <maximumf>, %70, %cst_22 [2] : vector<4x8x8xf32> to vector<4x8xf32>
    %72 = vector.shape_cast %71 : vector<4x8xf32> to vector<4x8x1xf32>
    %73 = vector.broadcast %72 : vector<4x8x1xf32> to vector<4x8x8xf32>
    %74 = arith.subf %70, %73 : vector<4x8x8xf32>
    %75 = math.exp %74 : vector<4x8x8xf32>
    %cst_23 = arith.constant dense<0.000000e+00> : vector<4x8xf32>
    %76 = vector.multi_reduction <add>, %75, %cst_23 [2] : vector<4x8x8xf32> to vector<4x8xf32>
    %77 = vector.shape_cast %76 : vector<4x8xf32> to vector<4x8x1xf32>
    %78 = tpu.reciprocal %77 {approx = true} : vector<4x8x1xf32> -> vector<4x8x1xf32>
    %79 = vector.broadcast %78 : vector<4x8x1xf32> to vector<4x8x8xf32>
    %80 = arith.mulf %75, %79 : vector<4x8x8xf32>
    %81 = arith.truncf %80 : vector<4x8x8xf32> to vector<4x8x8xbf16>
    "tpu.trace_start"() <{level = 10 : i32, message = "hqk,hkd->hqd"}> : () -> ()
    %cst_24 = arith.constant dense<0.000000e+00> : vector<4x8x8xf32>
    %82 = tpu.matmul %81, %69, %cst_24 {dimension_numbers = #tpu.dot_dimension_numbers<[2], [1], [1], [2], [0, 0, 0, 1, 1, 2], [0], [0]>} : vector<4x8x8xbf16>, vector<4x8x8xbf16>, vector<4x8x8xf32> -> vector<4x8x8xf32>
    "tpu.trace_stop"() : () -> ()
    %83 = arith.truncf %82 : vector<4x8x8xf32> to vector<4x8x8xbf16>
    %84 = tpu.transpose %83, [1, 0, 2] : vector<4x8x8xbf16> -> vector<8x4x8xbf16>
    %85 = vector.shape_cast %84 : vector<8x4x8xbf16> to vector<8x32xbf16>
    %86 = tpu.concatenate %60, %85 in 0 : vector<8x32xbf16>, vector<8x32xbf16> -> vector<16x32xbf16>
    %c0_25 = arith.constant 0 : index
    %c0_26 = arith.constant 0 : index
    %c0_27 = arith.constant 0 : index
    %87 = vector.load %arg8[%c0_25, %c0_26, %c0_27] : memref<1x32x32xbf16, #tpu.memory_space<vmem>>, vector<1x32x32xbf16>
    %88 = vector.shape_cast %87 : vector<1x32x32xbf16> to vector<32x32xbf16>
    %cst_28 = arith.constant dense<0.000000e+00> : vector<16x32xf32>
    %89 = tpu.matmul %86, %88, %cst_28 {dimension_numbers = #tpu.dot_dimension_numbers<[1], [0], [0], [1], [0, 0, 1, 1], [], []>} : vector<16x32xbf16>, vector<32x32xbf16>, vector<16x32xf32> -> vector<16x32xf32>
    %90 = vector.broadcast %8 : vector<1x32xf32> to vector<16x32xf32>
    %91 = arith.addf %89, %90 : vector<16x32xf32>
    %92 = arith.addf %14, %91 : vector<16x32xf32>
    %cst_29 = arith.constant dense<0.000000e+00> : vector<16xf32>
    %93 = vector.multi_reduction <add>, %92, %cst_29 [1] : vector<16x32xf32> to vector<16xf32>
    %94 = vector.shape_cast %93 : vector<16xf32> to vector<16x1xf32>
    %cst_30 = arith.constant 3.200000e+01 : f32
    %95 = vector.broadcast %cst_30 : f32 to vector<16x1xf32>
    %96 = arith.divf %94, %95 : vector<16x1xf32>
    %97 = vector.broadcast %96 : vector<16x1xf32> to vector<16x32xf32>
    %98 = arith.subf %92, %97 : vector<16x32xf32>
    %99 = arith.mulf %98, %98 : vector<16x32xf32>
    %cst_31 = arith.constant dense<0.000000e+00> : vector<16xf32>
    %100 = vector.multi_reduction <add>, %99, %cst_31 [1] : vector<16x32xf32> to vector<16xf32>
    %101 = vector.shape_cast %100 : vector<16xf32> to vector<16x1xf32>
    %cst_32 = arith.constant 3.200000e+01 : f32
    %102 = vector.broadcast %cst_32 : f32 to vector<16x1xf32>
    %103 = arith.divf %101, %102 : vector<16x1xf32>
    %104 = vector.broadcast %96 : vector<16x1xf32> to vector<16x32xf32>
    %105 = arith.subf %92, %104 : vector<16x32xf32>
    %cst_33 = arith.constant 9.99999996E-13 : f32
    %106 = vector.broadcast %cst_33 : f32 to vector<16x1xf32>
    %107 = arith.addf %103, %106 : vector<16x1xf32>
    %108 = math.rsqrt %107 : vector<16x1xf32>
    %109 = vector.broadcast %108 : vector<16x1xf32> to vector<16x32xf32>
    %110 = arith.mulf %105, %109 : vector<16x32xf32>
    %111 = vector.broadcast %9 : vector<1x32xf32> to vector<16x32xf32>
    %112 = arith.mulf %110, %111 : vector<16x32xf32>
    %113 = vector.broadcast %10 : vector<1x32xf32> to vector<16x32xf32>
    %114 = arith.addf %112, %113 : vector<16x32xf32>
    %115 = arith.truncf %114 : vector<16x32xf32> to vector<16x32xbf16>
    %c0_34 = arith.constant 0 : index
    %c0_35 = arith.constant 0 : index
    %c0_36 = arith.constant 0 : index
    %116 = vector.load %arg9[%c0_34, %c0_35, %c0_36] : memref<1x32x64xbf16, #tpu.memory_space<vmem>>, vector<1x32x64xbf16>
    %117 = vector.shape_cast %116 : vector<1x32x64xbf16> to vector<32x64xbf16>
    %cst_37 = arith.constant dense<0.000000e+00> : vector<16x64xf32>
    %118 = tpu.matmul %115, %117, %cst_37 {dimension_numbers = #tpu.dot_dimension_numbers<[1], [0], [0], [1], [0, 0, 1, 1], [], []>} : vector<16x32xbf16>, vector<32x64xbf16>, vector<16x64xf32> -> vector<16x64xf32>
    %c0_38 = arith.constant 0 : index
    %c0_39 = arith.constant 0 : index
    %c0_40 = arith.constant 0 : index
    %119 = vector.load %arg12[%c0_38, %c0_39, %c0_40] : memref<1x1x64xf32, #tpu.memory_space<vmem>>, vector<1x1x64xf32>
    %120 = vector.shape_cast %119 : vector<1x1x64xf32> to vector<1x64xf32>
    %121 = vector.broadcast %120 : vector<1x64xf32> to vector<16x64xf32>
    %122 = arith.addf %118, %121 : vector<16x64xf32>
    %123 = arith.mulf %122, %122 : vector<16x64xf32>
    %124 = arith.mulf %122, %123 : vector<16x64xf32>
    %cst_41 = arith.constant 4.471500e-02 : f32
    %125 = vector.broadcast %cst_41 : f32 to vector<16x64xf32>
    %126 = arith.mulf %125, %124 : vector<16x64xf32>
    %127 = arith.addf %122, %126 : vector<16x64xf32>
    %cst_42 = arith.constant 0.797884583 : f32
    %128 = vector.broadcast %cst_42 : f32 to vector<16x64xf32>
    %129 = arith.mulf %128, %127 : vector<16x64xf32>
    %130 = math.tanh %129 : vector<16x64xf32>
    %cst_43 = arith.constant 1.000000e+00 : f32
    %131 = vector.broadcast %cst_43 : f32 to vector<16x64xf32>
    %132 = arith.addf %131, %130 : vector<16x64xf32>
    %cst_44 = arith.constant 5.000000e-01 : f32
    %133 = vector.broadcast %cst_44 : f32 to vector<16x64xf32>
    %134 = arith.mulf %133, %132 : vector<16x64xf32>
    %135 = arith.mulf %122, %134 : vector<16x64xf32>
    %136 = arith.truncf %135 : vector<16x64xf32> to vector<16x64xbf16>
    %c0_45 = arith.constant 0 : index
    %c0_46 = arith.constant 0 : index
    %c0_47 = arith.constant 0 : index
    %137 = vector.load %arg10[%c0_45, %c0_46, %c0_47] : memref<1x64x32xbf16, #tpu.memory_space<vmem>>, vector<1x64x32xbf16>
    %138 = vector.shape_cast %137 : vector<1x64x32xbf16> to vector<64x32xbf16>
    %cst_48 = arith.constant dense<0.000000e+00> : vector<16x32xf32>
    %139 = tpu.matmul %136, %138, %cst_48 {dimension_numbers = #tpu.dot_dimension_numbers<[1], [0], [0], [1], [0, 0, 1, 1], [], []>} : vector<16x64xbf16>, vector<64x32xbf16>, vector<16x32xf32> -> vector<16x32xf32>
    %140 = vector.broadcast %11 : vector<1x32xf32> to vector<16x32xf32>
    %141 = arith.addf %139, %140 : vector<16x32xf32>
    %142 = arith.addf %114, %141 : vector<16x32xf32>
    %cst_49 = arith.constant dense<0.000000e+00> : vector<16xf32>
    %143 = vector.multi_reduction <add>, %142, %cst_49 [1] : vector<16x32xf32> to vector<16xf32>
    %144 = vector.shape_cast %143 : vector<16xf32> to vector<16x1xf32>
    %cst_50 = arith.constant 3.200000e+01 : f32
    %145 = vector.broadcast %cst_50 : f32 to vector<16x1xf32>
    %146 = arith.divf %144, %145 : vector<16x1xf32>
    %147 = vector.broadcast %146 : vector<16x1xf32> to vector<16x32xf32>
    %148 = arith.subf %142, %147 : vector<16x32xf32>
    %149 = arith.mulf %148, %148 : vector<16x32xf32>
    %cst_51 = arith.constant dense<0.000000e+00> : vector<16xf32>
    %150 = vector.multi_reduction <add>, %149, %cst_51 [1] : vector<16x32xf32> to vector<16xf32>
    %151 = vector.shape_cast %150 : vector<16xf32> to vector<16x1xf32>
    %cst_52 = arith.constant 3.200000e+01 : f32
    %152 = vector.broadcast %cst_52 : f32 to vector<16x1xf32>
    %153 = arith.divf %151, %152 : vector<16x1xf32>
    %154 = vector.broadcast %146 : vector<16x1xf32> to vector<16x32xf32>
    %155 = arith.subf %142, %154 : vector<16x32xf32>
    %cst_53 = arith.constant 9.99999996E-13 : f32
    %156 = vector.broadcast %cst_53 : f32 to vector<16x1xf32>
    %157 = arith.addf %153, %156 : vector<16x1xf32>
    %158 = math.rsqrt %157 : vector<16x1xf32>
    %159 = vector.broadcast %158 : vector<16x1xf32> to vector<16x32xf32>
    %160 = arith.mulf %155, %159 : vector<16x32xf32>
    %161 = vector.broadcast %12 : vector<1x32xf32> to vector<16x32xf32>
    %162 = arith.mulf %160, %161 : vector<16x32xf32>
    %163 = vector.broadcast %13 : vector<1x32xf32> to vector<16x32xf32>
    %164 = arith.addf %162, %163 : vector<16x32xf32>
    %c0_54 = arith.constant 0 : index
    %c0_55 = arith.constant 0 : index
    %165 = vector.load %arg16[%c0_54, %c0_55] : memref<16x32xf32, #tpu.memory_space<vmem>>, vector<16x32xf32>
    tpu.vector_store %arg16[%c0_54, %c0_55], %164 {strides = array<i32>} : memref<16x32xf32, #tpu.memory_space<vmem>>, vector<16x32xf32>,
    %c1_i32 = arith.constant 1 : i32
    %166 = arith.cmpi eq, %arg1, %c1_i32 : i32
    %167 = arith.extui %166 : i1 to i32
    %c0_i32_56 = arith.constant 0 : i32
    %168 = arith.cmpi ne, %167, %c0_i32_56 : i32
    scf.if %168 {
      %169 = vector.extract_strided_slice %164 {offsets = [0, 0], sizes = [1, 32], strides = [1, 1]} : vector<16x32xf32> to vector<1x32xf32>
      %170 = vector.extract_strided_slice %164 {offsets = [8, 0], sizes = [1, 32], strides = [1, 1]} : vector<16x32xf32> to vector<1x32xf32>
      %171 = tpu.concatenate %169, %170 in 0 : vector<1x32xf32>, vector<1x32xf32> -> vector<2x32xf32>
      %c0_57 = arith.constant 0 : index
      %c0_58 = arith.constant 0 : index
      %172 = vector.load %arg13[%c0_57, %c0_58] : memref<32x2xf32, #tpu.memory_space<vmem>>, vector<32x2xf32>
      %cst_59 = arith.constant dense<0.000000e+00> : vector<2x2xf32>
      %173 = tpu.matmul %171, %172, %cst_59 {dimension_numbers = #tpu.dot_dimension_numbers<[1], [0], [0], [1], [0, 0, 1, 1], [], []>} : vector<2x32xf32>, vector<32x2xf32>, vector<2x2xf32> -> vector<2x2xf32>
      %c0_60 = arith.constant 0 : index
      %c0_61 = arith.constant 0 : index
      %174 = vector.load %arg14[%c0_60, %c0_61] : memref<1x2xf32, #tpu.memory_space<vmem>>, vector<1x2xf32>
      %175 = vector.broadcast %174 : vector<1x2xf32> to vector<2x2xf32>
      %176 = arith.addf %173, %175 : vector<2x2xf32>
      %c0_62 = arith.constant 0 : index
      %c0_63 = arith.constant 0 : index
      %177 = vector.load %arg15[%c0_62, %c0_63] : memref<2x2xf32, #tpu.memory_space<vmem>>, vector<2x2xf32>
      tpu.vector_store %arg15[%c0_62, %c0_63], %176 {strides = array<i32>} : memref<2x2xf32, #tpu.memory_space<vmem>>, vector<2x2xf32>,
    } else {
    }
    return
  }
  func.func @transform_0(%arg0: i32, %arg1: i32) -> (i32, i32, i32) {
    %c0_i32 = arith.constant 0 : i32
    %c0_i32_0 = arith.constant 0 : i32
    %c0_i32_1 = arith.constant 0 : i32
    return %arg0, %c0_i32, %c0_i32_0 : i32, i32, i32
  }
  func.func @transform_1(%arg0: i32, %arg1: i32) -> (i32, i32) {
    %c0_i32 = arith.constant 0 : i32
    %c0_i32_0 = arith.constant 0 : i32
    %c0_i32_1 = arith.constant 0 : i32
    return %c0_i32, %c0_i32_0 : i32, i32
  }
  func.func @transform_2(%arg0: i32, %arg1: i32) -> (i32, i32) {
    %c0_i32 = arith.constant 0 : i32
    %c0_i32_0 = arith.constant 0 : i32
    %c0_i32_1 = arith.constant 0 : i32
    return %c0_i32, %c0_i32_0 : i32, i32
  }
  func.func @transform_3(%arg0: i32, %arg1: i32) -> (i32, i32, i32) {
    %c0_i32 = arith.constant 0 : i32
    %c0_i32_0 = arith.constant 0 : i32
    %c0_i32_1 = arith.constant 0 : i32
    return %arg1, %c0_i32, %c0_i32_0 : i32, i32, i32
  }
  func.func @transform_4(%arg0: i32, %arg1: i32) -> (i32, i32, i32) {
    %c0_i32 = arith.constant 0 : i32
    %c0_i32_0 = arith.constant 0 : i32
    %c0_i32_1 = arith.constant 0 : i32
    return %arg1, %c0_i32, %c0_i32_0 : i32, i32, i32
  }
  func.func @transform_5(%arg0: i32, %arg1: i32) -> (i32, i32, i32) {
    %c0_i32 = arith.constant 0 : i32
    %c0_i32_0 = arith.constant 0 : i32
    %c0_i32_1 = arith.constant 0 : i32
    return %arg1, %c0_i32, %c0_i32_0 : i32, i32, i32
  }
  func.func @transform_6(%arg0: i32, %arg1: i32) -> (i32, i32, i32) {
    %c0_i32 = arith.constant 0 : i32
    %c0_i32_0 = arith.constant 0 : i32
    %c0_i32_1 = arith.constant 0 : i32
    return %arg1, %c0_i32, %c0_i32_0 : i32, i32, i32
  }
  func.func @transform_7(%arg0: i32, %arg1: i32) -> (i32, i32, i32) {
    %c0_i32 = arith.constant 0 : i32
    %c0_i32_0 = arith.constant 0 : i32
    %c0_i32_1 = arith.constant 0 : i32
    return %arg1, %c0_i32, %c0_i32_0 : i32, i32, i32
  }
  func.func @transform_8(%arg0: i32, %arg1: i32) -> (i32, i32, i32) {
    %c0_i32 = arith.constant 0 : i32
    %c0_i32_0 = arith.constant 0 : i32
    %c0_i32_1 = arith.constant 0 : i32
    return %arg1, %c0_i32, %c0_i32_0 : i32, i32, i32
  }
  func.func @transform_9(%arg0: i32, %arg1: i32) -> (i32, i32, i32) {
    %c0_i32 = arith.constant 0 : i32
    %c0_i32_0 = arith.constant 0 : i32
    %c0_i32_1 = arith.constant 0 : i32
    return %arg1, %c0_i32, %c0_i32_0 : i32, i32, i32
  }
  func.func @transform_10(%arg0: i32, %arg1: i32) -> (i32, i32, i32) {
    %c0_i32 = arith.constant 0 : i32
    %c0_i32_0 = arith.constant 0 : i32
    %c0_i32_1 = arith.constant 0 : i32
    return %arg1, %c0_i32, %c0_i32_0 : i32, i32, i32
  }
  func.func @transform_11(%arg0: i32, %arg1: i32) -> (i32, i32) {
    %c0_i32 = arith.constant 0 : i32
    %c0_i32_0 = arith.constant 0 : i32
    %c0_i32_1 = arith.constant 0 : i32
    return %c0_i32, %c0_i32_0 : i32, i32
  }
  func.func @transform_12(%arg0: i32, %arg1: i32) -> (i32, i32) {
    %c0_i32 = arith.constant 0 : i32
    %c0_i32_0 = arith.constant 0 : i32
    %c0_i32_1 = arith.constant 0 : i32
    return %c0_i32, %c0_i32_0 : i32, i32
  }
  func.func @transform_13(%arg0: i32, %arg1: i32) -> (i32, i32) {
    %c0_i32 = arith.constant 0 : i32
    %c0_i32_0 = arith.constant 0 : i32
    return %arg0, %c0_i32 : i32, i32
  }
}

</mosaic_0001>

<llo_original>
// kernel: tpu_custom_call.1
$region0: #{tpu_custom_call.1}
  #allocation0 [shape = 'u32[]', space=smem, size = 0x4, offset = 0x4, fixed_abs, tag = 'smem constant byte address 0x4 - core index']
  #allocation1 [shape = 'u32[144,128]{1,0:T(1,128)}', space=vmem, size = 0x12000, scoped, tag = 'internal scratch']
  #allocation2 [shape = 'f32[16,32]{1,0:T(8,128)}', space=vmem, size = 0x2000, scoped, tag = 'scratch operand']
  %s0 = inlined_call_operand.hbm [shape: f32[2,8,32], index: 0, kind: input, shape index: {}]
  %s1 = inlined_call_operand.hbm [shape: f32[1,32], index: 1, kind: input, shape index: {}]
  %s2 = inlined_call_operand.hbm [shape: f32[1,32], index: 2, kind: input, shape index: {}]
  %s3 = inlined_call_operand.vmem [shape: bf16[2,32,32], index: 3, kind: input, shape index: {}]
  %s4 = inlined_call_operand.vmem [shape: bf16[2,32,32], index: 4, kind: input, shape index: {}]
  %s5 = inlined_call_operand.vmem [shape: bf16[2,32,32], index: 5, kind: input, shape index: {}]
  %s6 = inlined_call_operand.vmem [shape: bf16[2,32,32], index: 6, kind: input, shape index: {}]
  %s7 = inlined_call_operand.vmem [shape: bf16[2,32,64], index: 7, kind: input, shape index: {}]
  %s8 = inlined_call_operand.vmem [shape: bf16[2,64,32], index: 8, kind: input, shape index: {}]
  %s9 = inlined_call_operand.vmem [shape: f32[2,9,32], index: 9, kind: input, shape index: {}]
  %s10 = inlined_call_operand.vmem [shape: f32[2,1,64], index: 10, kind: input, shape index: {}]
  %s11 = inlined_call_operand.vmem [shape: f32[32,2], index: 11, kind: input, shape index: {}]
  %s12 = inlined_call_operand.vmem [shape: f32[1,2], index: 12, kind: input, shape index: {}]
  %s13 = inlined_call_operand.hbm [shape: f32[2,2], index: 13, kind: output, shape index: {}]
  %s14 = sld [smem:[#allocation0]]
  $region105: #{tpu_custom_call.1} parent=0
    _
  %s16 = ssub.s32 1, %s14
  %s17 = scalar_select 0, %s16, %s14
  $region1: #{tpu_custom_call.1} parent=0
    #allocation3 [shape = 'u8[8192]{0}', space=vmem, size = 0x2000, scoped, tag = 'input window, operand 0, single buffered']
    #allocation4 [shape = 's32[2]{0}', space=sflag, size = 0x8, scoped, tag = 'scoped memory for tpu_custom_call.1']
    #allocation5 [shape = 's32[2]{0}', space=sflag, size = 0x8, scoped, tag = 'scoped memory for tpu_custom_call.1']
    #allocation6 [shape = 'u8[512]{0}', space=vmem, size = 0x400, scoped, tag = 'input window, operand 1, single buffered']
    #allocation7 [shape = 's32[1]{0}', space=sflag, size = 0x4, scoped, tag = 'scoped memory for tpu_custom_call.1']
    #allocation8 [shape = 'u8[512]{0}', space=vmem, size = 0x400, scoped, tag = 'input window, operand 2, single buffered']
    #allocation9 [shape = 'u8[1024]{0}', space=vmem, size = 0x400, scoped, tag = 'output window, operand 0, single buffered']
    %18 = vsyncpa [#allocation4], 0
    %19 = vsyncpa [#allocation7], 0
    %20 = vsyncpa [#allocation5], 0
    loop: start=0, step=1, limit=4
    $region2: #{tpu_custom_call.1} parent=1 // loop_pre_header
      _
    $region3: #{tpu_custom_call.1} parent=1 // loop_header
      %s22 = sphi 0, %s26
      %p23 = scmp.ge.s32.totalorder %s22, 4
      %s29 = sphi 0, %s41
      %s30 = sphi 0, %s37
      %s31 = sphi 0, %s29
      %s32 = sphi 0, %s30
      %s33 = sphi 0, %s31
      %s34 = sphi 0, %s32
      %s44 = sphi 0, %s46
      %s47 = sphi 0, %s44
      %s48 = sphi 0, %s47
      %s64 = sphi 0, %s48
      %s68 = sphi 0, %s68
      %s70 = sphi 0, %s68
      %s71 = sphi 0, %s70
      %s85 = sphi 0, %s71
      %s89 = sphi 0, %s89
      %s91 = sphi 0, %s89
      %s92 = sphi 0, %s91
      %s106 = sphi 0, %s92
      %s112 = sphi 0, %s114
      %s115 = sphi 0, %s112
      %s116 = sphi 0, %s115
      %s132 = sphi 0, %s116
      %s138 = sphi 0, %s140
      %s141 = sphi 0, %s138
      %s142 = sphi 0, %s141
      %s158 = sphi 0, %s142
      %s164 = sphi 0, %s166
      %s167 = sphi 0, %s164
      %s168 = sphi 0, %s167
      %s184 = sphi 0, %s168
      %s190 = sphi 0, %s192
      %s193 = sphi 0, %s190
      %s194 = sphi 0, %s193
      %s210 = sphi 0, %s194
      %s216 = sphi 0, %s218
      %s219 = sphi 0, %s216
      %s220 = sphi 0, %s219
      %s236 = sphi 0, %s220
      %s242 = sphi 0, %s244
      %s245 = sphi 0, %s242
      %s246 = sphi 0, %s245
      %s262 = sphi 0, %s246
      %s268 = sphi 0, %s270
      %s271 = sphi 0, %s268
      %s272 = sphi 0, %s271
      %s288 = sphi 0, %s272
      %s294 = sphi 0, %s296
      %s297 = sphi 0, %s294
      %s298 = sphi 0, %s297
      %s314 = sphi 0, %s298
      %s318 = sphi 0, %s318
      %s320 = sphi 0, %s318
      %s321 = sphi 0, %s320
      %s335 = sphi 0, %s321
      %s339 = sphi 0, %s339
      %s341 = sphi 0, %s339
      %s342 = sphi 0, %s341
      %s356 = sphi 0, %s342
      %s362 = sphi 0, %s364
      %s365 = sphi 0, %s362
      %s366 = sphi 0, %s365
      %s382 = sphi 0, %s366
    $region4: #{tpu_custom_call.1} parent=1 // loop_header_branch
      %25 = sbr.rel (%p23) target = $region8
    $region5: #{tpu_custom_call.1} parent=1 // loop_body
      %s27 = ssub.s32 %s22, 1
      %s28 = ssub.s32 %s22, 2
      %s35 = sadd.s32 1, %s30
      %p36 = scmp.ge.s32.totalorder %s35, 2
      %s37 = scalar_select %p36, 0, %s35
      %s38 = sadd.s32 1, %s29
      %s39 = scalar_select %p36, %s38, %s29
      %p40 = scmp.ge.s32.totalorder %s39, 1
      %s41 = scalar_select %p40, 0, %s39
      %s42 = ssub.s32 %s29, %s41
      %p43 = scmp.eq.s32.totalorder %s42, 0
      %s45 = sadd.s32 %s44, 1
      %s46 = scalar_select %p43, %s44, %s45
      %p49 = pneg %p43
      %p50 = scmp.eq.s32.totalorder %s22, 1
      %p51 = por %p49, %p50
      %p52 = scmp.ne.s32.totalorder %s44, %s47
      %p53 = scmp.eq.s32.totalorder %s22, 0
      %p54 = por %p52, %p53
      %p55 = scmp.ne.s32.totalorder %s44, %s47
      %p56 = scmp.eq.s32.totalorder %s27, 1
      %p57 = por %p55, %p56
      %p58 = scmp.ne.s32.totalorder %s47, %s48
      %p59 = scmp.eq.s32.totalorder %s27, 0
      %p60 = por %p58, %p59
      %p61 = scmp.ne.s32.totalorder %s47, %s48
      %p62 = scmp.eq.s32.totalorder %s28, 1
      %p63 = por %p61, %p62
      %p65 = scmp.ne.s32.totalorder %s48, %s64
      %p66 = scmp.eq.s32.totalorder %s28, 0
      %p67 = por %p65, %p66
      %s69 = sadd.s32 %s68, 1
      %p72 = scmp.eq.s32.totalorder %s22, 1
      %p73 = scmp.ne.s32.totalorder %s68, %s70
      %p74 = scmp.eq.s32.totalorder %s22, 0
      %p75 = por %p73, %p74
      %p76 = scmp.ne.s32.totalorder %s68, %s70
      %p77 = scmp.eq.s32.totalorder %s27, 1
      %p78 = por %p76, %p77
      %p79 = scmp.ne.s32.totalorder %s70, %s71
      %p80 = scmp.eq.s32.totalorder %s27, 0
      %p81 = por %p79, %p80
      %p82 = scmp.ne.s32.totalorder %s70, %s71
      %p83 = scmp.eq.s32.totalorder %s28, 1
      %p84 = por %p82, %p83
      %p86 = scmp.ne.s32.totalorder %s71, %s85
      %p87 = scmp.eq.s32.totalorder %s28, 0
      %p88 = por %p86, %p87
      %s90 = sadd.s32 %s89, 1
      %p93 = scmp.eq.s32.totalorder %s22, 1
      %p94 = scmp.ne.s32.totalorder %s89, %s91
      %p95 = scmp.eq.s32.totalorder %s22, 0
      %p96 = por %p94, %p95
      %p97 = scmp.ne.s32.totalorder %s89, %s91
      %p98 = scmp.eq.s32.totalorder %s27, 1
      %p99 = por %p97, %p98
      %p100 = scmp.ne.s32.totalorder %s91, %s92
      %p101 = scmp.eq.s32.totalorder %s27, 0
      %p102 = por %p100, %p101
      %p103 = scmp.ne.s32.totalorder %s91, %s92
      %p104 = scmp.eq.s32.totalorder %s28, 1
      %p105 = por %p103, %p104
      %p107 = scmp.ne.s32.totalorder %s92, %s106
      %p108 = scmp.eq.s32.totalorder %s28, 0
      %p109 = por %p107, %p108
      %s110 = ssub.s32 %s30, %s37
      %p111 = scmp.eq.s32.totalorder %s110, 0
      %s113 = sadd.s32 %s112, 1
      %s114 = scalar_select %p111, %s112, %s113
      %p117 = pneg %p111
      %p118 = scmp.eq.s32.totalorder %s22, 1
      %p119 = por %p117, %p118
      %p120 = scmp.ne.s32.totalorder %s112, %s115
      %p121 = scmp.eq.s32.totalorder %s22, 0
      %p122 = por %p120, %p121
      %p123 = scmp.ne.s32.totalorder %s112, %s115
      %p124 = scmp.eq.s32.totalorder %s27, 1
      %p125 = por %p123, %p124
      %p126 = scmp.ne.s32.totalorder %s115, %s116
      %p127 = scmp.eq.s32.totalorder %s27, 0
      %p128 = por %p126, %p127
      %p129 = scmp.ne.s32.totalorder %s115, %s116
      %p130 = scmp.eq.s32.totalorder %s28, 1
      %p131 = por %p129, %p130
      %p133 = scmp.ne.s32.totalorder %s116, %s132
      %p134 = scmp.eq.s32.totalorder %s28, 0
      %p135 = por %p133, %p134
      %s136 = ssub.s32 %s30, %s37
      %p137 = scmp.eq.s32.totalorder %s136, 0
      %s139 = sadd.s32 %s138, 1
      %s140 = scalar_select %p137, %s138, %s139
      %p143 = pneg %p137
      %p144 = scmp.eq.s32.totalorder %s22, 1
      %p145 = por %p143, %p144
      %p146 = scmp.ne.s32.totalorder %s138, %s141
      %p147 = scmp.eq.s32.totalorder %s22, 0
      %p148 = por %p146, %p147
      %p149 = scmp.ne.s32.totalorder %s138, %s141
      %p150 = scmp.eq.s32.totalorder %s27, 1
      %p151 = por %p149, %p150
      %p152 = scmp.ne.s32.totalorder %s141, %s142
      %p153 = scmp.eq.s32.totalorder %s27, 0
      %p154 = por %p152, %p153
      %p155 = scmp.ne.s32.totalorder %s141, %s142
      %p156 = scmp.eq.s32.totalorder %s28, 1
      %p157 = por %p155, %p156
      %p159 = scmp.ne.s32.totalorder %s142, %s158
      %p160 = scmp.eq.s32.totalorder %s28, 0
      %p161 = por %p159, %p160
      %s162 = ssub.s32 %s30, %s37
      %p163 = scmp.eq.s32.totalorder %s162, 0
      %s165 = sadd.s32 %s164, 1
      %s166 = scalar_select %p163, %s164, %s165
      %p169 = pneg %p163
      %p170 = scmp.eq.s32.totalorder %s22, 1
      %p171 = por %p169, %p170
      %p172 = scmp.ne.s32.totalorder %s164, %s167
      %p173 = scmp.eq.s32.totalorder %s22, 0
      %p174 = por %p172, %p173
      %p175 = scmp.ne.s32.totalorder %s164, %s167
      %p176 = scmp.eq.s32.totalorder %s27, 1
      %p177 = por %p175, %p176
      %p178 = scmp.ne.s32.totalorder %s167, %s168
      %p179 = scmp.eq.s32.totalorder %s27, 0
      %p180 = por %p178, %p179
      %p181 = scmp.ne.s32.totalorder %s167, %s168
      %p182 = scmp.eq.s32.totalorder %s28, 1
      %p183 = por %p181, %p182
      %p185 = scmp.ne.s32.totalorder %s168, %s184
      %p186 = scmp.eq.s32.totalorder %s28, 0
      %p187 = por %p185, %p186
      %s188 = ssub.s32 %s30, %s37
      %p189 = scmp.eq.s32.totalorder %s188, 0
      %s191 = sadd.s32 %s190, 1
      %s192 = scalar_select %p189, %s190, %s191
      %p195 = pneg %p189
      %p196 = scmp.eq.s32.totalorder %s22, 1
      %p197 = por %p195, %p196
      %p198 = scmp.ne.s32.totalorder %s190, %s193
      %p199 = scmp.eq.s32.totalorder %s22, 0
      %p200 = por %p198, %p199
      %p201 = scmp.ne.s32.totalorder %s190, %s193
      %p202 = scmp.eq.s32.totalorder %s27, 1
      %p203 = por %p201, %p202
      %p204 = scmp.ne.s32.totalorder %s193, %s194
      %p205 = scmp.eq.s32.totalorder %s27, 0
      %p206 = por %p204, %p205
      %p207 = scmp.ne.s32.totalorder %s193, %s194
      %p208 = scmp.eq.s32.totalorder %s28, 1
      %p209 = por %p207, %p208
      %p211 = scmp.ne.s32.totalorder %s194, %s210
      %p212 = scmp.eq.s32.totalorder %s28, 0
      %p213 = por %p211, %p212
      %s214 = ssub.s32 %s30, %s37
      %p215 = scmp.eq.s32.totalorder %s214, 0
      %s217 = sadd.s32 %s216, 1
      %s218 = scalar_select %p215, %s216, %s217
      %p221 = pneg %p215
      %p222 = scmp.eq.s32.totalorder %s22, 1
      %p223 = por %p221, %p222
      %p224 = scmp.ne.s32.totalorder %s216, %s219
      %p225 = scmp.eq.s32.totalorder %s22, 0
      %p226 = por %p224, %p225
      %p227 = scmp.ne.s32.totalorder %s216, %s219
      %p228 = scmp.eq.s32.totalorder %s27, 1
      %p229 = por %p227, %p228
      %p230 = scmp.ne.s32.totalorder %s219, %s220
      %p231 = scmp.eq.s32.totalorder %s27, 0
      %p232 = por %p230, %p231
      %p233 = scmp.ne.s32.totalorder %s219, %s220
      %p234 = scmp.eq.s32.totalorder %s28, 1
      %p235 = por %p233, %p234
      %p237 = scmp.ne.s32.totalorder %s220, %s236
      %p238 = scmp.eq.s32.totalorder %s28, 0
      %p239 = por %p237, %p238
      %s240 = ssub.s32 %s30, %s37
      %p241 = scmp.eq.s32.totalorder %s240, 0
      %s243 = sadd.s32 %s242, 1
      %s244 = scalar_select %p241, %s242, %s243
      %p247 = pneg %p241
      %p248 = scmp.eq.s32.totalorder %s22, 1
      %p249 = por %p247, %p248
      %p250 = scmp.ne.s32.totalorder %s242, %s245
      %p251 = scmp.eq.s32.totalorder %s22, 0
      %p252 = por %p250, %p251
      %p253 = scmp.ne.s32.totalorder %s242, %s245
      %p254 = scmp.eq.s32.totalorder %s27, 1
      %p255 = por %p253, %p254
      %p256 = scmp.ne.s32.totalorder %s245, %s246
      %p257 = scmp.eq.s32.totalorder %s27, 0
      %p258 = por %p256, %p257
      %p259 = scmp.ne.s32.totalorder %s245, %s246
      %p260 = scmp.eq.s32.totalorder %s28, 1
      %p261 = por %p259, %p260
      %p263 = scmp.ne.s32.totalorder %s246, %s262
      %p264 = scmp.eq.s32.totalorder %s28, 0
      %p265 = por %p263, %p264
      %s266 = ssub.s32 %s30, %s37
      %p267 = scmp.eq.s32.totalorder %s266, 0
      %s269 = sadd.s32 %s268, 1
      %s270 = scalar_select %p267, %s268, %s269
      %p273 = pneg %p267
      %p274 = scmp.eq.s32.totalorder %s22, 1
      %p275 = por %p273, %p274
      %p276 = scmp.ne.s32.totalorder %s268, %s271
      %p277 = scmp.eq.s32.totalorder %s22, 0
      %p278 = por %p276, %p277
      %p279 = scmp.ne.s32.totalorder %s268, %s271
      %p280 = scmp.eq.s32.totalorder %s27, 1
      %p281 = por %p279, %p280
      %p282 = scmp.ne.s32.totalorder %s271, %s272
      %p283 = scmp.eq.s32.totalorder %s27, 0
      %p284 = por %p282, %p283
      %p285 = scmp.ne.s32.totalorder %s271, %s272
      %p286 = scmp.eq.s32.totalorder %s28, 1
      %p287 = por %p285, %p286
      %p289 = scmp.ne.s32.totalorder %s272, %s288
      %p290 = scmp.eq.s32.totalorder %s28, 0
      %p291 = por %p289, %p290
      %s292 = ssub.s32 %s30, %s37
      %p293 = scmp.eq.s32.totalorder %s292, 0
      %s295 = sadd.s32 %s294, 1
      %s296 = scalar_select %p293, %s294, %s295
      %p299 = pneg %p293
      %p300 = scmp.eq.s32.totalorder %s22, 1
      %p301 = por %p299, %p300
      %p302 = scmp.ne.s32.totalorder %s294, %s297
      %p303 = scmp.eq.s32.totalorder %s22, 0
      %p304 = por %p302, %p303
      %p305 = scmp.ne.s32.totalorder %s294, %s297
      %p306 = scmp.eq.s32.totalorder %s27, 1
      %p307 = por %p305, %p306
      %p308 = scmp.ne.s32.totalorder %s297, %s298
      %p309 = scmp.eq.s32.totalorder %s27, 0
      %p310 = por %p308, %p309
      %p311 = scmp.ne.s32.totalorder %s297, %s298
      %p312 = scmp.eq.s32.totalorder %s28, 1
      %p313 = por %p311, %p312
      %p315 = scmp.ne.s32.totalorder %s298, %s314
      %p316 = scmp.eq.s32.totalorder %s28, 0
      %p317 = por %p315, %p316
      %s319 = sadd.s32 %s318, 1
      %p322 = scmp.eq.s32.totalorder %s22, 1
      %p323 = scmp.ne.s32.totalorder %s318, %s320
      %p324 = scmp.eq.s32.totalorder %s22, 0
      %p325 = por %p323, %p324
      %p326 = scmp.ne.s32.totalorder %s318, %s320
      %p327 = scmp.eq.s32.totalorder %s27, 1
      %p328 = por %p326, %p327
      %p329 = scmp.ne.s32.totalorder %s320, %s321
      %p330 = scmp.eq.s32.totalorder %s27, 0
      %p331 = por %p329, %p330
      %p332 = scmp.ne.s32.totalorder %s320, %s321
      %p333 = scmp.eq.s32.totalorder %s28, 1
      %p334 = por %p332, %p333
      %p336 = scmp.ne.s32.totalorder %s321, %s335
      %p337 = scmp.eq.s32.totalorder %s28, 0
      %p338 = por %p336, %p337
      %s340 = sadd.s32 %s339, 1
      %p343 = scmp.eq.s32.totalorder %s22, 1
      %p344 = scmp.ne.s32.totalorder %s339, %s341
      %p345 = scmp.eq.s32.totalorder %s22, 0
      %p346 = por %p344, %p345
      %p347 = scmp.ne.s32.totalorder %s339, %s341
      %p348 = scmp.eq.s32.totalorder %s27, 1
      %p349 = por %p347, %p348
      %p350 = scmp.ne.s32.totalorder %s341, %s342
      %p351 = scmp.eq.s32.totalorder %s27, 0
      %p352 = por %p350, %p351
      %p353 = scmp.ne.s32.totalorder %s341, %s342
      %p354 = scmp.eq.s32.totalorder %s28, 1
      %p355 = por %p353, %p354
      %p357 = scmp.ne.s32.totalorder %s342, %s356
      %p358 = scmp.eq.s32.totalorder %s28, 0
      %p359 = por %p357, %p358
      %s360 = ssub.s32 %s29, %s41
      %p361 = scmp.eq.s32.totalorder %s360, 0
      %s363 = sadd.s32 %s362, 1
      %s364 = scalar_select %p361, %s362, %s363
      %p367 = pneg %p361
      %p368 = scmp.eq.s32.totalorder %s22, 1
      %p369 = por %p367, %p368
      %p370 = scmp.ne.s32.totalorder %s362, %s365
      %p371 = scmp.eq.s32.totalorder %s22, 0
      %p372 = por %p370, %p371
      %p373 = scmp.ne.s32.totalorder %s362, %s365
      %p374 = scmp.eq.s32.totalorder %s27, 1
      %p375 = por %p373, %p374
      %p376 = scmp.ne.s32.totalorder %s365, %s366
      %p377 = scmp.eq.s32.totalorder %s27, 0
      %p378 = por %p376, %p377
      %p379 = scmp.ne.s32.totalorder %s365, %s366
      %p380 = scmp.eq.s32.totalorder %s28, 1
      %p381 = por %p379, %p380
      %p383 = scmp.ne.s32.totalorder %s366, %s382
      %p384 = scmp.eq.s32.totalorder %s28, 0
      %p385 = por %p383, %p384
      %p386 = scmp.le.s32.totalorder 1, %s22
      %p387 = scmp.lt.s32.totalorder %s22, 3
      %p388 = pnand %p386, %p387
      %p389 = pneg %p388
      // Predicated region
      $region9: #{tpu_custom_call.1} parent=5 // pred_check
        _
      $region10: #{tpu_custom_call.1} parent=5 // pred_check_branch
        %391 = sbr.rel (%p388) target = $region12
      $region11: #{tpu_custom_call.1} parent=5 // pred_region
        %s392 = ssub.s32 %s22, 1
        // Predicated region
        $region13: #{tpu_custom_call.1} parent=11 // pred_check
          %p393 = pneg %p60
        $region14: #{tpu_custom_call.1} parent=11 // pred_check_branch
          %395 = sbr.rel (%p393) target = $region16
        $region15: #{tpu_custom_call.1} parent=11 // pred_region
          %s396 = smul.u32 2, %s31
          %s398 = ssub.s32 256, 256
          %399 = vsyncadd [#allocation4], %s398
          %s400 = smul.addr %s396, 128
          %s401 = scalar_lea.hbm %s0, %s400
          %s402 = sshll.u32 [#allocation3], 4
          %s403 = int_to_ptr.vmem [resolvable:$true] %s402
          %408 = dma.hbm_to_vmem [thread:$0]  %s401, 256, %s403, [#allocation4], 128, 128, 8
        $region16: #{tpu_custom_call.1} parent=11 // pred_fallthru
          _
        // Predicated region
        $region17: #{tpu_custom_call.1} parent=11 // pred_check
          %p409 = pneg %p81
        $region18: #{tpu_custom_call.1} parent=11 // pred_check_branch
          %411 = sbr.rel (%p409) target = $region20
        $region19: #{tpu_custom_call.1} parent=11 // pred_region
          %s413 = ssub.s32 16, 16
          %414 = vsyncadd [#allocation7], %s413
          %s416 = sshll.u32 [#allocation6], 4
          %s417 = int_to_ptr.vmem [resolvable:$true] %s416
          %419 = dma.hbm_to_vmem [thread:$0]  %s1, 16, %s417, [#allocation7]
        $region20: #{tpu_custom_call.1} parent=11 // pred_fallthru
          _
        // Predicated region
        $region21: #{tpu_custom_call.1} parent=11 // pred_check
          %p420 = pneg %p102
        $region22: #{tpu_custom_call.1} parent=11 // pred_check_branch
          %422 = sbr.rel (%p420) target = $region24
        $region23: #{tpu_custom_call.1} parent=11 // pred_region
          %s424 = ssub.s32 16, 16
          %425 = vsyncadd [#allocation7], %s424
          %s427 = sshll.u32 [#allocation8], 4
          %s428 = int_to_ptr.vmem [resolvable:$true] %s427
          %430 = dma.hbm_to_vmem [thread:$0]  %s2, 16, %s428, [#allocation7]
        $region24: #{tpu_custom_call.1} parent=11 // pred_fallthru
          _
        // Predicated region
        $region25: #{tpu_custom_call.1} parent=11 // pred_check
          %p431 = pneg %p331
        $region26: #{tpu_custom_call.1} parent=11 // pred_check_branch
          %433 = sbr.rel (%p431) target = $region28
        $region27: #{tpu_custom_call.1} parent=11 // pred_region
          _
        $region28: #{tpu_custom_call.1} parent=11 // pred_fallthru
          _
        // Predicated region
        $region29: #{tpu_custom_call.1} parent=11 // pred_check
          %p434 = pneg %p352
        $region30: #{tpu_custom_call.1} parent=11 // pred_check_branch
          %436 = sbr.rel (%p434) target = $region32
        $region31: #{tpu_custom_call.1} parent=11 // pred_region
          _
        $region32: #{tpu_custom_call.1} parent=11 // pred_fallthru
          _
      $region12: #{tpu_custom_call.1} parent=5 // pred_fallthru
        _
      %p437 = scmp.lt.s32.totalorder %s22, 2
      // Predicated region
      $region33: #{tpu_custom_call.1} parent=5 // pred_check
        %p438 = pneg %p437
      $region34: #{tpu_custom_call.1} parent=5 // pred_check_branch
        %440 = sbr.rel (%p438) target = $region36
      $region35: #{tpu_custom_call.1} parent=5 // pred_region
        // Predicated region
        $region37: #{tpu_custom_call.1} parent=35 // pred_check
          %p441 = pneg %p122
        $region38: #{tpu_custom_call.1} parent=35 // pred_check_branch
          %443 = sbr.rel (%p441) target = $region40
        $region39: #{tpu_custom_call.1} parent=35 // pred_region
          %p444 = scmp.lt.s32.totalorder %s30, 1
          %s445 = scalar_select %p444, %s30, 1
          %s446 = smul.addr %s445, 4
          %s447 = smul.addr %s446, 4
          %s448 = scalar_lea.vmem %s3, %s447
        $region40: #{tpu_custom_call.1} parent=35 // pred_fallthru
          _
        // Predicated region
        $region41: #{tpu_custom_call.1} parent=35 // pred_check
          %p449 = pneg %p148
        $region42: #{tpu_custom_call.1} parent=35 // pred_check_branch
          %451 = sbr.rel (%p449) target = $region44
        $region43: #{tpu_custom_call.1} parent=35 // pred_region
          %p452 = scmp.lt.s32.totalorder %s30, 1
          %s453 = scalar_select %p452, %s30, 1
          %s454 = smul.addr %s453, 4
          %s455 = smul.addr %s454, 4
          %s456 = scalar_lea.vmem %s4, %s455
        $region44: #{tpu_custom_call.1} parent=35 // pred_fallthru
          _
        // Predicated region
        $region45: #{tpu_custom_call.1} parent=35 // pred_check
          %p457 = pneg %p174
        $region46: #{tpu_custom_call.1} parent=35 // pred_check_branch
          %459 = sbr.rel (%p457) target = $region48
        $region47: #{tpu_custom_call.1} parent=35 // pred_region
          %p460 = scmp.lt.s32.totalorder %s30, 1
          %s461 = scalar_select %p460, %s30, 1
          %s462 = smul.addr %s461, 4
          %s463 = smul.addr %s462, 4
          %s464 = scalar_lea.vmem %s5, %s463
        $region48: #{tpu_custom_call.1} parent=35 // pred_fallthru
          _
        // Predicated region
        $region49: #{tpu_custom_call.1} parent=35 // pred_check
          %p465 = pneg %p200
        $region50: #{tpu_custom_call.1} parent=35 // pred_check_branch
          %467 = sbr.rel (%p465) target = $region52
        $region51: #{tpu_custom_call.1} parent=35 // pred_region
          %p468 = scmp.lt.s32.totalorder %s30, 1
          %s469 = scalar_select %p468, %s30, 1
          %s470 = smul.addr %s469, 4
          %s471 = smul.addr %s470, 4
          %s472 = scalar_lea.vmem %s6, %s471
        $region52: #{tpu_custom_call.1} parent=35 // pred_fallthru
          _
        // Predicated region
        $region53: #{tpu_custom_call.1} parent=35 // pred_check
          %p473 = pneg %p226
        $region54: #{tpu_custom_call.1} parent=35 // pred_check_branch
          %475 = sbr.rel (%p473) target = $region56
        $region55: #{tpu_custom_call.1} parent=35 // pred_region
          %p476 = scmp.lt.s32.totalorder %s30, 1
          %s477 = scalar_select %p476, %s30, 1
          %s478 = smul.addr %s477, 4
          %s479 = smul.addr %s478, 4
          %s480 = scalar_lea.vmem %s7, %s479
        $region56: #{tpu_custom_call.1} parent=35 // pred_fallthru
          _
        // Predicated region
        $region57: #{tpu_custom_call.1} parent=35 // pred_check
          %p481 = pneg %p252
        $region58: #{tpu_custom_call.1} parent=35 // pred_check_branch
          %483 = sbr.rel (%p481) target = $region60
        $region59: #{tpu_custom_call.1} parent=35 // pred_region
          %p484 = scmp.lt.s32.totalorder %s30, 1
          %s485 = scalar_select %p484, %s30, 1
          %s486 = smul.addr %s485, 8
          %s487 = smul.addr %s486, 4
          %s488 = scalar_lea.vmem %s8, %s487
        $region60: #{tpu_custom_call.1} parent=35 // pred_fallthru
          _
        // Predicated region
        $region61: #{tpu_custom_call.1} parent=35 // pred_check
          %p489 = pneg %p278
        $region62: #{tpu_custom_call.1} parent=35 // pred_check_branch
          %491 = sbr.rel (%p489) target = $region64
        $region63: #{tpu_custom_call.1} parent=35 // pred_region
          %p492 = scmp.lt.s32.totalorder %s30, 1
          %s493 = scalar_select %p492, %s30, 1
          %s494 = smul.addr %s493, 2
          %s495 = smul.addr %s494, 8
          %s496 = scalar_lea.vmem %s9, %s495
        $region64: #{tpu_custom_call.1} parent=35 // pred_fallthru
          _
        // Predicated region
        $region65: #{tpu_custom_call.1} parent=35 // pred_check
          %p497 = pneg %p304
        $region66: #{tpu_custom_call.1} parent=35 // pred_check_branch
          %499 = sbr.rel (%p497) target = $region68
        $region67: #{tpu_custom_call.1} parent=35 // pred_region
          %p500 = scmp.lt.s32.totalorder %s30, 1
          %s501 = scalar_select %p500, %s30, 1
          %s502 = scalar_lea.vmem %s10, %s501
        $region68: #{tpu_custom_call.1} parent=35 // pred_fallthru
          _
      $region36: #{tpu_custom_call.1} parent=5 // pred_fallthru
        _
      %p503 = scmp.le.s32.totalorder 1, %s22
      %p504 = scmp.lt.s32.totalorder %s22, 3
      %p505 = pnand %p503, %p504
      %p506 = pneg %p505
      // Predicated region
      $region69: #{tpu_custom_call.1} parent=5 // pred_check
        _
      $region70: #{tpu_custom_call.1} parent=5 // pred_check_branch
        %508 = sbr.rel (%p505) target = $region72
      $region71: #{tpu_custom_call.1} parent=5 // pred_region
        %s509 = ssub.s32 %s22, 1
        // Predicated region
        $region73: #{tpu_custom_call.1} parent=71 // pred_check
          %p510 = pneg %p60
        $region74: #{tpu_custom_call.1} parent=71 // pred_check_branch
          %512 = sbr.rel (%p510) target = $region76
        $region75: #{tpu_custom_call.1} parent=71 // pred_region
          %513 = dma.done [#allocation4], 256
        $region76: #{tpu_custom_call.1} parent=71 // pred_fallthru
          _
        // Predicated region
        $region77: #{tpu_custom_call.1} parent=71 // pred_check
          %p514 = pneg %p81
        $region78: #{tpu_custom_call.1} parent=71 // pred_check_branch
          %516 = sbr.rel (%p514) target = $region80
        $region79: #{tpu_custom_call.1} parent=71 // pred_region
          %517 = dma.done [#allocation7], 16
        $region80: #{tpu_custom_call.1} parent=71 // pred_fallthru
          _
        // Predicated region
        $region81: #{tpu_custom_call.1} parent=71 // pred_check
          %p518 = pneg %p102
        $region82: #{tpu_custom_call.1} parent=71 // pred_check_branch
          %520 = sbr.rel (%p518) target = $region84
        $region83: #{tpu_custom_call.1} parent=71 // pred_region
          %521 = dma.done [#allocation7], 16
        $region84: #{tpu_custom_call.1} parent=71 // pred_fallthru
          _
        %p522 = pneg %p60
        %p523 = pneg %p57
        %p524 = pneg %p81
        %p525 = pneg %p78
        %p526 = pneg %p102
        %p527 = pneg %p99
        %p528 = scmp.lt.s32.totalorder %s32, 1
        %s529 = scalar_select %p528, %s32, 1
        %s530 = smul.addr %s529, 4
        %s531 = smul.addr %s530, 4
        %s532 = scalar_lea.vmem %s3, %s531
        %p533 = pneg %p128
        %p534 = pneg %p125
        %p535 = scmp.lt.s32.totalorder %s32, 1
        %s536 = scalar_select %p535, %s32, 1
        %s537 = smul.addr %s536, 4
        %s538 = smul.addr %s537, 4
        %s539 = scalar_lea.vmem %s4, %s538
        %p540 = pneg %p154
        %p541 = pneg %p151
        %p542 = scmp.lt.s32.totalorder %s32, 1
        %s543 = scalar_select %p542, %s32, 1
        %s544 = smul.addr %s543, 4
        %s545 = smul.addr %s544, 4
        %s546 = scalar_lea.vmem %s5, %s545
        %p547 = pneg %p180
        %p548 = pneg %p177
        %p549 = scmp.lt.s32.totalorder %s32, 1
        %s550 = scalar_select %p549, %s32, 1
        %s551 = smul.addr %s550, 4
        %s552 = smul.addr %s551, 4
        %s553 = scalar_lea.vmem %s6, %s552
        %p554 = pneg %p206
        %p555 = pneg %p203
        %p556 = scmp.lt.s32.totalorder %s32, 1
        %s557 = scalar_select %p556, %s32, 1
        %s558 = smul.addr %s557, 4
        %s559 = smul.addr %s558, 4
        %s560 = scalar_lea.vmem %s7, %s559
        %p561 = pneg %p232
        %p562 = pneg %p229
        %p563 = scmp.lt.s32.totalorder %s32, 1
        %s564 = scalar_select %p563, %s32, 1
        %s565 = smul.addr %s564, 8
        %s566 = smul.addr %s565, 4
        %s567 = scalar_lea.vmem %s8, %s566
        %p568 = pneg %p258
        %p569 = pneg %p255
        %p570 = scmp.lt.s32.totalorder %s32, 1
        %s571 = scalar_select %p570, %s32, 1
        %s572 = smul.addr %s571, 2
        %s573 = smul.addr %s572, 8
        %s574 = scalar_lea.vmem %s9, %s573
        %p575 = pneg %p284
        %p576 = pneg %p281
        %p577 = scmp.lt.s32.totalorder %s32, 1
        %s578 = scalar_select %p577, %s32, 1
        %s579 = scalar_lea.vmem %s10, %s578
        %p580 = pneg %p310
        %p581 = pneg %p307
        %p582 = pneg %p331
        %p583 = pneg %p328
        %p584 = pneg %p352
        %p585 = pneg %p349
        %p586 = pneg %p378
        %p587 = pneg %p375
        %s588 = smul.u32 2, %s31
        %p589 = scmp.lt.s32.totalorder %s32, 1
        %s590 = scalar_select %p589, %s32, 1
        %s591 = smul.addr %s590, 4
        %s592 = smul.addr %s591, 4
        %s593 = scalar_lea.vmem %s3, %s592
        %p594 = scmp.lt.s32.totalorder %s32, 1
        %s595 = scalar_select %p594, %s32, 1
        %s596 = smul.addr %s595, 4
        %s597 = smul.addr %s596, 4
        %s598 = scalar_lea.vmem %s4, %s597
        %p599 = scmp.lt.s32.totalorder %s32, 1
        %s600 = scalar_select %p599, %s32, 1
        %s601 = smul.addr %s600, 4
        %s602 = smul.addr %s601, 4
        %s603 = scalar_lea.vmem %s5, %s602
        %p604 = scmp.lt.s32.totalorder %s32, 1
        %s605 = scalar_select %p604, %s32, 1
        %s606 = smul.addr %s605, 4
        %s607 = smul.addr %s606, 4
        %s608 = scalar_lea.vmem %s6, %s607
        %p609 = scmp.lt.s32.totalorder %s32, 1
        %s610 = scalar_select %p609, %s32, 1
        %s611 = smul.addr %s610, 4
        %s612 = smul.addr %s611, 4
        %s613 = scalar_lea.vmem %s7, %s612
        %p614 = scmp.lt.s32.totalorder %s32, 1
        %s615 = scalar_select %p614, %s32, 1
        %s616 = smul.addr %s615, 8
        %s617 = smul.addr %s616, 4
        %s618 = scalar_lea.vmem %s8, %s617
        %p619 = scmp.lt.s32.totalorder %s32, 1
        %s620 = scalar_select %p619, %s32, 1
        %s621 = smul.addr %s620, 2
        %s622 = smul.addr %s621, 8
        %s623 = scalar_lea.vmem %s9, %s622
        %p624 = scmp.lt.s32.totalorder %s32, 1
        %s625 = scalar_select %p624, %s32, 1
        %s626 = scalar_lea.vmem %s10, %s625
        %p628 = scmp.eq.s32.totalorder %s32, 0
        // Predicated region
        $region85: #{tpu_custom_call.1} parent=71 // pred_check
          %p629 = pneg %p628
        $region86: #{tpu_custom_call.1} parent=71 // pred_check_branch
          %631 = sbr.rel (%p629) target = $region88
        $region87: #{tpu_custom_call.1} parent=71 // pred_region
          %v632 = vld [vmem:[#allocation3] sm:$0xff]
          %v633 = vld [vmem:[#allocation3 + $0x8] sm:$0xff]
          %v634 = vld [vmem:[#allocation6] sm:$0x1]
          %v635 = vld [vmem:[#allocation8] sm:$0x1]
          %vm636 = vcmask 261120
          %v637 = vsel %vm636, %v632, 0.0
          %638 = vadd.xlane.f32.xlu0 %v637
          %v639 = vpop.xlane.xlu0 %638
          %v640 = vsel %vm636, %v633, 0.0
          %641 = vadd.xlane.f32.xlu0 %v640
          %v642 = vpop.xlane.xlu0 %641
          %v643 = vrcp.pop 32.0
          %v644 = vmul.f32 %v639, %v643
          %v645 = vmul.f32 %v642, %v643
          %v646 = vsub.f32 %v632, %v644
          %v647 = vsub.f32 %v633, %v645
          %v648 = vmul.f32 %v646, %v646
          %v649 = vmul.f32 %v647, %v647
          %v650 = vsel %vm636, %v648, 0.0
          %651 = vadd.xlane.f32.xlu0 %v650
          %v652 = vpop.xlane.xlu0 %651
          %v653 = vsel %vm636, %v649, 0.0
          %654 = vadd.xlane.f32.xlu0 %v653
          %v655 = vpop.xlane.xlu0 %654
          %v656 = vmul.f32 %v652, %v643
          %v657 = vmul.f32 %v655, %v643
          %v658 = vadd.f32 %v656, 1e-12
          %v659 = vadd.f32 %v657, 1e-12
          %v660 = vrsqrt.pop %v658
          %v661 = vrsqrt.pop %v659
          %v662 = vmul.f32 %v646, %v660
          %v663 = vmul.f32 %v647, %v661
          %v665 = vlaneseq
          %v666 = vshrl.u32 %v665, 7
          %v667 = vsub.s32 0, %v666
          %v668 = vrot.slane %v634, %v667
          %v670 = vmul.f32 %v662, %v668
          %v671 = vmul.f32 %v663, %v668
          %v673 = vlaneseq
          %v674 = vshrl.u32 %v673, 7
          %v675 = vsub.s32 0, %v674
          %v676 = vrot.slane %v635, %v675
          %v678 = vadd.f32 %v670, %v676
          %v679 = vadd.f32 %v671, %v676
          %680 = vst.msk [vmem:[#allocation2] sm:$0xff] %vm636, %v678
          %681 = vst.msk [vmem:[#allocation2 + $0x8] sm:$0xff] %vm636, %v679
        $region88: #{tpu_custom_call.1} parent=71 // pred_fallthru
          _
        %v682 = vld [vmem:[%s623] sm:$0xff]
        %v683 = vld [vmem:[%s623 + $0x8] sm:$0x1]
        %v684 = vld [vmem:[#allocation2] sm:$0xff]
        %v685 = vld [vmem:[#allocation2 + $0x8] sm:$0xff]
        %v686 = vpack.c.bf16 %v685, %v684
        %v687 = vld [vmem:[%s593] sm:$0xf]
        %v688 = vld [vmem:[%s593 + $0x4] sm:$0xf]
        %v689 = vld [vmem:[%s593 + $0x8] sm:$0xf]
        %v690 = vld [vmem:[%s593 + $0xc] sm:$0xf]
        %v691 = vlaneseq
        %v692 = vshrl.u32 %v691, 7
        %v693 = vsub.s32 0, %v692
        %v694 = vrot.slane %v682, %v693
        %v699 = vunpack.c.l.b16 %v687
        %v700 = vunpack.c.l.b16 %v688
        %v701 = vunpack.c.l.b16 %v689
        %v702 = vunpack.c.l.b16 %v690
        %v703 = vpack.c.b16 %v700, %v699
        %v704 = vpack.c.b16 %v702, %v701
        %vm707 = vcmask 261120
        %v709 = vsel %vm707, %v686, 0
        %711 = vmatprep.subr.bf16.mxu0 0
        %712 = vmatpush1.bf16.msra.mxu0 %v703
        %713 = vmatprep.subr.bf16.mxu0 0
        %714 = vmatpush1.bf16.msra.mxu0 %v704
        %715 = vmatprep.subr.bf16.mxu0 0
        %716 = vmatpush1.bf16.msra.mxu0 0
        %717 = vmatprep.subr.bf16.mxu0 0
        %718 = vmatpush1.bf16.msra.mxu0 0
        %719 = vmatprep.subr.bf16.mxu0 0
        %720 = vmatpush1.bf16.msra.mxu0 0
        %721 = vmatprep.subr.bf16.mxu0 0
        %722 = vmatpush1.bf16.msra.mxu0 0
        %723 = vmatprep.subr.bf16.mxu0 0
        %724 = vmatpush1.bf16.msra.mxu0 0
        %725 = vmatprep.subr.bf16.mxu0 0
        %726 = vmatpush1.bf16.msra.mxu0 0
        %727 = vmatprep.subr.bf16.mxu0 0
        %728 = vmatpush1.bf16.msra.mxu0 0
        %729 = vmatprep.subr.bf16.mxu0 0
        %730 = vmatpush1.bf16.msra.mxu0 0
        %731 = vmatprep.subr.bf16.mxu0 0
        %732 = vmatpush1.bf16.msra.mxu0 0
        %733 = vmatprep.subr.bf16.mxu0 0
        %734 = vmatpush1.bf16.msra.mxu0 0
        %735 = vmatprep.subr.bf16.mxu0 0
        %736 = vmatpush1.bf16.msra.mxu0 0
        %737 = vmatprep.subr.bf16.mxu0 0
        %738 = vmatpush1.bf16.msra.mxu0 0
        %739 = vmatprep.subr.bf16.mxu0 0
        %740 = vmatpush1.bf16.msra.mxu0 0
        %741 = vmatprep.subr.bf16.mxu0 0
        %742 = vmatpush1.bf16.msra.mxu0 0
        %743 = vmatprep.mubr.bf16.mxu0 0
        %744 = vmatmul.mubr.bf16.gmra.mrb[0].mxu0 %v709
        %v745 = vpop.f32.mrb[0].mxu0
        %v746 = vadd.f32 %v694, %v745
        %v747 = vpop.f32.mrb[0].mxu0
        %v748 = vpop.f32.mrb[0].mxu0
        %v749 = vadd.f32 %v694, %v748
        %v750 = vpop.f32.mrb[0].mxu0
        %751 = vdwg.mxu0
        %v752 = vmul.f32 %v746, 0.35355338
        %v753 = vmul.f32 %v749, 0.35355338
        %v754 = vld [vmem:[%s598] sm:$0xf]
        %v755 = vld [vmem:[%s598 + $0x4] sm:$0xf]
        %v756 = vld [vmem:[%s598 + $0x8] sm:$0xf]
        %v757 = vld [vmem:[%s598 + $0xc] sm:$0xf]
        %v758 = vlaneseq
        %v759 = vshrl.u32 %v758, 7
        %v760 = vsub.s32 1, %v759
        %v761 = vrot.slane %v682, %v760
        %v766 = vunpack.c.l.b16 %v754
        %v767 = vunpack.c.l.b16 %v755
        %v768 = vunpack.c.l.b16 %v756
        %v769 = vunpack.c.l.b16 %v757
        %v770 = vpack.c.b16 %v767, %v766
        %v771 = vpack.c.b16 %v769, %v768
        %774 = vmatprep.subr.bf16.mxu0 0
        %775 = vmatpush1.bf16.msra.mxu0 %v770
        %776 = vmatprep.subr.bf16.mxu0 0
        %777 = vmatpush1.bf16.msra.mxu0 %v771
        %778 = vmatprep.subr.bf16.mxu0 0
        %779 = vmatpush1.bf16.msra.mxu0 0
        %780 = vmatprep.subr.bf16.mxu0 0
        %781 = vmatpush1.bf16.msra.mxu0 0
        %782 = vmatprep.subr.bf16.mxu0 0
        %783 = vmatpush1.bf16.msra.mxu0 0
        %784 = vmatprep.subr.bf16.mxu0 0
        %785 = vmatpush1.bf16.msra.mxu0 0
        %786 = vmatprep.subr.bf16.mxu0 0
        %787 = vmatpush1.bf16.msra.mxu0 0
        %788 = vmatprep.subr.bf16.mxu0 0
        %789 = vmatpush1.bf16.msra.mxu0 0
        %790 = vmatprep.subr.bf16.mxu0 0
        %791 = vmatpush1.bf16.msra.mxu0 0
        %792 = vmatprep.subr.bf16.mxu0 0
        %793 = vmatpush1.bf16.msra.mxu0 0
        %794 = vmatprep.subr.bf16.mxu0 0
        %795 = vmatpush1.bf16.msra.mxu0 0
        %796 = vmatprep.subr.bf16.mxu0 0
        %797 = vmatpush1.bf16.msra.mxu0 0
        %798 = vmatprep.subr.bf16.mxu0 0
        %799 = vmatpush1.bf16.msra.mxu0 0
        %800 = vmatprep.subr.bf16.mxu0 0
        %801 = vmatpush1.bf16.msra.mxu0 0
        %802 = vmatprep.subr.bf16.mxu0 0
        %803 = vmatpush1.bf16.msra.mxu0 0
        %804 = vmatprep.subr.bf16.mxu0 0
        %805 = vmatpush1.bf16.msra.mxu0 0
        %806 = vmatprep.mubr.bf16.mxu0 0
        %807 = vmatmul.mubr.bf16.gmra.mrb[0].mxu0 %v709
        %v808 = vpop.f32.mrb[0].mxu0
        %v809 = vadd.f32 %v761, %v808
        %v810 = vpop.f32.mrb[0].mxu0
        %v811 = vpop.f32.mrb[0].mxu0
        %v812 = vadd.f32 %v761, %v811
        %v813 = vpop.f32.mrb[0].mxu0
        %814 = vdwg.mxu0
        %v815 = vld [vmem:[%s603] sm:$0xf]
        %v816 = vld [vmem:[%s603 + $0x4] sm:$0xf]
        %v817 = vld [vmem:[%s603 + $0x8] sm:$0xf]
        %v818 = vld [vmem:[%s603 + $0xc] sm:$0xf]
        %v819 = vlaneseq
        %v820 = vshrl.u32 %v819, 7
        %v821 = vsub.s32 2, %v820
        %v822 = vrot.slane %v682, %v821
        %v827 = vunpack.c.l.b16 %v815
        %v828 = vunpack.c.l.b16 %v816
        %v829 = vunpack.c.l.b16 %v817
        %v830 = vunpack.c.l.b16 %v818
        %v831 = vpack.c.b16 %v828, %v827
        %v832 = vpack.c.b16 %v830, %v829
        %835 = vmatprep.subr.bf16.mxu0 0
        %836 = vmatpush1.bf16.msra.mxu0 %v831
        %837 = vmatprep.subr.bf16.mxu0 0
        %838 = vmatpush1.bf16.msra.mxu0 %v832
        %839 = vmatprep.subr.bf16.mxu0 0
        %840 = vmatpush1.bf16.msra.mxu0 0
        %841 = vmatprep.subr.bf16.mxu0 0
        %842 = vmatpush1.bf16.msra.mxu0 0
        %843 = vmatprep.subr.bf16.mxu0 0
        %844 = vmatpush1.bf16.msra.mxu0 0
        %845 = vmatprep.subr.bf16.mxu0 0
        %846 = vmatpush1.bf16.msra.mxu0 0
        %847 = vmatprep.subr.bf16.mxu0 0
        %848 = vmatpush1.bf16.msra.mxu0 0
        %849 = vmatprep.subr.bf16.mxu0 0
        %850 = vmatpush1.bf16.msra.mxu0 0
        %851 = vmatprep.subr.bf16.mxu0 0
        %852 = vmatpush1.bf16.msra.mxu0 0
        %853 = vmatprep.subr.bf16.mxu0 0
        %854 = vmatpush1.bf16.msra.mxu0 0
        %855 = vmatprep.subr.bf16.mxu0 0
        %856 = vmatpush1.bf16.msra.mxu0 0
        %857 = vmatprep.subr.bf16.mxu0 0
        %858 = vmatpush1.bf16.msra.mxu0 0
        %859 = vmatprep.subr.bf16.mxu0 0
        %860 = vmatpush1.bf16.msra.mxu0 0
        %861 = vmatprep.subr.bf16.mxu0 0
        %862 = vmatpush1.bf16.msra.mxu0 0
        %863 = vmatprep.subr.bf16.mxu0 0
        %864 = vmatpush1.bf16.msra.mxu0 0
        %865 = vmatprep.subr.bf16.mxu0 0
        %866 = vmatpush1.bf16.msra.mxu0 0
        %867 = vmatprep.mubr.bf16.mxu0 0
        %868 = vmatmul.mubr.bf16.gmra.mrb[0].mxu0 %v709
        %v869 = vpop.f32.mrb[0].mxu0
        %v870 = vadd.f32 %v822, %v869
        %v871 = vpop.f32.mrb[0].mxu0
        %v872 = vpop.f32.mrb[0].mxu0
        %v873 = vadd.f32 %v822, %v872
        %v874 = vpop.f32.mrb[0].mxu0
        %875 = vdwg.mxu0
        %v876 = vpack.c.bf16 %v753, %v752
        %v877 = vpack.c.bf16 %v812, %v809
        %v878 = vpack.c.bf16 %v873, %v870
        %880 = vrot.lane.b32.xlu0 %v876, 120
        %v881 = vpop.permute.xlu0 %880
        %882 = vrot.lane.b32.xlu0 %v876, 112
        %v883 = vpop.permute.xlu0 %882
        %884 = vrot.lane.b32.xlu0 %v876, 104
        %v885 = vpop.permute.xlu0 %884
        %v887 = vunpack.c.l.s4 1983009808
        %v888 = vunpack.c.0.s8 %v887
        %v889 = vlaneseq
        %v890 = vshrl.u32 %v889, 7
        %v891 = vsub.s32 %v888, %v890
        %v892 = vrot.slane %v876, %v891
        %v895 = vunpack.c.l.s4 1983009808
        %v896 = vunpack.c.0.s8 %v895
        %v897 = vlaneseq
        %v898 = vshrl.u32 %v897, 7
        %v899 = vsub.s32 %v896, %v898
        %v900 = vrot.slane %v883, %v899
        %v901 = vcombine.low %v892, %v900
        %v902 = vcombine.high %v892, %v900
        %v904 = vunpack.c.l.s4 1934713408
        %v905 = vunpack.c.0.s8 %v904
        %v906 = vlaneseq
        %v907 = vshrl.u32 %v906, 7
        %v908 = vsub.s32 %v905, %v907
        %v909 = vrot.slane %v901, %v908
        %v911 = vunpack.c.l.s4 1934713408
        %v912 = vunpack.c.0.s8 %v911
        %v913 = vlaneseq
        %v914 = vshrl.u32 %v913, 7
        %v915 = vsub.s32 %v912, %v914
        %v916 = vrot.slane %v902, %v915
        %v917 = vcombine.high %v909, 0
        %v918 = vcombine.high %v916, 0
        %v921 = vunpack.c.l.s4 1983009808
        %v922 = vunpack.c.0.s8 %v921
        %v923 = vlaneseq
        %v924 = vshrl.u32 %v923, 7
        %v925 = vsub.s32 %v922, %v924
        %v926 = vrot.slane %v881, %v925
        %v929 = vunpack.c.l.s4 1983009808
        %v930 = vunpack.c.0.s8 %v929
        %v931 = vlaneseq
        %v932 = vshrl.u32 %v931, 7
        %v933 = vsub.s32 %v930, %v932
        %v934 = vrot.slane %v885, %v933
        %v935 = vcombine.low %v926, %v934
        %v936 = vcombine.high %v926, %v934
        %v938 = vunpack.c.l.s4 1934713408
        %v939 = vunpack.c.0.s8 %v938
        %v940 = vlaneseq
        %v941 = vshrl.u32 %v940, 7
        %v942 = vsub.s32 %v939, %v941
        %v943 = vrot.slane %v935, %v942
        %v945 = vunpack.c.l.s4 1934713408
        %v946 = vunpack.c.0.s8 %v945
        %v947 = vlaneseq
        %v948 = vshrl.u32 %v947, 7
        %v949 = vsub.s32 %v946, %v948
        %v950 = vrot.slane %v936, %v949
        %v951 = vcombine.high %v943, 0
        %v952 = vcombine.high %v950, 0
        %v955 = vpack.i.b16 %v943, %v909
        %v957 = vshrl.u32 %v909, 16
        %v958 = vshrl.u32 %v943, 16
        %v959 = vpack.i.b16 %v958, %v957
        %v963 = vpack.i.b16 %v951, %v917
        %v965 = vshrl.u32 %v917, 16
        %v966 = vshrl.u32 %v951, 16
        %v967 = vpack.i.b16 %v966, %v965
        %v971 = vpack.i.b16 %v950, %v916
        %v973 = vshrl.u32 %v916, 16
        %v974 = vshrl.u32 %v950, 16
        %v975 = vpack.i.b16 %v974, %v973
        %v979 = vpack.i.b16 %v952, %v918
        %v981 = vshrl.u32 %v918, 16
        %v982 = vshrl.u32 %v952, 16
        %v983 = vpack.i.b16 %v982, %v981
        %v985 = vcombine.low %v955, %v971
        %v987 = vunpack.c.l.s4 1983009808
        %v988 = vunpack.c.0.s8 %v987
        %v989 = vlaneseq
        %v990 = vshrl.u32 %v989, 7
        %v991 = vsub.s32 %v988, %v990
        %v992 = vrot.slane %v985, %v991
        %v993 = vcombine.low %v963, %v979
        %v995 = vunpack.c.l.s4 1983009808
        %v996 = vunpack.c.0.s8 %v995
        %v997 = vlaneseq
        %v998 = vshrl.u32 %v997, 7
        %v999 = vsub.s32 %v996, %v998
        %v1000 = vrot.slane %v993, %v999
        %v1001 = vcombine.low %v992, %v1000
        %v1003 = vunpack.c.l.s4 1934713408
        %v1004 = vunpack.c.0.s8 %v1003
        %v1005 = vlaneseq
        %v1006 = vshrl.u32 %v1005, 7
        %v1007 = vsub.s32 %v1004, %v1006
        %v1008 = vrot.slane %v1001, %v1007
        %v1009 = vcombine.high %v1008, 0
        %v1010 = vcombine.low %v959, %v975
        %v1012 = vunpack.c.l.s4 1983009808
        %v1013 = vunpack.c.0.s8 %v1012
        %v1014 = vlaneseq
        %v1015 = vshrl.u32 %v1014, 7
        %v1016 = vsub.s32 %v1013, %v1015
        %v1017 = vrot.slane %v1010, %v1016
        %v1018 = vcombine.low %v967, %v983
        %v1020 = vunpack.c.l.s4 1983009808
        %v1021 = vunpack.c.0.s8 %v1020
        %v1022 = vlaneseq
        %v1023 = vshrl.u32 %v1022, 7
        %v1024 = vsub.s32 %v1021, %v1023
        %v1025 = vrot.slane %v1018, %v1024
        %v1026 = vcombine.low %v1017, %v1025
        %v1028 = vunpack.c.l.s4 1934713408
        %v1029 = vunpack.c.0.s8 %v1028
        %v1030 = vlaneseq
        %v1031 = vshrl.u32 %v1030, 7
        %v1032 = vsub.s32 %v1029, %v1031
        %v1033 = vrot.slane %v1026, %v1032
        %v1034 = vcombine.high %v1033, 0
        %v1037 = vpack.i.b16 %v1033, %v1008
        %v1038 = vshrl.u32 %v1008, 16
        %v1039 = vshrl.u32 %v1033, 16
        %v1040 = vpack.i.b16 %v1039, %v1038
        %v1043 = vpack.i.b16 %v1034, %v1009
        %v1044 = vshrl.u32 %v1009, 16
        %v1045 = vshrl.u32 %v1034, 16
        %v1046 = vpack.i.b16 %v1045, %v1044
        %1048 = vrot.lane.b32.xlu0 %v877, 120
        %v1049 = vpop.permute.xlu0 %1048
        %1050 = vrot.lane.b32.xlu0 %v877, 112
        %v1051 = vpop.permute.xlu0 %1050
        %1052 = vrot.lane.b32.xlu0 %v877, 104
        %v1053 = vpop.permute.xlu0 %1052
        %v1055 = vunpack.c.l.s4 1983009808
        %v1056 = vunpack.c.0.s8 %v1055
        %v1057 = vlaneseq
        %v1058 = vshrl.u32 %v1057, 7
        %v1059 = vsub.s32 %v1056, %v1058
        %v1060 = vrot.slane %v877, %v1059
        %v1063 = vunpack.c.l.s4 1983009808
        %v1064 = vunpack.c.0.s8 %v1063
        %v1065 = vlaneseq
        %v1066 = vshrl.u32 %v1065, 7
        %v1067 = vsub.s32 %v1064, %v1066
        %v1068 = vrot.slane %v1051, %v1067
        %v1069 = vcombine.low %v1060, %v1068
        %v1070 = vcombine.high %v1060, %v1068
        %v1072 = vunpack.c.l.s4 1934713408
        %v1073 = vunpack.c.0.s8 %v1072
        %v1074 = vlaneseq
        %v1075 = vshrl.u32 %v1074, 7
        %v1076 = vsub.s32 %v1073, %v1075
        %v1077 = vrot.slane %v1069, %v1076
        %v1079 = vunpack.c.l.s4 1934713408
        %v1080 = vunpack.c.0.s8 %v1079
        %v1081 = vlaneseq
        %v1082 = vshrl.u32 %v1081, 7
        %v1083 = vsub.s32 %v1080, %v1082
        %v1084 = vrot.slane %v1070, %v1083
        %v1085 = vcombine.high %v1077, 0
        %v1086 = vcombine.high %v1084, 0
        %v1089 = vunpack.c.l.s4 1983009808
        %v1090 = vunpack.c.0.s8 %v1089
        %v1091 = vlaneseq
        %v1092 = vshrl.u32 %v1091, 7
        %v1093 = vsub.s32 %v1090, %v1092
        %v1094 = vrot.slane %v1049, %v1093
        %v1097 = vunpack.c.l.s4 1983009808
        %v1098 = vunpack.c.0.s8 %v1097
        %v1099 = vlaneseq
        %v1100 = vshrl.u32 %v1099, 7
        %v1101 = vsub.s32 %v1098, %v1100
        %v1102 = vrot.slane %v1053, %v1101
        %v1103 = vcombine.low %v1094, %v1102
        %v1104 = vcombine.high %v1094, %v1102
        %v1106 = vunpack.c.l.s4 1934713408
        %v1107 = vunpack.c.0.s8 %v1106
        %v1108 = vlaneseq
        %v1109 = vshrl.u32 %v1108, 7
        %v1110 = vsub.s32 %v1107, %v1109
        %v1111 = vrot.slane %v1103, %v1110
        %v1113 = vunpack.c.l.s4 1934713408
        %v1114 = vunpack.c.0.s8 %v1113
        %v1115 = vlaneseq
        %v1116 = vshrl.u32 %v1115, 7
        %v1117 = vsub.s32 %v1114, %v1116
        %v1118 = vrot.slane %v1104, %v1117
        %v1119 = vcombine.high %v1111, 0
        %v1120 = vcombine.high %v1118, 0
        %v1123 = vpack.i.b16 %v1111, %v1077
        %v1125 = vshrl.u32 %v1077, 16
        %v1126 = vshrl.u32 %v1111, 16
        %v1127 = vpack.i.b16 %v1126, %v1125
        %v1131 = vpack.i.b16 %v1119, %v1085
        %v1133 = vshrl.u32 %v1085, 16
        %v1134 = vshrl.u32 %v1119, 16
        %v1135 = vpack.i.b16 %v1134, %v1133
        %v1139 = vpack.i.b16 %v1118, %v1084
        %v1141 = vshrl.u32 %v1084, 16
        %v1142 = vshrl.u32 %v1118, 16
        %v1143 = vpack.i.b16 %v1142, %v1141
        %v1147 = vpack.i.b16 %v1120, %v1086
        %v1149 = vshrl.u32 %v1086, 16
        %v1150 = vshrl.u32 %v1120, 16
        %v1151 = vpack.i.b16 %v1150, %v1149
        %v1153 = vcombine.low %v1123, %v1139
        %v1155 = vunpack.c.l.s4 1983009808
        %v1156 = vunpack.c.0.s8 %v1155
        %v1157 = vlaneseq
        %v1158 = vshrl.u32 %v1157, 7
        %v1159 = vsub.s32 %v1156, %v1158
        %v1160 = vrot.slane %v1153, %v1159
        %v1161 = vcombine.low %v1131, %v1147
        %v1163 = vunpack.c.l.s4 1983009808
        %v1164 = vunpack.c.0.s8 %v1163
        %v1165 = vlaneseq
        %v1166 = vshrl.u32 %v1165, 7
        %v1167 = vsub.s32 %v1164, %v1166
        %v1168 = vrot.slane %v1161, %v1167
        %v1169 = vcombine.low %v1160, %v1168
        %v1171 = vunpack.c.l.s4 1934713408
        %v1172 = vunpack.c.0.s8 %v1171
        %v1173 = vlaneseq
        %v1174 = vshrl.u32 %v1173, 7
        %v1175 = vsub.s32 %v1172, %v1174
        %v1176 = vrot.slane %v1169, %v1175
        %v1177 = vcombine.high %v1176, 0
        %v1178 = vcombine.low %v1127, %v1143
        %v1180 = vunpack.c.l.s4 1983009808
        %v1181 = vunpack.c.0.s8 %v1180
        %v1182 = vlaneseq
        %v1183 = vshrl.u32 %v1182, 7
        %v1184 = vsub.s32 %v1181, %v1183
        %v1185 = vrot.slane %v1178, %v1184
        %v1186 = vcombine.low %v1135, %v1151
        %v1188 = vunpack.c.l.s4 1983009808
        %v1189 = vunpack.c.0.s8 %v1188
        %v1190 = vlaneseq
        %v1191 = vshrl.u32 %v1190, 7
        %v1192 = vsub.s32 %v1189, %v1191
        %v1193 = vrot.slane %v1186, %v1192
        %v1194 = vcombine.low %v1185, %v1193
        %v1196 = vunpack.c.l.s4 1934713408
        %v1197 = vunpack.c.0.s8 %v1196
        %v1198 = vlaneseq
        %v1199 = vshrl.u32 %v1198, 7
        %v1200 = vsub.s32 %v1197, %v1199
        %v1201 = vrot.slane %v1194, %v1200
        %v1202 = vcombine.high %v1201, 0
        %v1205 = vpack.i.b16 %v1201, %v1176
        %v1206 = vshrl.u32 %v1176, 16
        %v1207 = vshrl.u32 %v1201, 16
        %v1208 = vpack.i.b16 %v1207, %v1206
        %v1211 = vpack.i.b16 %v1202, %v1177
        %v1212 = vshrl.u32 %v1177, 16
        %v1213 = vshrl.u32 %v1202, 16
        %v1214 = vpack.i.b16 %v1213, %v1212
        %1216 = vrot.lane.b32.xlu0 %v878, 120
        %v1217 = vpop.permute.xlu0 %1216
        %1218 = vrot.lane.b32.xlu0 %v878, 112
        %v1219 = vpop.permute.xlu0 %1218
        %1220 = vrot.lane.b32.xlu0 %v878, 104
        %v1221 = vpop.permute.xlu0 %1220
        %v1223 = vunpack.c.l.s4 1983009808
        %v1224 = vunpack.c.0.s8 %v1223
        %v1225 = vlaneseq
        %v1226 = vshrl.u32 %v1225, 7
        %v1227 = vsub.s32 %v1224, %v1226
        %v1228 = vrot.slane %v878, %v1227
        %v1231 = vunpack.c.l.s4 1983009808
        %v1232 = vunpack.c.0.s8 %v1231
        %v1233 = vlaneseq
        %v1234 = vshrl.u32 %v1233, 7
        %v1235 = vsub.s32 %v1232, %v1234
        %v1236 = vrot.slane %v1219, %v1235
        %v1237 = vcombine.low %v1228, %v1236
        %v1238 = vcombine.high %v1228, %v1236
        %v1240 = vunpack.c.l.s4 1934713408
        %v1241 = vunpack.c.0.s8 %v1240
        %v1242 = vlaneseq
        %v1243 = vshrl.u32 %v1242, 7
        %v1244 = vsub.s32 %v1241, %v1243
        %v1245 = vrot.slane %v1237, %v1244
        %v1247 = vunpack.c.l.s4 1934713408
        %v1248 = vunpack.c.0.s8 %v1247
        %v1249 = vlaneseq
        %v1250 = vshrl.u32 %v1249, 7
        %v1251 = vsub.s32 %v1248, %v1250
        %v1252 = vrot.slane %v1238, %v1251
        %v1253 = vcombine.high %v1245, 0
        %v1254 = vcombine.high %v1252, 0
        %v1257 = vunpack.c.l.s4 1983009808
        %v1258 = vunpack.c.0.s8 %v1257
        %v1259 = vlaneseq
        %v1260 = vshrl.u32 %v1259, 7
        %v1261 = vsub.s32 %v1258, %v1260
        %v1262 = vrot.slane %v1217, %v1261
        %v1265 = vunpack.c.l.s4 1983009808
        %v1266 = vunpack.c.0.s8 %v1265
        %v1267 = vlaneseq
        %v1268 = vshrl.u32 %v1267, 7
        %v1269 = vsub.s32 %v1266, %v1268
        %v1270 = vrot.slane %v1221, %v1269
        %v1271 = vcombine.low %v1262, %v1270
        %v1272 = vcombine.high %v1262, %v1270
        %v1274 = vunpack.c.l.s4 1934713408
        %v1275 = vunpack.c.0.s8 %v1274
        %v1276 = vlaneseq
        %v1277 = vshrl.u32 %v1276, 7
        %v1278 = vsub.s32 %v1275, %v1277
        %v1279 = vrot.slane %v1271, %v1278
        %v1281 = vunpack.c.l.s4 1934713408
        %v1282 = vunpack.c.0.s8 %v1281
        %v1283 = vlaneseq
        %v1284 = vshrl.u32 %v1283, 7
        %v1285 = vsub.s32 %v1282, %v1284
        %v1286 = vrot.slane %v1272, %v1285
        %v1287 = vcombine.high %v1279, 0
        %v1288 = vcombine.high %v1286, 0
        %v1291 = vpack.i.b16 %v1279, %v1245
        %v1293 = vshrl.u32 %v1245, 16
        %v1294 = vshrl.u32 %v1279, 16
        %v1295 = vpack.i.b16 %v1294, %v1293
        %v1299 = vpack.i.b16 %v1287, %v1253
        %v1301 = vshrl.u32 %v1253, 16
        %v1302 = vshrl.u32 %v1287, 16
        %v1303 = vpack.i.b16 %v1302, %v1301
        %v1307 = vpack.i.b16 %v1286, %v1252
        %v1309 = vshrl.u32 %v1252, 16
        %v1310 = vshrl.u32 %v1286, 16
        %v1311 = vpack.i.b16 %v1310, %v1309
        %v1315 = vpack.i.b16 %v1288, %v1254
        %v1317 = vshrl.u32 %v1254, 16
        %v1318 = vshrl.u32 %v1288, 16
        %v1319 = vpack.i.b16 %v1318, %v1317
        %v1321 = vcombine.low %v1291, %v1307
        %v1323 = vunpack.c.l.s4 1983009808
        %v1324 = vunpack.c.0.s8 %v1323
        %v1325 = vlaneseq
        %v1326 = vshrl.u32 %v1325, 7
        %v1327 = vsub.s32 %v1324, %v1326
        %v1328 = vrot.slane %v1321, %v1327
        %v1329 = vcombine.low %v1299, %v1315
        %v1331 = vunpack.c.l.s4 1983009808
        %v1332 = vunpack.c.0.s8 %v1331
        %v1333 = vlaneseq
        %v1334 = vshrl.u32 %v1333, 7
        %v1335 = vsub.s32 %v1332, %v1334
        %v1336 = vrot.slane %v1329, %v1335
        %v1337 = vcombine.low %v1328, %v1336
        %v1339 = vunpack.c.l.s4 1934713408
        %v1340 = vunpack.c.0.s8 %v1339
        %v1341 = vlaneseq
        %v1342 = vshrl.u32 %v1341, 7
        %v1343 = vsub.s32 %v1340, %v1342
        %v1344 = vrot.slane %v1337, %v1343
        %v1345 = vcombine.high %v1344, 0
        %v1346 = vcombine.low %v1295, %v1311
        %v1348 = vunpack.c.l.s4 1983009808
        %v1349 = vunpack.c.0.s8 %v1348
        %v1350 = vlaneseq
        %v1351 = vshrl.u32 %v1350, 7
        %v1352 = vsub.s32 %v1349, %v1351
        %v1353 = vrot.slane %v1346, %v1352
        %v1354 = vcombine.low %v1303, %v1319
        %v1356 = vunpack.c.l.s4 1983009808
        %v1357 = vunpack.c.0.s8 %v1356
        %v1358 = vlaneseq
        %v1359 = vshrl.u32 %v1358, 7
        %v1360 = vsub.s32 %v1357, %v1359
        %v1361 = vrot.slane %v1354, %v1360
        %v1362 = vcombine.low %v1353, %v1361
        %v1364 = vunpack.c.l.s4 1934713408
        %v1365 = vunpack.c.0.s8 %v1364
        %v1366 = vlaneseq
        %v1367 = vshrl.u32 %v1366, 7
        %v1368 = vsub.s32 %v1365, %v1367
        %v1369 = vrot.slane %v1362, %v1368
        %v1370 = vcombine.high %v1369, 0
        %v1373 = vpack.i.b16 %v1369, %v1344
        %v1374 = vshrl.u32 %v1344, 16
        %v1375 = vshrl.u32 %v1369, 16
        %v1376 = vpack.i.b16 %v1375, %v1374
        %v1379 = vpack.i.b16 %v1370, %v1345
        %v1380 = vshrl.u32 %v1345, 16
        %v1381 = vshrl.u32 %v1370, 16
        %v1382 = vpack.i.b16 %v1381, %v1380
        %vm1383 = vcmask 64512
        %v1385 = vsel %vm1383, %v1037, 0
        %v1388 = vsel %vm1383, %v1205, 0
        %1390 = vmatprep.subr.bf16.mxu0 0
        %1391 = vmatpush1.bf16.xpose.msra.mxu0 %v1388
        %1392 = vmatprep.subr.bf16.mxu0 0
        %1393 = vmatpush1.bf16.xpose.msra.mxu0 0
        %1394 = vmatprep.subr.bf16.mxu0 0
        %1395 = vmatpush1.bf16.xpose.msra.mxu0 0
        %1396 = vmatprep.subr.bf16.mxu0 0
        %1397 = vmatpush1.bf16.xpose.msra.mxu0 0
        %1398 = vmatprep.subr.bf16.mxu0 0
        %1399 = vmatpush1.bf16.xpose.msra.mxu0 0
        %1400 = vmatprep.subr.bf16.mxu0 0
        %1401 = vmatpush1.bf16.xpose.msra.mxu0 0
        %1402 = vmatprep.subr.bf16.mxu0 0
        %1403 = vmatpush1.bf16.xpose.msra.mxu0 0
        %1404 = vmatprep.subr.bf16.mxu0 0
        %1405 = vmatpush1.bf16.xpose.msra.mxu0 0
        %1406 = vmatprep.subr.bf16.mxu0 0
        %1407 = vmatpush1.bf16.xpose.msra.mxu0 0
        %1408 = vmatprep.subr.bf16.mxu0 0
        %1409 = vmatpush1.bf16.xpose.msra.mxu0 0
        %1410 = vmatprep.subr.bf16.mxu0 0
        %1411 = vmatpush1.bf16.xpose.msra.mxu0 0
        %1412 = vmatprep.subr.bf16.mxu0 0
        %1413 = vmatpush1.bf16.xpose.msra.mxu0 0
        %1414 = vmatprep.subr.bf16.mxu0 0
        %1415 = vmatpush1.bf16.xpose.msra.mxu0 0
        %1416 = vmatprep.subr.bf16.mxu0 0
        %1417 = vmatpush1.bf16.xpose.msra.mxu0 0
        %1418 = vmatprep.subr.bf16.mxu0 0
        %1419 = vmatpush1.bf16.xpose.msra.mxu0 0
        %1420 = vmatprep.subr.bf16.mxu0 0
        %1421 = vmatpush1.bf16.xpose.msra.mxu0 0
        %1422 = vmatprep.mubr.bf16.mxu0 0
        %1423 = vmatmul.mubr.bf16.gmra.mrb[0].mxu0 %v1385
        %v1424 = vpop.f32.mrb[0].mxu0
        %v1425 = vadd.f32 0.0, %v1424
        %v1426 = vpop.f32.mrb[0].mxu0
        %v1427 = vpop.f32.mrb[0].mxu0
        %v1428 = vpop.f32.mrb[0].mxu0
        %1429 = vdwg.mxu0
        %v1431 = vsel %vm1383, %v1040, 0
        %v1434 = vsel %vm1383, %v1208, 0
        %1436 = vmatprep.subr.bf16.mxu0 0
        %1437 = vmatpush1.bf16.xpose.msra.mxu0 %v1434
        %1438 = vmatprep.subr.bf16.mxu0 0
        %1439 = vmatpush1.bf16.xpose.msra.mxu0 0
        %1440 = vmatprep.subr.bf16.mxu0 0
        %1441 = vmatpush1.bf16.xpose.msra.mxu0 0
        %1442 = vmatprep.subr.bf16.mxu0 0
        %1443 = vmatpush1.bf16.xpose.msra.mxu0 0
        %1444 = vmatprep.subr.bf16.mxu0 0
        %1445 = vmatpush1.bf16.xpose.msra.mxu0 0
        %1446 = vmatprep.subr.bf16.mxu0 0
        %1447 = vmatpush1.bf16.xpose.msra.mxu0 0
        %1448 = vmatprep.subr.bf16.mxu0 0
        %1449 = vmatpush1.bf16.xpose.msra.mxu0 0
        %1450 = vmatprep.subr.bf16.mxu0 0
        %1451 = vmatpush1.bf16.xpose.msra.mxu0 0
        %1452 = vmatprep.subr.bf16.mxu0 0
        %1453 = vmatpush1.bf16.xpose.msra.mxu0 0
        %1454 = vmatprep.subr.bf16.mxu0 0
        %1455 = vmatpush1.bf16.xpose.msra.mxu0 0
        %1456 = vmatprep.subr.bf16.mxu0 0
        %1457 = vmatpush1.bf16.xpose.msra.mxu0 0
        %1458 = vmatprep.subr.bf16.mxu0 0
        %1459 = vmatpush1.bf16.xpose.msra.mxu0 0
        %1460 = vmatprep.subr.bf16.mxu0 0
        %1461 = vmatpush1.bf16.xpose.msra.mxu0 0
        %1462 = vmatprep.subr.bf16.mxu0 0
        %1463 = vmatpush1.bf16.xpose.msra.mxu0 0
        %1464 = vmatprep.subr.bf16.mxu0 0
        %1465 = vmatpush1.bf16.xpose.msra.mxu0 0
        %1466 = vmatprep.subr.bf16.mxu0 0
        %1467 = vmatpush1.bf16.xpose.msra.mxu0 0
        %1468 = vmatprep.mubr.bf16.mxu0 0
        %1469 = vmatmul.mubr.bf16.gmra.mrb[0].mxu0 %v1431
        %v1470 = vpop.f32.mrb[0].mxu0
        %v1471 = vadd.f32 0.0, %v1470
        %v1472 = vpop.f32.mrb[0].mxu0
        %v1473 = vpop.f32.mrb[0].mxu0
        %v1474 = vpop.f32.mrb[0].mxu0
        %1475 = vdwg.mxu0
        %v1477 = vsel %vm1383, %v1043, 0
        %v1480 = vsel %vm1383, %v1211, 0
        %1482 = vmatprep.subr.bf16.mxu0 0
        %1483 = vmatpush1.bf16.xpose.msra.mxu0 %v1480
        %1484 = vmatprep.subr.bf16.mxu0 0
        %1485 = vmatpush1.bf16.xpose.msra.mxu0 0
        %1486 = vmatprep.subr.bf16.mxu0 0
        %1487 = vmatpush1.bf16.xpose.msra.mxu0 0
        %1488 = vmatprep.subr.bf16.mxu0 0
        %1489 = vmatpush1.bf16.xpose.msra.mxu0 0
        %1490 = vmatprep.subr.bf16.mxu0 0
        %1491 = vmatpush1.bf16.xpose.msra.mxu0 0
        %1492 = vmatprep.subr.bf16.mxu0 0
        %1493 = vmatpush1.bf16.xpose.msra.mxu0 0
        %1494 = vmatprep.subr.bf16.mxu0 0
        %1495 = vmatpush1.bf16.xpose.msra.mxu0 0
        %1496 = vmatprep.subr.bf16.mxu0 0
        %1497 = vmatpush1.bf16.xpose.msra.mxu0 0
        %1498 = vmatprep.subr.bf16.mxu0 0
        %1499 = vmatpush1.bf16.xpose.msra.mxu0 0
        %1500 = vmatprep.subr.bf16.mxu0 0
        %1501 = vmatpush1.bf16.xpose.msra.mxu0 0
        %1502 = vmatprep.subr.bf16.mxu0 0
        %1503 = vmatpush1.bf16.xpose.msra.mxu0 0
        %1504 = vmatprep.subr.bf16.mxu0 0
        %1505 = vmatpush1.bf16.xpose.msra.mxu0 0
        %1506 = vmatprep.subr.bf16.mxu0 0
        %1507 = vmatpush1.bf16.xpose.msra.mxu0 0
        %1508 = vmatprep.subr.bf16.mxu0 0
        %1509 = vmatpush1.bf16.xpose.msra.mxu0 0
        %1510 = vmatprep.subr.bf16.mxu0 0
        %1511 = vmatpush1.bf16.xpose.msra.mxu0 0
        %1512 = vmatprep.subr.bf16.mxu0 0
        %1513 = vmatpush1.bf16.xpose.msra.mxu0 0
        %1514 = vmatprep.mubr.bf16.mxu0 0
        %1515 = vmatmul.mubr.bf16.gmra.mrb[0].mxu0 %v1477
        %v1516 = vpop.f32.mrb[0].mxu0
        %v1517 = vadd.f32 0.0, %v1516
        %v1518 = vpop.f32.mrb[0].mxu0
        %v1519 = vpop.f32.mrb[0].mxu0
        %v1520 = vpop.f32.mrb[0].mxu0
        %1521 = vdwg.mxu0
        %v1523 = vsel %vm1383, %v1046, 0
        %v1526 = vsel %vm1383, %v1214, 0
        %1528 = vmatprep.subr.bf16.mxu0 0
        %1529 = vmatpush1.bf16.xpose.msra.mxu0 %v1526
        %1530 = vmatprep.subr.bf16.mxu0 0
        %1531 = vmatpush1.bf16.xpose.msra.mxu0 0
        %1532 = vmatprep.subr.bf16.mxu0 0
        %1533 = vmatpush1.bf16.xpose.msra.mxu0 0
        %1534 = vmatprep.subr.bf16.mxu0 0
        %1535 = vmatpush1.bf16.xpose.msra.mxu0 0
        %1536 = vmatprep.subr.bf16.mxu0 0
        %1537 = vmatpush1.bf16.xpose.msra.mxu0 0
        %1538 = vmatprep.subr.bf16.mxu0 0
        %1539 = vmatpush1.bf16.xpose.msra.mxu0 0
        %1540 = vmatprep.subr.bf16.mxu0 0
        %1541 = vmatpush1.bf16.xpose.msra.mxu0 0
        %1542 = vmatprep.subr.bf16.mxu0 0
        %1543 = vmatpush1.bf16.xpose.msra.mxu0 0
        %1544 = vmatprep.subr.bf16.mxu0 0
        %1545 = vmatpush1.bf16.xpose.msra.mxu0 0
        %1546 = vmatprep.subr.bf16.mxu0 0
        %1547 = vmatpush1.bf16.xpose.msra.mxu0 0
        %1548 = vmatprep.subr.bf16.mxu0 0
        %1549 = vmatpush1.bf16.xpose.msra.mxu0 0
        %1550 = vmatprep.subr.bf16.mxu0 0
        %1551 = vmatpush1.bf16.xpose.msra.mxu0 0
        %1552 = vmatprep.subr.bf16.mxu0 0
        %1553 = vmatpush1.bf16.xpose.msra.mxu0 0
        %1554 = vmatprep.subr.bf16.mxu0 0
        %1555 = vmatpush1.bf16.xpose.msra.mxu0 0
        %1556 = vmatprep.subr.bf16.mxu0 0
        %1557 = vmatpush1.bf16.xpose.msra.mxu0 0
        %1558 = vmatprep.subr.bf16.mxu0 0
        %1559 = vmatpush1.bf16.xpose.msra.mxu0 0
        %1560 = vmatprep.mubr.bf16.mxu0 0
        %1561 = vmatmul.mubr.bf16.gmra.mrb[0].mxu0 %v1523
        %v1562 = vpop.f32.mrb[0].mxu0
        %v1563 = vadd.f32 0.0, %v1562
        %v1564 = vpop.f32.mrb[0].mxu0
        %v1565 = vpop.f32.mrb[0].mxu0
        %v1566 = vpop.f32.mrb[0].mxu0
        %1567 = vdwg.mxu0
        %v1568 = vsel %vm1383, %v1425, -inf
        %1569 = vmax.xlane.f32.xlu0 %v1568
        %v1570 = vpop.xlane.xlu0 %1569
        %v1571 = vsel %vm1383, %v1471, -inf
        %1572 = vmax.xlane.f32.xlu0 %v1571
        %v1573 = vpop.xlane.xlu0 %1572
        %v1574 = vsel %vm1383, %v1517, -inf
        %1575 = vmax.xlane.f32.xlu0 %v1574
        %v1576 = vpop.xlane.xlu0 %1575
        %v1577 = vsel %vm1383, %v1563, -inf
        %1578 = vmax.xlane.f32.xlu0 %v1577
        %v1579 = vpop.xlane.xlu0 %1578
        %v1580 = vsub.f32 %v1425, %v1570
        %v1581 = vsub.f32 %v1471, %v1573
        %v1582 = vsub.f32 %v1517, %v1576
        %v1583 = vsub.f32 %v1563, %v1579
        %v1584 = vmul.f32 %v1580, 1.442695
        %v1585 = vpow.pop %v1584
        %v1586 = vmul.f32 %v1581, 1.442695
        %v1587 = vpow.pop %v1586
        %v1588 = vmul.f32 %v1582, 1.442695
        %v1589 = vpow.pop %v1588
        %v1590 = vmul.f32 %v1583, 1.442695
        %v1591 = vpow.pop %v1590
        %v1592 = vsel %vm1383, %v1585, 0.0
        %1593 = vadd.xlane.f32.xlu0 %v1592
        %v1594 = vpop.xlane.xlu0 %1593
        %v1595 = vsel %vm1383, %v1587, 0.0
        %1596 = vadd.xlane.f32.xlu0 %v1595
        %v1597 = vpop.xlane.xlu0 %1596
        %v1598 = vsel %vm1383, %v1589, 0.0
        %1599 = vadd.xlane.f32.xlu0 %v1598
        %v1600 = vpop.xlane.xlu0 %1599
        %v1601 = vsel %vm1383, %v1591, 0.0
        %1602 = vadd.xlane.f32.xlu0 %v1601
        %v1603 = vpop.xlane.xlu0 %1602
        %v1604 = vrcp.pop %v1594
        %v1605 = vrcp.pop %v1597
        %v1606 = vrcp.pop %v1600
        %v1607 = vrcp.pop %v1603
        %v1608 = vmul.f32 %v1585, %v1604
        %v1609 = vmul.f32 %v1587, %v1605
        %v1610 = vmul.f32 %v1589, %v1606
        %v1611 = vmul.f32 %v1591, %v1607
        %v1612 = vpack.c.bf16 %v1608, %v1608
        %v1613 = vpack.c.bf16 %v1609, %v1609
        %v1614 = vpack.c.bf16 %v1610, %v1610
        %v1615 = vpack.c.bf16 %v1611, %v1611
        %v1617 = vsel %vm1383, %v1612, 0
        %vm1619 = vcmask 1043456
        %v1621 = vsel %vm1619, %v1373, 0
        %1623 = vmatprep.subr.bf16.mxu0 0
        %1624 = vmatpush1.bf16.msra.mxu0 %v1621
        %1625 = vmatprep.subr.bf16.mxu0 0
        %1626 = vmatpush1.bf16.msra.mxu0 0
        %1627 = vmatprep.subr.bf16.mxu0 0
        %1628 = vmatpush1.bf16.msra.mxu0 0
        %1629 = vmatprep.subr.bf16.mxu0 0
        %1630 = vmatpush1.bf16.msra.mxu0 0
        %1631 = vmatprep.subr.bf16.mxu0 0
        %1632 = vmatpush1.bf16.msra.mxu0 0
        %1633 = vmatprep.subr.bf16.mxu0 0
        %1634 = vmatpush1.bf16.msra.mxu0 0
        %1635 = vmatprep.subr.bf16.mxu0 0
        %1636 = vmatpush1.bf16.msra.mxu0 0
        %1637 = vmatprep.subr.bf16.mxu0 0
        %1638 = vmatpush1.bf16.msra.mxu0 0
        %1639 = vmatprep.subr.bf16.mxu0 0
        %1640 = vmatpush1.bf16.msra.mxu0 0
        %1641 = vmatprep.subr.bf16.mxu0 0
        %1642 = vmatpush1.bf16.msra.mxu0 0
        %1643 = vmatprep.subr.bf16.mxu0 0
        %1644 = vmatpush1.bf16.msra.mxu0 0
        %1645 = vmatprep.subr.bf16.mxu0 0
        %1646 = vmatpush1.bf16.msra.mxu0 0
        %1647 = vmatprep.subr.bf16.mxu0 0
        %1648 = vmatpush1.bf16.msra.mxu0 0
        %1649 = vmatprep.subr.bf16.mxu0 0
        %1650 = vmatpush1.bf16.msra.mxu0 0
        %1651 = vmatprep.subr.bf16.mxu0 0
        %1652 = vmatpush1.bf16.msra.mxu0 0
        %1653 = vmatprep.subr.bf16.mxu0 0
        %1654 = vmatpush1.bf16.msra.mxu0 0
        %1655 = vmatprep.mubr.bf16.mxu0 0
        %1656 = vmatmul.mubr.bf16.gmra.mrb[0].mxu0 %v1617
        %v1657 = vpop.f32.mrb[0].mxu0
        %v1658 = vadd.f32 0.0, %v1657
        %v1659 = vpop.f32.mrb[0].mxu0
        %v1660 = vpop.f32.mrb[0].mxu0
        %v1661 = vpop.f32.mrb[0].mxu0
        %1662 = vdwg.mxu0
        %v1664 = vsel %vm1383, %v1613, 0
        %v1667 = vsel %vm1619, %v1376, 0
        %1669 = vmatprep.subr.bf16.mxu0 0
        %1670 = vmatpush1.bf16.msra.mxu0 %v1667
        %1671 = vmatprep.subr.bf16.mxu0 0
        %1672 = vmatpush1.bf16.msra.mxu0 0
        %1673 = vmatprep.subr.bf16.mxu0 0
        %1674 = vmatpush1.bf16.msra.mxu0 0
        %1675 = vmatprep.subr.bf16.mxu0 0
        %1676 = vmatpush1.bf16.msra.mxu0 0
        %1677 = vmatprep.subr.bf16.mxu0 0
        %1678 = vmatpush1.bf16.msra.mxu0 0
        %1679 = vmatprep.subr.bf16.mxu0 0
        %1680 = vmatpush1.bf16.msra.mxu0 0
        %1681 = vmatprep.subr.bf16.mxu0 0
        %1682 = vmatpush1.bf16.msra.mxu0 0
        %1683 = vmatprep.subr.bf16.mxu0 0
        %1684 = vmatpush1.bf16.msra.mxu0 0
        %1685 = vmatprep.subr.bf16.mxu0 0
        %1686 = vmatpush1.bf16.msra.mxu0 0
        %1687 = vmatprep.subr.bf16.mxu0 0
        %1688 = vmatpush1.bf16.msra.mxu0 0
        %1689 = vmatprep.subr.bf16.mxu0 0
        %1690 = vmatpush1.bf16.msra.mxu0 0
        %1691 = vmatprep.subr.bf16.mxu0 0
        %1692 = vmatpush1.bf16.msra.mxu0 0
        %1693 = vmatprep.subr.bf16.mxu0 0
        %1694 = vmatpush1.bf16.msra.mxu0 0
        %1695 = vmatprep.subr.bf16.mxu0 0
        %1696 = vmatpush1.bf16.msra.mxu0 0
        %1697 = vmatprep.subr.bf16.mxu0 0
        %1698 = vmatpush1.bf16.msra.mxu0 0
        %1699 = vmatprep.subr.bf16.mxu0 0
        %1700 = vmatpush1.bf16.msra.mxu0 0
        %1701 = vmatprep.mubr.bf16.mxu0 0
        %1702 = vmatmul.mubr.bf16.gmra.mrb[0].mxu0 %v1664
        %v1703 = vpop.f32.mrb[0].mxu0
        %v1704 = vadd.f32 0.0, %v1703
        %v1705 = vpop.f32.mrb[0].mxu0
        %v1706 = vpop.f32.mrb[0].mxu0
        %v1707 = vpop.f32.mrb[0].mxu0
        %1708 = vdwg.mxu0
        %v1710 = vsel %vm1383, %v1614, 0
        %v1713 = vsel %vm1619, %v1379, 0
        %1715 = vmatprep.subr.bf16.mxu0 0
        %1716 = vmatpush1.bf16.msra.mxu0 %v1713
        %1717 = vmatprep.subr.bf16.mxu0 0
        %1718 = vmatpush1.bf16.msra.mxu0 0
        %1719 = vmatprep.subr.bf16.mxu0 0
        %1720 = vmatpush1.bf16.msra.mxu0 0
        %1721 = vmatprep.subr.bf16.mxu0 0
        %1722 = vmatpush1.bf16.msra.mxu0 0
        %1723 = vmatprep.subr.bf16.mxu0 0
        %1724 = vmatpush1.bf16.msra.mxu0 0
        %1725 = vmatprep.subr.bf16.mxu0 0
        %1726 = vmatpush1.bf16.msra.mxu0 0
        %1727 = vmatprep.subr.bf16.mxu0 0
        %1728 = vmatpush1.bf16.msra.mxu0 0
        %1729 = vmatprep.subr.bf16.mxu0 0
        %1730 = vmatpush1.bf16.msra.mxu0 0
        %1731 = vmatprep.subr.bf16.mxu0 0
        %1732 = vmatpush1.bf16.msra.mxu0 0
        %1733 = vmatprep.subr.bf16.mxu0 0
        %1734 = vmatpush1.bf16.msra.mxu0 0
        %1735 = vmatprep.subr.bf16.mxu0 0
        %1736 = vmatpush1.bf16.msra.mxu0 0
        %1737 = vmatprep.subr.bf16.mxu0 0
        %1738 = vmatpush1.bf16.msra.mxu0 0
        %1739 = vmatprep.subr.bf16.mxu0 0
        %1740 = vmatpush1.bf16.msra.mxu0 0
        %1741 = vmatprep.subr.bf16.mxu0 0
        %1742 = vmatpush1.bf16.msra.mxu0 0
        %1743 = vmatprep.subr.bf16.mxu0 0
        %1744 = vmatpush1.bf16.msra.mxu0 0
        %1745 = vmatprep.subr.bf16.mxu0 0
        %1746 = vmatpush1.bf16.msra.mxu0 0
        %1747 = vmatprep.mubr.bf16.mxu0 0
        %1748 = vmatmul.mubr.bf16.gmra.mrb[0].mxu0 %v1710
        %v1749 = vpop.f32.mrb[0].mxu0
        %v1750 = vadd.f32 0.0, %v1749
        %v1751 = vpop.f32.mrb[0].mxu0
        %v1752 = vpop.f32.mrb[0].mxu0
        %v1753 = vpop.f32.mrb[0].mxu0
        %1754 = vdwg.mxu0
        %v1756 = vsel %vm1383, %v1615, 0
        %v1759 = vsel %vm1619, %v1382, 0
        %1761 = vmatprep.subr.bf16.mxu0 0
        %1762 = vmatpush1.bf16.msra.mxu0 %v1759
        %1763 = vmatprep.subr.bf16.mxu0 0
        %1764 = vmatpush1.bf16.msra.mxu0 0
        %1765 = vmatprep.subr.bf16.mxu0 0
        %1766 = vmatpush1.bf16.msra.mxu0 0
        %1767 = vmatprep.subr.bf16.mxu0 0
        %1768 = vmatpush1.bf16.msra.mxu0 0
        %1769 = vmatprep.subr.bf16.mxu0 0
        %1770 = vmatpush1.bf16.msra.mxu0 0
        %1771 = vmatprep.subr.bf16.mxu0 0
        %1772 = vmatpush1.bf16.msra.mxu0 0
        %1773 = vmatprep.subr.bf16.mxu0 0
        %1774 = vmatpush1.bf16.msra.mxu0 0
        %1775 = vmatprep.subr.bf16.mxu0 0
        %1776 = vmatpush1.bf16.msra.mxu0 0
        %1777 = vmatprep.subr.bf16.mxu0 0
        %1778 = vmatpush1.bf16.msra.mxu0 0
        %1779 = vmatprep.subr.bf16.mxu0 0
        %1780 = vmatpush1.bf16.msra.mxu0 0
        %1781 = vmatprep.subr.bf16.mxu0 0
        %1782 = vmatpush1.bf16.msra.mxu0 0
        %1783 = vmatprep.subr.bf16.mxu0 0
        %1784 = vmatpush1.bf16.msra.mxu0 0
        %1785 = vmatprep.subr.bf16.mxu0 0
        %1786 = vmatpush1.bf16.msra.mxu0 0
        %1787 = vmatprep.subr.bf16.mxu0 0
        %1788 = vmatpush1.bf16.msra.mxu0 0
        %1789 = vmatprep.subr.bf16.mxu0 0
        %1790 = vmatpush1.bf16.msra.mxu0 0
        %1791 = vmatprep.subr.bf16.mxu0 0
        %1792 = vmatpush1.bf16.msra.mxu0 0
        %1793 = vmatprep.mubr.bf16.mxu0 0
        %1794 = vmatmul.mubr.bf16.gmra.mrb[0].mxu0 %v1756
        %v1795 = vpop.f32.mrb[0].mxu0
        %v1796 = vadd.f32 0.0, %v1795
        %v1797 = vpop.f32.mrb[0].mxu0
        %v1798 = vpop.f32.mrb[0].mxu0
        %v1799 = vpop.f32.mrb[0].mxu0
        %1800 = vdwg.mxu0
        %v1801 = vpack.c.bf16 %v1658, %v1658
        %v1803 = vunpack.c.l.s4 1983009808
        %v1804 = vunpack.c.0.s8 %v1803
        %v1805 = vlaneseq
        %v1806 = vshrl.u32 %v1805, 7
        %v1807 = vsub.s32 %v1804, %v1806
        %v1808 = vrot.slane %v1801, %v1807
        %v1809 = vpack.c.bf16 %v1750, %v1750
        %v1811 = vunpack.c.l.s4 1983009808
        %v1812 = vunpack.c.0.s8 %v1811
        %v1813 = vlaneseq
        %v1814 = vshrl.u32 %v1813, 7
        %v1815 = vsub.s32 %v1812, %v1814
        %v1816 = vrot.slane %v1809, %v1815
        %v1817 = vcombine.low %v1808, %v1816
        %v1818 = vcombine.high %v1808, %v1816
        %v1820 = vunpack.c.l.s4 1934713408
        %v1821 = vunpack.c.0.s8 %v1820
        %v1822 = vlaneseq
        %v1823 = vshrl.u32 %v1822, 7
        %v1824 = vsub.s32 %v1821, %v1823
        %v1825 = vrot.slane %v1817, %v1824
        %v1827 = vunpack.c.l.s4 1934713408
        %v1828 = vunpack.c.0.s8 %v1827
        %v1829 = vlaneseq
        %v1830 = vshrl.u32 %v1829, 7
        %v1831 = vsub.s32 %v1828, %v1830
        %v1832 = vrot.slane %v1818, %v1831
        %v1833 = vcombine.high %v1825, 0
        %v1834 = vcombine.high %v1832, 0
        %v1835 = vpack.c.bf16 %v1704, %v1704
        %v1837 = vunpack.c.l.s4 1983009808
        %v1838 = vunpack.c.0.s8 %v1837
        %v1839 = vlaneseq
        %v1840 = vshrl.u32 %v1839, 7
        %v1841 = vsub.s32 %v1838, %v1840
        %v1842 = vrot.slane %v1835, %v1841
        %v1843 = vpack.c.bf16 %v1796, %v1796
        %v1845 = vunpack.c.l.s4 1983009808
        %v1846 = vunpack.c.0.s8 %v1845
        %v1847 = vlaneseq
        %v1848 = vshrl.u32 %v1847, 7
        %v1849 = vsub.s32 %v1846, %v1848
        %v1850 = vrot.slane %v1843, %v1849
        %v1851 = vcombine.low %v1842, %v1850
        %v1852 = vcombine.high %v1842, %v1850
        %v1854 = vunpack.c.l.s4 1934713408
        %v1855 = vunpack.c.0.s8 %v1854
        %v1856 = vlaneseq
        %v1857 = vshrl.u32 %v1856, 7
        %v1858 = vsub.s32 %v1855, %v1857
        %v1859 = vrot.slane %v1851, %v1858
        %v1861 = vunpack.c.l.s4 1934713408
        %v1862 = vunpack.c.0.s8 %v1861
        %v1863 = vlaneseq
        %v1864 = vshrl.u32 %v1863, 7
        %v1865 = vsub.s32 %v1862, %v1864
        %v1866 = vrot.slane %v1852, %v1865
        %v1867 = vcombine.high %v1859, 0
        %v1868 = vcombine.high %v1866, 0
        %v1871 = vpack.i.b16 %v1859, %v1825
        %v1873 = vshrl.u32 %v1825, 16
        %v1874 = vshrl.u32 %v1859, 16
        %v1875 = vpack.i.b16 %v1874, %v1873
        %v1879 = vpack.i.b16 %v1867, %v1833
        %v1881 = vshrl.u32 %v1833, 16
        %v1882 = vshrl.u32 %v1867, 16
        %v1883 = vpack.i.b16 %v1882, %v1881
        %v1887 = vpack.i.b16 %v1866, %v1832
        %v1889 = vshrl.u32 %v1832, 16
        %v1890 = vshrl.u32 %v1866, 16
        %v1891 = vpack.i.b16 %v1890, %v1889
        %v1895 = vpack.i.b16 %v1868, %v1834
        %v1897 = vshrl.u32 %v1834, 16
        %v1898 = vshrl.u32 %v1868, 16
        %v1899 = vpack.i.b16 %v1898, %v1897
        %v1901 = vcombine.low %v1871, %v1887
        %v1903 = vunpack.c.l.s4 1983009808
        %v1904 = vunpack.c.0.s8 %v1903
        %v1905 = vlaneseq
        %v1906 = vshrl.u32 %v1905, 7
        %v1907 = vsub.s32 %v1904, %v1906
        %v1908 = vrot.slane %v1901, %v1907
        %v1909 = vcombine.low %v1879, %v1895
        %v1911 = vunpack.c.l.s4 1983009808
        %v1912 = vunpack.c.0.s8 %v1911
        %v1913 = vlaneseq
        %v1914 = vshrl.u32 %v1913, 7
        %v1915 = vsub.s32 %v1912, %v1914
        %v1916 = vrot.slane %v1909, %v1915
        %v1917 = vcombine.low %v1908, %v1916
        %v1919 = vunpack.c.l.s4 1934713408
        %v1920 = vunpack.c.0.s8 %v1919
        %v1921 = vlaneseq
        %v1922 = vshrl.u32 %v1921, 7
        %v1923 = vsub.s32 %v1920, %v1922
        %v1924 = vrot.slane %v1917, %v1923
        %v1925 = vcombine.high %v1924, 0
        %v1926 = vcombine.low %v1875, %v1891
        %v1928 = vunpack.c.l.s4 1983009808
        %v1929 = vunpack.c.0.s8 %v1928
        %v1930 = vlaneseq
        %v1931 = vshrl.u32 %v1930, 7
        %v1932 = vsub.s32 %v1929, %v1931
        %v1933 = vrot.slane %v1926, %v1932
        %v1934 = vcombine.low %v1883, %v1899
        %v1936 = vunpack.c.l.s4 1983009808
        %v1937 = vunpack.c.0.s8 %v1936
        %v1938 = vlaneseq
        %v1939 = vshrl.u32 %v1938, 7
        %v1940 = vsub.s32 %v1937, %v1939
        %v1941 = vrot.slane %v1934, %v1940
        %v1942 = vcombine.low %v1933, %v1941
        %v1944 = vunpack.c.l.s4 1934713408
        %v1945 = vunpack.c.0.s8 %v1944
        %v1946 = vlaneseq
        %v1947 = vshrl.u32 %v1946, 7
        %v1948 = vsub.s32 %v1945, %v1947
        %v1949 = vrot.slane %v1942, %v1948
        %v1950 = vcombine.high %v1949, 0
        %v1953 = vpack.i.b16 %v1949, %v1924
        %v1954 = vshrl.u32 %v1924, 16
        %v1955 = vshrl.u32 %v1949, 16
        %v1956 = vpack.i.b16 %v1955, %v1954
        %v1959 = vpack.i.b16 %v1950, %v1925
        %v1960 = vshrl.u32 %v1925, 16
        %v1961 = vshrl.u32 %v1950, 16
        %v1962 = vpack.i.b16 %v1961, %v1960
        %1963 = vrot.lane.b32.xlu0 %v1956, 8
        %v1964 = vpop.permute.xlu0 %1963
        %1965 = vrot.lane.b32.xlu0 %v1959, 16
        %v1966 = vpop.permute.xlu0 %1965
        %1967 = vrot.lane.b32.xlu0 %v1962, 24
        %v1968 = vpop.permute.xlu0 %1967
        %v1971 = vsel %vm1383, %v1953, %v1964
        %vm1972 = vcmask 130048
        %v1974 = vsel %vm1972, %v1971, %v1966
        %vm1975 = vcmask 195584
        %v1977 = vsel %vm1975, %v1974, %v1968
        %v1978 = vrot.slane %v876, 4
        %v1979 = vrot.slane %v881, 4
        %v1980 = vrot.slane %v883, 4
        %v1981 = vrot.slane %v885, 4
        %v1984 = vunpack.c.l.s4 1983009808
        %v1985 = vunpack.c.0.s8 %v1984
        %v1986 = vlaneseq
        %v1987 = vshrl.u32 %v1986, 7
        %v1988 = vsub.s32 %v1985, %v1987
        %v1989 = vrot.slane %v1978, %v1988
        %v1992 = vunpack.c.l.s4 1983009808
        %v1993 = vunpack.c.0.s8 %v1992
        %v1994 = vlaneseq
        %v1995 = vshrl.u32 %v1994, 7
        %v1996 = vsub.s32 %v1993, %v1995
        %v1997 = vrot.slane %v1980, %v1996
        %v1998 = vcombine.low %v1989, %v1997
        %v1999 = vcombine.high %v1989, %v1997
        %v2001 = vunpack.c.l.s4 1934713408
        %v2002 = vunpack.c.0.s8 %v2001
        %v2003 = vlaneseq
        %v2004 = vshrl.u32 %v2003, 7
        %v2005 = vsub.s32 %v2002, %v2004
        %v2006 = vrot.slane %v1998, %v2005
        %v2008 = vunpack.c.l.s4 1934713408
        %v2009 = vunpack.c.0.s8 %v2008
        %v2010 = vlaneseq
        %v2011 = vshrl.u32 %v2010, 7
        %v2012 = vsub.s32 %v2009, %v2011
        %v2013 = vrot.slane %v1999, %v2012
        %v2014 = vcombine.high %v2006, 0
        %v2015 = vcombine.high %v2013, 0
        %v2018 = vunpack.c.l.s4 1983009808
        %v2019 = vunpack.c.0.s8 %v2018
        %v2020 = vlaneseq
        %v2021 = vshrl.u32 %v2020, 7
        %v2022 = vsub.s32 %v2019, %v2021
        %v2023 = vrot.slane %v1979, %v2022
        %v2026 = vunpack.c.l.s4 1983009808
        %v2027 = vunpack.c.0.s8 %v2026
        %v2028 = vlaneseq
        %v2029 = vshrl.u32 %v2028, 7
        %v2030 = vsub.s32 %v2027, %v2029
        %v2031 = vrot.slane %v1981, %v2030
        %v2032 = vcombine.low %v2023, %v2031
        %v2033 = vcombine.high %v2023, %v2031
        %v2035 = vunpack.c.l.s4 1934713408
        %v2036 = vunpack.c.0.s8 %v2035
        %v2037 = vlaneseq
        %v2038 = vshrl.u32 %v2037, 7
        %v2039 = vsub.s32 %v2036, %v2038
        %v2040 = vrot.slane %v2032, %v2039
        %v2042 = vunpack.c.l.s4 1934713408
        %v2043 = vunpack.c.0.s8 %v2042
        %v2044 = vlaneseq
        %v2045 = vshrl.u32 %v2044, 7
        %v2046 = vsub.s32 %v2043, %v2045
        %v2047 = vrot.slane %v2033, %v2046
        %v2048 = vcombine.high %v2040, 0
        %v2049 = vcombine.high %v2047, 0
        %v2052 = vpack.i.b16 %v2040, %v2006
        %v2054 = vshrl.u32 %v2006, 16
        %v2055 = vshrl.u32 %v2040, 16
        %v2056 = vpack.i.b16 %v2055, %v2054
        %v2060 = vpack.i.b16 %v2048, %v2014
        %v2062 = vshrl.u32 %v2014, 16
        %v2063 = vshrl.u32 %v2048, 16
        %v2064 = vpack.i.b16 %v2063, %v2062
        %v2068 = vpack.i.b16 %v2047, %v2013
        %v2070 = vshrl.u32 %v2013, 16
        %v2071 = vshrl.u32 %v2047, 16
        %v2072 = vpack.i.b16 %v2071, %v2070
        %v2076 = vpack.i.b16 %v2049, %v2015
        %v2078 = vshrl.u32 %v2015, 16
        %v2079 = vshrl.u32 %v2049, 16
        %v2080 = vpack.i.b16 %v2079, %v2078
        %v2082 = vcombine.low %v2052, %v2068
        %v2084 = vunpack.c.l.s4 1983009808
        %v2085 = vunpack.c.0.s8 %v2084
        %v2086 = vlaneseq
        %v2087 = vshrl.u32 %v2086, 7
        %v2088 = vsub.s32 %v2085, %v2087
        %v2089 = vrot.slane %v2082, %v2088
        %v2090 = vcombine.low %v2060, %v2076
        %v2092 = vunpack.c.l.s4 1983009808
        %v2093 = vunpack.c.0.s8 %v2092
        %v2094 = vlaneseq
        %v2095 = vshrl.u32 %v2094, 7
        %v2096 = vsub.s32 %v2093, %v2095
        %v2097 = vrot.slane %v2090, %v2096
        %v2098 = vcombine.low %v2089, %v2097
        %v2100 = vunpack.c.l.s4 1934713408
        %v2101 = vunpack.c.0.s8 %v2100
        %v2102 = vlaneseq
        %v2103 = vshrl.u32 %v2102, 7
        %v2104 = vsub.s32 %v2101, %v2103
        %v2105 = vrot.slane %v2098, %v2104
        %v2106 = vcombine.high %v2105, 0
        %v2107 = vcombine.low %v2056, %v2072
        %v2109 = vunpack.c.l.s4 1983009808
        %v2110 = vunpack.c.0.s8 %v2109
        %v2111 = vlaneseq
        %v2112 = vshrl.u32 %v2111, 7
        %v2113 = vsub.s32 %v2110, %v2112
        %v2114 = vrot.slane %v2107, %v2113
        %v2115 = vcombine.low %v2064, %v2080
        %v2117 = vunpack.c.l.s4 1983009808
        %v2118 = vunpack.c.0.s8 %v2117
        %v2119 = vlaneseq
        %v2120 = vshrl.u32 %v2119, 7
        %v2121 = vsub.s32 %v2118, %v2120
        %v2122 = vrot.slane %v2115, %v2121
        %v2123 = vcombine.low %v2114, %v2122
        %v2125 = vunpack.c.l.s4 1934713408
        %v2126 = vunpack.c.0.s8 %v2125
        %v2127 = vlaneseq
        %v2128 = vshrl.u32 %v2127, 7
        %v2129 = vsub.s32 %v2126, %v2128
        %v2130 = vrot.slane %v2123, %v2129
        %v2131 = vcombine.high %v2130, 0
        %v2134 = vpack.i.b16 %v2130, %v2105
        %v2135 = vshrl.u32 %v2105, 16
        %v2136 = vshrl.u32 %v2130, 16
        %v2137 = vpack.i.b16 %v2136, %v2135
        %v2140 = vpack.i.b16 %v2131, %v2106
        %v2141 = vshrl.u32 %v2106, 16
        %v2142 = vshrl.u32 %v2131, 16
        %v2143 = vpack.i.b16 %v2142, %v2141
        %v2144 = vrot.slane %v877, 4
        %v2145 = vrot.slane %v1049, 4
        %v2146 = vrot.slane %v1051, 4
        %v2147 = vrot.slane %v1053, 4
        %v2150 = vunpack.c.l.s4 1983009808
        %v2151 = vunpack.c.0.s8 %v2150
        %v2152 = vlaneseq
        %v2153 = vshrl.u32 %v2152, 7
        %v2154 = vsub.s32 %v2151, %v2153
        %v2155 = vrot.slane %v2144, %v2154
        %v2158 = vunpack.c.l.s4 1983009808
        %v2159 = vunpack.c.0.s8 %v2158
        %v2160 = vlaneseq
        %v2161 = vshrl.u32 %v2160, 7
        %v2162 = vsub.s32 %v2159, %v2161
        %v2163 = vrot.slane %v2146, %v2162
        %v2164 = vcombine.low %v2155, %v2163
        %v2165 = vcombine.high %v2155, %v2163
        %v2167 = vunpack.c.l.s4 1934713408
        %v2168 = vunpack.c.0.s8 %v2167
        %v2169 = vlaneseq
        %v2170 = vshrl.u32 %v2169, 7
        %v2171 = vsub.s32 %v2168, %v2170
        %v2172 = vrot.slane %v2164, %v2171
        %v2174 = vunpack.c.l.s4 1934713408
        %v2175 = vunpack.c.0.s8 %v2174
        %v2176 = vlaneseq
        %v2177 = vshrl.u32 %v2176, 7
        %v2178 = vsub.s32 %v2175, %v2177
        %v2179 = vrot.slane %v2165, %v2178
        %v2180 = vcombine.high %v2172, 0
        %v2181 = vcombine.high %v2179, 0
        %v2184 = vunpack.c.l.s4 1983009808
        %v2185 = vunpack.c.0.s8 %v2184
        %v2186 = vlaneseq
        %v2187 = vshrl.u32 %v2186, 7
        %v2188 = vsub.s32 %v2185, %v2187
        %v2189 = vrot.slane %v2145, %v2188
        %v2192 = vunpack.c.l.s4 1983009808
        %v2193 = vunpack.c.0.s8 %v2192
        %v2194 = vlaneseq
        %v2195 = vshrl.u32 %v2194, 7
        %v2196 = vsub.s32 %v2193, %v2195
        %v2197 = vrot.slane %v2147, %v2196
        %v2198 = vcombine.low %v2189, %v2197
        %v2199 = vcombine.high %v2189, %v2197
        %v2201 = vunpack.c.l.s4 1934713408
        %v2202 = vunpack.c.0.s8 %v2201
        %v2203 = vlaneseq
        %v2204 = vshrl.u32 %v2203, 7
        %v2205 = vsub.s32 %v2202, %v2204
        %v2206 = vrot.slane %v2198, %v2205
        %v2208 = vunpack.c.l.s4 1934713408
        %v2209 = vunpack.c.0.s8 %v2208
        %v2210 = vlaneseq
        %v2211 = vshrl.u32 %v2210, 7
        %v2212 = vsub.s32 %v2209, %v2211
        %v2213 = vrot.slane %v2199, %v2212
        %v2214 = vcombine.high %v2206, 0
        %v2215 = vcombine.high %v2213, 0
        %v2218 = vpack.i.b16 %v2206, %v2172
        %v2220 = vshrl.u32 %v2172, 16
        %v2221 = vshrl.u32 %v2206, 16
        %v2222 = vpack.i.b16 %v2221, %v2220
        %v2226 = vpack.i.b16 %v2214, %v2180
        %v2228 = vshrl.u32 %v2180, 16
        %v2229 = vshrl.u32 %v2214, 16
        %v2230 = vpack.i.b16 %v2229, %v2228
        %v2234 = vpack.i.b16 %v2213, %v2179
        %v2236 = vshrl.u32 %v2179, 16
        %v2237 = vshrl.u32 %v2213, 16
        %v2238 = vpack.i.b16 %v2237, %v2236
        %v2242 = vpack.i.b16 %v2215, %v2181
        %v2244 = vshrl.u32 %v2181, 16
        %v2245 = vshrl.u32 %v2215, 16
        %v2246 = vpack.i.b16 %v2245, %v2244
        %v2248 = vcombine.low %v2218, %v2234
        %v2250 = vunpack.c.l.s4 1983009808
        %v2251 = vunpack.c.0.s8 %v2250
        %v2252 = vlaneseq
        %v2253 = vshrl.u32 %v2252, 7
        %v2254 = vsub.s32 %v2251, %v2253
        %v2255 = vrot.slane %v2248, %v2254
        %v2256 = vcombine.low %v2226, %v2242
        %v2258 = vunpack.c.l.s4 1983009808
        %v2259 = vunpack.c.0.s8 %v2258
        %v2260 = vlaneseq
        %v2261 = vshrl.u32 %v2260, 7
        %v2262 = vsub.s32 %v2259, %v2261
        %v2263 = vrot.slane %v2256, %v2262
        %v2264 = vcombine.low %v2255, %v2263
        %v2266 = vunpack.c.l.s4 1934713408
        %v2267 = vunpack.c.0.s8 %v2266
        %v2268 = vlaneseq
        %v2269 = vshrl.u32 %v2268, 7
        %v2270 = vsub.s32 %v2267, %v2269
        %v2271 = vrot.slane %v2264, %v2270
        %v2272 = vcombine.high %v2271, 0
        %v2273 = vcombine.low %v2222, %v2238
        %v2275 = vunpack.c.l.s4 1983009808
        %v2276 = vunpack.c.0.s8 %v2275
        %v2277 = vlaneseq
        %v2278 = vshrl.u32 %v2277, 7
        %v2279 = vsub.s32 %v2276, %v2278
        %v2280 = vrot.slane %v2273, %v2279
        %v2281 = vcombine.low %v2230, %v2246
        %v2283 = vunpack.c.l.s4 1983009808
        %v2284 = vunpack.c.0.s8 %v2283
        %v2285 = vlaneseq
        %v2286 = vshrl.u32 %v2285, 7
        %v2287 = vsub.s32 %v2284, %v2286
        %v2288 = vrot.slane %v2281, %v2287
        %v2289 = vcombine.low %v2280, %v2288
        %v2291 = vunpack.c.l.s4 1934713408
        %v2292 = vunpack.c.0.s8 %v2291
        %v2293 = vlaneseq
        %v2294 = vshrl.u32 %v2293, 7
        %v2295 = vsub.s32 %v2292, %v2294
        %v2296 = vrot.slane %v2289, %v2295
        %v2297 = vcombine.high %v2296, 0
        %v2300 = vpack.i.b16 %v2296, %v2271
        %v2301 = vshrl.u32 %v2271, 16
        %v2302 = vshrl.u32 %v2296, 16
        %v2303 = vpack.i.b16 %v2302, %v2301
        %v2306 = vpack.i.b16 %v2297, %v2272
        %v2307 = vshrl.u32 %v2272, 16
        %v2308 = vshrl.u32 %v2297, 16
        %v2309 = vpack.i.b16 %v2308, %v2307
        %v2310 = vrot.slane %v878, 4
        %v2311 = vrot.slane %v1217, 4
        %v2312 = vrot.slane %v1219, 4
        %v2313 = vrot.slane %v1221, 4
        %v2316 = vunpack.c.l.s4 1983009808
        %v2317 = vunpack.c.0.s8 %v2316
        %v2318 = vlaneseq
        %v2319 = vshrl.u32 %v2318, 7
        %v2320 = vsub.s32 %v2317, %v2319
        %v2321 = vrot.slane %v2310, %v2320
        %v2324 = vunpack.c.l.s4 1983009808
        %v2325 = vunpack.c.0.s8 %v2324
        %v2326 = vlaneseq
        %v2327 = vshrl.u32 %v2326, 7
        %v2328 = vsub.s32 %v2325, %v2327
        %v2329 = vrot.slane %v2312, %v2328
        %v2330 = vcombine.low %v2321, %v2329
        %v2331 = vcombine.high %v2321, %v2329
        %v2333 = vunpack.c.l.s4 1934713408
        %v2334 = vunpack.c.0.s8 %v2333
        %v2335 = vlaneseq
        %v2336 = vshrl.u32 %v2335, 7
        %v2337 = vsub.s32 %v2334, %v2336
        %v2338 = vrot.slane %v2330, %v2337
        %v2340 = vunpack.c.l.s4 1934713408
        %v2341 = vunpack.c.0.s8 %v2340
        %v2342 = vlaneseq
        %v2343 = vshrl.u32 %v2342, 7
        %v2344 = vsub.s32 %v2341, %v2343
        %v2345 = vrot.slane %v2331, %v2344
        %v2346 = vcombine.high %v2338, 0
        %v2347 = vcombine.high %v2345, 0
        %v2350 = vunpack.c.l.s4 1983009808
        %v2351 = vunpack.c.0.s8 %v2350
        %v2352 = vlaneseq
        %v2353 = vshrl.u32 %v2352, 7
        %v2354 = vsub.s32 %v2351, %v2353
        %v2355 = vrot.slane %v2311, %v2354
        %v2358 = vunpack.c.l.s4 1983009808
        %v2359 = vunpack.c.0.s8 %v2358
        %v2360 = vlaneseq
        %v2361 = vshrl.u32 %v2360, 7
        %v2362 = vsub.s32 %v2359, %v2361
        %v2363 = vrot.slane %v2313, %v2362
        %v2364 = vcombine.low %v2355, %v2363
        %v2365 = vcombine.high %v2355, %v2363
        %v2367 = vunpack.c.l.s4 1934713408
        %v2368 = vunpack.c.0.s8 %v2367
        %v2369 = vlaneseq
        %v2370 = vshrl.u32 %v2369, 7
        %v2371 = vsub.s32 %v2368, %v2370
        %v2372 = vrot.slane %v2364, %v2371
        %v2374 = vunpack.c.l.s4 1934713408
        %v2375 = vunpack.c.0.s8 %v2374
        %v2376 = vlaneseq
        %v2377 = vshrl.u32 %v2376, 7
        %v2378 = vsub.s32 %v2375, %v2377
        %v2379 = vrot.slane %v2365, %v2378
        %v2380 = vcombine.high %v2372, 0
        %v2381 = vcombine.high %v2379, 0
        %v2384 = vpack.i.b16 %v2372, %v2338
        %v2386 = vshrl.u32 %v2338, 16
        %v2387 = vshrl.u32 %v2372, 16
        %v2388 = vpack.i.b16 %v2387, %v2386
        %v2392 = vpack.i.b16 %v2380, %v2346
        %v2394 = vshrl.u32 %v2346, 16
        %v2395 = vshrl.u32 %v2380, 16
        %v2396 = vpack.i.b16 %v2395, %v2394
        %v2400 = vpack.i.b16 %v2379, %v2345
        %v2402 = vshrl.u32 %v2345, 16
        %v2403 = vshrl.u32 %v2379, 16
        %v2404 = vpack.i.b16 %v2403, %v2402
        %v2408 = vpack.i.b16 %v2381, %v2347
        %v2410 = vshrl.u32 %v2347, 16
        %v2411 = vshrl.u32 %v2381, 16
        %v2412 = vpack.i.b16 %v2411, %v2410
        %v2414 = vcombine.low %v2384, %v2400
        %v2416 = vunpack.c.l.s4 1983009808
        %v2417 = vunpack.c.0.s8 %v2416
        %v2418 = vlaneseq
        %v2419 = vshrl.u32 %v2418, 7
        %v2420 = vsub.s32 %v2417, %v2419
        %v2421 = vrot.slane %v2414, %v2420
        %v2422 = vcombine.low %v2392, %v2408
        %v2424 = vunpack.c.l.s4 1983009808
        %v2425 = vunpack.c.0.s8 %v2424
        %v2426 = vlaneseq
        %v2427 = vshrl.u32 %v2426, 7
        %v2428 = vsub.s32 %v2425, %v2427
        %v2429 = vrot.slane %v2422, %v2428
        %v2430 = vcombine.low %v2421, %v2429
        %v2432 = vunpack.c.l.s4 1934713408
        %v2433 = vunpack.c.0.s8 %v2432
        %v2434 = vlaneseq
        %v2435 = vshrl.u32 %v2434, 7
        %v2436 = vsub.s32 %v2433, %v2435
        %v2437 = vrot.slane %v2430, %v2436
        %v2438 = vcombine.high %v2437, 0
        %v2439 = vcombine.low %v2388, %v2404
        %v2441 = vunpack.c.l.s4 1983009808
        %v2442 = vunpack.c.0.s8 %v2441
        %v2443 = vlaneseq
        %v2444 = vshrl.u32 %v2443, 7
        %v2445 = vsub.s32 %v2442, %v2444
        %v2446 = vrot.slane %v2439, %v2445
        %v2447 = vcombine.low %v2396, %v2412
        %v2449 = vunpack.c.l.s4 1983009808
        %v2450 = vunpack.c.0.s8 %v2449
        %v2451 = vlaneseq
        %v2452 = vshrl.u32 %v2451, 7
        %v2453 = vsub.s32 %v2450, %v2452
        %v2454 = vrot.slane %v2447, %v2453
        %v2455 = vcombine.low %v2446, %v2454
        %v2457 = vunpack.c.l.s4 1934713408
        %v2458 = vunpack.c.0.s8 %v2457
        %v2459 = vlaneseq
        %v2460 = vshrl.u32 %v2459, 7
        %v2461 = vsub.s32 %v2458, %v2460
        %v2462 = vrot.slane %v2455, %v2461
        %v2463 = vcombine.high %v2462, 0
        %v2466 = vpack.i.b16 %v2462, %v2437
        %v2467 = vshrl.u32 %v2437, 16
        %v2468 = vshrl.u32 %v2462, 16
        %v2469 = vpack.i.b16 %v2468, %v2467
        %v2472 = vpack.i.b16 %v2463, %v2438
        %v2473 = vshrl.u32 %v2438, 16
        %v2474 = vshrl.u32 %v2463, 16
        %v2475 = vpack.i.b16 %v2474, %v2473
        %v2477 = vsel %vm1383, %v2134, 0
        %v2480 = vsel %vm1383, %v2300, 0
        %2482 = vmatprep.subr.bf16.mxu0 0
        %2483 = vmatpush1.bf16.xpose.msra.mxu0 %v2480
        %2484 = vmatprep.subr.bf16.mxu0 0
        %2485 = vmatpush1.bf16.xpose.msra.mxu0 0
        %2486 = vmatprep.subr.bf16.mxu0 0
        %2487 = vmatpush1.bf16.xpose.msra.mxu0 0
        %2488 = vmatprep.subr.bf16.mxu0 0
        %2489 = vmatpush1.bf16.xpose.msra.mxu0 0
        %2490 = vmatprep.subr.bf16.mxu0 0
        %2491 = vmatpush1.bf16.xpose.msra.mxu0 0
        %2492 = vmatprep.subr.bf16.mxu0 0
        %2493 = vmatpush1.bf16.xpose.msra.mxu0 0
        %2494 = vmatprep.subr.bf16.mxu0 0
        %2495 = vmatpush1.bf16.xpose.msra.mxu0 0
        %2496 = vmatprep.subr.bf16.mxu0 0
        %2497 = vmatpush1.bf16.xpose.msra.mxu0 0
        %2498 = vmatprep.subr.bf16.mxu0 0
        %2499 = vmatpush1.bf16.xpose.msra.mxu0 0
        %2500 = vmatprep.subr.bf16.mxu0 0
        %2501 = vmatpush1.bf16.xpose.msra.mxu0 0
        %2502 = vmatprep.subr.bf16.mxu0 0
        %2503 = vmatpush1.bf16.xpose.msra.mxu0 0
        %2504 = vmatprep.subr.bf16.mxu0 0
        %2505 = vmatpush1.bf16.xpose.msra.mxu0 0
        %2506 = vmatprep.subr.bf16.mxu0 0
        %2507 = vmatpush1.bf16.xpose.msra.mxu0 0
        %2508 = vmatprep.subr.bf16.mxu0 0
        %2509 = vmatpush1.bf16.xpose.msra.mxu0 0
        %2510 = vmatprep.subr.bf16.mxu0 0
        %2511 = vmatpush1.bf16.xpose.msra.mxu0 0
        %2512 = vmatprep.subr.bf16.mxu0 0
        %2513 = vmatpush1.bf16.xpose.msra.mxu0 0
        %2514 = vmatprep.mubr.bf16.mxu0 0
        %2515 = vmatmul.mubr.bf16.gmra.mrb[0].mxu0 %v2477
        %v2516 = vpop.f32.mrb[0].mxu0
        %v2517 = vadd.f32 0.0, %v2516
        %v2518 = vpop.f32.mrb[0].mxu0
        %v2519 = vpop.f32.mrb[0].mxu0
        %v2520 = vpop.f32.mrb[0].mxu0
        %2521 = vdwg.mxu0
        %v2523 = vsel %vm1383, %v2137, 0
        %v2526 = vsel %vm1383, %v2303, 0
        %2528 = vmatprep.subr.bf16.mxu0 0
        %2529 = vmatpush1.bf16.xpose.msra.mxu0 %v2526
        %2530 = vmatprep.subr.bf16.mxu0 0
        %2531 = vmatpush1.bf16.xpose.msra.mxu0 0
        %2532 = vmatprep.subr.bf16.mxu0 0
        %2533 = vmatpush1.bf16.xpose.msra.mxu0 0
        %2534 = vmatprep.subr.bf16.mxu0 0
        %2535 = vmatpush1.bf16.xpose.msra.mxu0 0
        %2536 = vmatprep.subr.bf16.mxu0 0
        %2537 = vmatpush1.bf16.xpose.msra.mxu0 0
        %2538 = vmatprep.subr.bf16.mxu0 0
        %2539 = vmatpush1.bf16.xpose.msra.mxu0 0
        %2540 = vmatprep.subr.bf16.mxu0 0
        %2541 = vmatpush1.bf16.xpose.msra.mxu0 0
        %2542 = vmatprep.subr.bf16.mxu0 0
        %2543 = vmatpush1.bf16.xpose.msra.mxu0 0
        %2544 = vmatprep.subr.bf16.mxu0 0
        %2545 = vmatpush1.bf16.xpose.msra.mxu0 0
        %2546 = vmatprep.subr.bf16.mxu0 0
        %2547 = vmatpush1.bf16.xpose.msra.mxu0 0
        %2548 = vmatprep.subr.bf16.mxu0 0
        %2549 = vmatpush1.bf16.xpose.msra.mxu0 0
        %2550 = vmatprep.subr.bf16.mxu0 0
        %2551 = vmatpush1.bf16.xpose.msra.mxu0 0
        %2552 = vmatprep.subr.bf16.mxu0 0
        %2553 = vmatpush1.bf16.xpose.msra.mxu0 0
        %2554 = vmatprep.subr.bf16.mxu0 0
        %2555 = vmatpush1.bf16.xpose.msra.mxu0 0
        %2556 = vmatprep.subr.bf16.mxu0 0
        %2557 = vmatpush1.bf16.xpose.msra.mxu0 0
        %2558 = vmatprep.subr.bf16.mxu0 0
        %2559 = vmatpush1.bf16.xpose.msra.mxu0 0
        %2560 = vmatprep.mubr.bf16.mxu0 0
        %2561 = vmatmul.mubr.bf16.gmra.mrb[0].mxu0 %v2523
        %v2562 = vpop.f32.mrb[0].mxu0
        %v2563 = vadd.f32 0.0, %v2562
        %v2564 = vpop.f32.mrb[0].mxu0
        %v2565 = vpop.f32.mrb[0].mxu0
        %v2566 = vpop.f32.mrb[0].mxu0
        %2567 = vdwg.mxu0
        %v2569 = vsel %vm1383, %v2140, 0
        %v2572 = vsel %vm1383, %v2306, 0
        %2574 = vmatprep.subr.bf16.mxu0 0
        %2575 = vmatpush1.bf16.xpose.msra.mxu0 %v2572
        %2576 = vmatprep.subr.bf16.mxu0 0
        %2577 = vmatpush1.bf16.xpose.msra.mxu0 0
        %2578 = vmatprep.subr.bf16.mxu0 0
        %2579 = vmatpush1.bf16.xpose.msra.mxu0 0
        %2580 = vmatprep.subr.bf16.mxu0 0
        %2581 = vmatpush1.bf16.xpose.msra.mxu0 0
        %2582 = vmatprep.subr.bf16.mxu0 0
        %2583 = vmatpush1.bf16.xpose.msra.mxu0 0
        %2584 = vmatprep.subr.bf16.mxu0 0
        %2585 = vmatpush1.bf16.xpose.msra.mxu0 0
        %2586 = vmatprep.subr.bf16.mxu0 0
        %2587 = vmatpush1.bf16.xpose.msra.mxu0 0
        %2588 = vmatprep.subr.bf16.mxu0 0
        %2589 = vmatpush1.bf16.xpose.msra.mxu0 0
        %2590 = vmatprep.subr.bf16.mxu0 0
        %2591 = vmatpush1.bf16.xpose.msra.mxu0 0
        %2592 = vmatprep.subr.bf16.mxu0 0
        %2593 = vmatpush1.bf16.xpose.msra.mxu0 0
        %2594 = vmatprep.subr.bf16.mxu0 0
        %2595 = vmatpush1.bf16.xpose.msra.mxu0 0
        %2596 = vmatprep.subr.bf16.mxu0 0
        %2597 = vmatpush1.bf16.xpose.msra.mxu0 0
        %2598 = vmatprep.subr.bf16.mxu0 0
        %2599 = vmatpush1.bf16.xpose.msra.mxu0 0
        %2600 = vmatprep.subr.bf16.mxu0 0
        %2601 = vmatpush1.bf16.xpose.msra.mxu0 0
        %2602 = vmatprep.subr.bf16.mxu0 0
        %2603 = vmatpush1.bf16.xpose.msra.mxu0 0
        %2604 = vmatprep.subr.bf16.mxu0 0
        %2605 = vmatpush1.bf16.xpose.msra.mxu0 0
        %2606 = vmatprep.mubr.bf16.mxu0 0
        %2607 = vmatmul.mubr.bf16.gmra.mrb[0].mxu0 %v2569
        %v2608 = vpop.f32.mrb[0].mxu0
        %v2609 = vadd.f32 0.0, %v2608
        %v2610 = vpop.f32.mrb[0].mxu0
        %v2611 = vpop.f32.mrb[0].mxu0
        %v2612 = vpop.f32.mrb[0].mxu0
        %2613 = vdwg.mxu0
        %v2615 = vsel %vm1383, %v2143, 0
        %v2618 = vsel %vm1383, %v2309, 0
        %2620 = vmatprep.subr.bf16.mxu0 0
        %2621 = vmatpush1.bf16.xpose.msra.mxu0 %v2618
        %2622 = vmatprep.subr.bf16.mxu0 0
        %2623 = vmatpush1.bf16.xpose.msra.mxu0 0
        %2624 = vmatprep.subr.bf16.mxu0 0
        %2625 = vmatpush1.bf16.xpose.msra.mxu0 0
        %2626 = vmatprep.subr.bf16.mxu0 0
        %2627 = vmatpush1.bf16.xpose.msra.mxu0 0
        %2628 = vmatprep.subr.bf16.mxu0 0
        %2629 = vmatpush1.bf16.xpose.msra.mxu0 0
        %2630 = vmatprep.subr.bf16.mxu0 0
        %2631 = vmatpush1.bf16.xpose.msra.mxu0 0
        %2632 = vmatprep.subr.bf16.mxu0 0
        %2633 = vmatpush1.bf16.xpose.msra.mxu0 0
        %2634 = vmatprep.subr.bf16.mxu0 0
        %2635 = vmatpush1.bf16.xpose.msra.mxu0 0
        %2636 = vmatprep.subr.bf16.mxu0 0
        %2637 = vmatpush1.bf16.xpose.msra.mxu0 0
        %2638 = vmatprep.subr.bf16.mxu0 0
        %2639 = vmatpush1.bf16.xpose.msra.mxu0 0
        %2640 = vmatprep.subr.bf16.mxu0 0
        %2641 = vmatpush1.bf16.xpose.msra.mxu0 0
        %2642 = vmatprep.subr.bf16.mxu0 0
        %2643 = vmatpush1.bf16.xpose.msra.mxu0 0
        %2644 = vmatprep.subr.bf16.mxu0 0
        %2645 = vmatpush1.bf16.xpose.msra.mxu0 0
        %2646 = vmatprep.subr.bf16.mxu0 0
        %2647 = vmatpush1.bf16.xpose.msra.mxu0 0
        %2648 = vmatprep.subr.bf16.mxu0 0
        %2649 = vmatpush1.bf16.xpose.msra.mxu0 0
        %2650 = vmatprep.subr.bf16.mxu0 0
        %2651 = vmatpush1.bf16.xpose.msra.mxu0 0
        %2652 = vmatprep.mubr.bf16.mxu0 0
        %2653 = vmatmul.mubr.bf16.gmra.mrb[0].mxu0 %v2615
        %v2654 = vpop.f32.mrb[0].mxu0
        %v2655 = vadd.f32 0.0, %v2654
        %v2656 = vpop.f32.mrb[0].mxu0
        %v2657 = vpop.f32.mrb[0].mxu0
        %v2658 = vpop.f32.mrb[0].mxu0
        %2659 = vdwg.mxu0
        %v2660 = vsel %vm1383, %v2517, -inf
        %2661 = vmax.xlane.f32.xlu0 %v2660
        %v2662 = vpop.xlane.xlu0 %2661
        %v2663 = vsel %vm1383, %v2563, -inf
        %2664 = vmax.xlane.f32.xlu0 %v2663
        %v2665 = vpop.xlane.xlu0 %2664
        %v2666 = vsel %vm1383, %v2609, -inf
        %2667 = vmax.xlane.f32.xlu0 %v2666
        %v2668 = vpop.xlane.xlu0 %2667
        %v2669 = vsel %vm1383, %v2655, -inf
        %2670 = vmax.xlane.f32.xlu0 %v2669
        %v2671 = vpop.xlane.xlu0 %2670
        %v2672 = vsub.f32 %v2517, %v2662
        %v2673 = vsub.f32 %v2563, %v2665
        %v2674 = vsub.f32 %v2609, %v2668
        %v2675 = vsub.f32 %v2655, %v2671
        %v2676 = vmul.f32 %v2672, 1.442695
        %v2677 = vpow.pop %v2676
        %v2678 = vmul.f32 %v2673, 1.442695
        %v2679 = vpow.pop %v2678
        %v2680 = vmul.f32 %v2674, 1.442695
        %v2681 = vpow.pop %v2680
        %v2682 = vmul.f32 %v2675, 1.442695
        %v2683 = vpow.pop %v2682
        %v2684 = vsel %vm1383, %v2677, 0.0
        %2685 = vadd.xlane.f32.xlu0 %v2684
        %v2686 = vpop.xlane.xlu0 %2685
        %v2687 = vsel %vm1383, %v2679, 0.0
        %2688 = vadd.xlane.f32.xlu0 %v2687
        %v2689 = vpop.xlane.xlu0 %2688
        %v2690 = vsel %vm1383, %v2681, 0.0
        %2691 = vadd.xlane.f32.xlu0 %v2690
        %v2692 = vpop.xlane.xlu0 %2691
        %v2693 = vsel %vm1383, %v2683, 0.0
        %2694 = vadd.xlane.f32.xlu0 %v2693
        %v2695 = vpop.xlane.xlu0 %2694
        %v2696 = vrcp.pop %v2686
        %v2697 = vrcp.pop %v2689
        %v2698 = vrcp.pop %v2692
        %v2699 = vrcp.pop %v2695
        %v2700 = vmul.f32 %v2677, %v2696
        %v2701 = vmul.f32 %v2679, %v2697
        %v2702 = vmul.f32 %v2681, %v2698
        %v2703 = vmul.f32 %v2683, %v2699
        %v2704 = vpack.c.bf16 %v2700, %v2700
        %v2705 = vpack.c.bf16 %v2701, %v2701
        %v2706 = vpack.c.bf16 %v2702, %v2702
        %v2707 = vpack.c.bf16 %v2703, %v2703
        %v2709 = vsel %vm1383, %v2704, 0
        %v2712 = vsel %vm1619, %v2466, 0
        %2714 = vmatprep.subr.bf16.mxu0 0
        %2715 = vmatpush1.bf16.msra.mxu0 %v2712
        %2716 = vmatprep.subr.bf16.mxu0 0
        %2717 = vmatpush1.bf16.msra.mxu0 0
        %2718 = vmatprep.subr.bf16.mxu0 0
        %2719 = vmatpush1.bf16.msra.mxu0 0
        %2720 = vmatprep.subr.bf16.mxu0 0
        %2721 = vmatpush1.bf16.msra.mxu0 0
        %2722 = vmatprep.subr.bf16.mxu0 0
        %2723 = vmatpush1.bf16.msra.mxu0 0
        %2724 = vmatprep.subr.bf16.mxu0 0
        %2725 = vmatpush1.bf16.msra.mxu0 0
        %2726 = vmatprep.subr.bf16.mxu0 0
        %2727 = vmatpush1.bf16.msra.mxu0 0
        %2728 = vmatprep.subr.bf16.mxu0 0
        %2729 = vmatpush1.bf16.msra.mxu0 0
        %2730 = vmatprep.subr.bf16.mxu0 0
        %2731 = vmatpush1.bf16.msra.mxu0 0
        %2732 = vmatprep.subr.bf16.mxu0 0
        %2733 = vmatpush1.bf16.msra.mxu0 0
        %2734 = vmatprep.subr.bf16.mxu0 0
        %2735 = vmatpush1.bf16.msra.mxu0 0
        %2736 = vmatprep.subr.bf16.mxu0 0
        %2737 = vmatpush1.bf16.msra.mxu0 0
        %2738 = vmatprep.subr.bf16.mxu0 0
        %2739 = vmatpush1.bf16.msra.mxu0 0
        %2740 = vmatprep.subr.bf16.mxu0 0
        %2741 = vmatpush1.bf16.msra.mxu0 0
        %2742 = vmatprep.subr.bf16.mxu0 0
        %2743 = vmatpush1.bf16.msra.mxu0 0
        %2744 = vmatprep.subr.bf16.mxu0 0
        %2745 = vmatpush1.bf16.msra.mxu0 0
        %2746 = vmatprep.mubr.bf16.mxu0 0
        %2747 = vmatmul.mubr.bf16.gmra.mrb[0].mxu0 %v2709
        %v2748 = vpop.f32.mrb[0].mxu0
        %v2749 = vadd.f32 0.0, %v2748
        %v2750 = vpop.f32.mrb[0].mxu0
        %v2751 = vpop.f32.mrb[0].mxu0
        %v2752 = vpop.f32.mrb[0].mxu0
        %2753 = vdwg.mxu0
        %v2755 = vsel %vm1383, %v2705, 0
        %v2758 = vsel %vm1619, %v2469, 0
        %2760 = vmatprep.subr.bf16.mxu0 0
        %2761 = vmatpush1.bf16.msra.mxu0 %v2758
        %2762 = vmatprep.subr.bf16.mxu0 0
        %2763 = vmatpush1.bf16.msra.mxu0 0
        %2764 = vmatprep.subr.bf16.mxu0 0
        %2765 = vmatpush1.bf16.msra.mxu0 0
        %2766 = vmatprep.subr.bf16.mxu0 0
        %2767 = vmatpush1.bf16.msra.mxu0 0
        %2768 = vmatprep.subr.bf16.mxu0 0
        %2769 = vmatpush1.bf16.msra.mxu0 0
        %2770 = vmatprep.subr.bf16.mxu0 0
        %2771 = vmatpush1.bf16.msra.mxu0 0
        %2772 = vmatprep.subr.bf16.mxu0 0
        %2773 = vmatpush1.bf16.msra.mxu0 0
        %2774 = vmatprep.subr.bf16.mxu0 0
        %2775 = vmatpush1.bf16.msra.mxu0 0
        %2776 = vmatprep.subr.bf16.mxu0 0
        %2777 = vmatpush1.bf16.msra.mxu0 0
        %2778 = vmatprep.subr.bf16.mxu0 0
        %2779 = vmatpush1.bf16.msra.mxu0 0
        %2780 = vmatprep.subr.bf16.mxu0 0
        %2781 = vmatpush1.bf16.msra.mxu0 0
        %2782 = vmatprep.subr.bf16.mxu0 0
        %2783 = vmatpush1.bf16.msra.mxu0 0
        %2784 = vmatprep.subr.bf16.mxu0 0
        %2785 = vmatpush1.bf16.msra.mxu0 0
        %2786 = vmatprep.subr.bf16.mxu0 0
        %2787 = vmatpush1.bf16.msra.mxu0 0
        %2788 = vmatprep.subr.bf16.mxu0 0
        %2789 = vmatpush1.bf16.msra.mxu0 0
        %2790 = vmatprep.subr.bf16.mxu0 0
        %2791 = vmatpush1.bf16.msra.mxu0 0
        %2792 = vmatprep.mubr.bf16.mxu0 0
        %2793 = vmatmul.mubr.bf16.gmra.mrb[0].mxu0 %v2755
        %v2794 = vpop.f32.mrb[0].mxu0
        %v2795 = vadd.f32 0.0, %v2794
        %v2796 = vpop.f32.mrb[0].mxu0
        %v2797 = vpop.f32.mrb[0].mxu0
        %v2798 = vpop.f32.mrb[0].mxu0
        %2799 = vdwg.mxu0
        %v2801 = vsel %vm1383, %v2706, 0
        %v2804 = vsel %vm1619, %v2472, 0
        %2806 = vmatprep.subr.bf16.mxu0 0
        %2807 = vmatpush1.bf16.msra.mxu0 %v2804
        %2808 = vmatprep.subr.bf16.mxu0 0
        %2809 = vmatpush1.bf16.msra.mxu0 0
        %2810 = vmatprep.subr.bf16.mxu0 0
        %2811 = vmatpush1.bf16.msra.mxu0 0
        %2812 = vmatprep.subr.bf16.mxu0 0
        %2813 = vmatpush1.bf16.msra.mxu0 0
        %2814 = vmatprep.subr.bf16.mxu0 0
        %2815 = vmatpush1.bf16.msra.mxu0 0
        %2816 = vmatprep.subr.bf16.mxu0 0
        %2817 = vmatpush1.bf16.msra.mxu0 0
        %2818 = vmatprep.subr.bf16.mxu0 0
        %2819 = vmatpush1.bf16.msra.mxu0 0
        %2820 = vmatprep.subr.bf16.mxu0 0
        %2821 = vmatpush1.bf16.msra.mxu0 0
        %2822 = vmatprep.subr.bf16.mxu0 0
        %2823 = vmatpush1.bf16.msra.mxu0 0
        %2824 = vmatprep.subr.bf16.mxu0 0
        %2825 = vmatpush1.bf16.msra.mxu0 0
        %2826 = vmatprep.subr.bf16.mxu0 0
        %2827 = vmatpush1.bf16.msra.mxu0 0
        %2828 = vmatprep.subr.bf16.mxu0 0
        %2829 = vmatpush1.bf16.msra.mxu0 0
        %2830 = vmatprep.subr.bf16.mxu0 0
        %2831 = vmatpush1.bf16.msra.mxu0 0
        %2832 = vmatprep.subr.bf16.mxu0 0
        %2833 = vmatpush1.bf16.msra.mxu0 0
        %2834 = vmatprep.subr.bf16.mxu0 0
        %2835 = vmatpush1.bf16.msra.mxu0 0
        %2836 = vmatprep.subr.bf16.mxu0 0
        %2837 = vmatpush1.bf16.msra.mxu0 0
        %2838 = vmatprep.mubr.bf16.mxu0 0
        %2839 = vmatmul.mubr.bf16.gmra.mrb[0].mxu0 %v2801
        %v2840 = vpop.f32.mrb[0].mxu0
        %v2841 = vadd.f32 0.0, %v2840
        %v2842 = vpop.f32.mrb[0].mxu0
        %v2843 = vpop.f32.mrb[0].mxu0
        %v2844 = vpop.f32.mrb[0].mxu0
        %2845 = vdwg.mxu0
        %v2847 = vsel %vm1383, %v2707, 0
        %v2850 = vsel %vm1619, %v2475, 0
        %2852 = vmatprep.subr.bf16.mxu0 0
        %2853 = vmatpush1.bf16.msra.mxu0 %v2850
        %2854 = vmatprep.subr.bf16.mxu0 0
        %2855 = vmatpush1.bf16.msra.mxu0 0
        %2856 = vmatprep.subr.bf16.mxu0 0
        %2857 = vmatpush1.bf16.msra.mxu0 0
        %2858 = vmatprep.subr.bf16.mxu0 0
        %2859 = vmatpush1.bf16.msra.mxu0 0
        %2860 = vmatprep.subr.bf16.mxu0 0
        %2861 = vmatpush1.bf16.msra.mxu0 0
        %2862 = vmatprep.subr.bf16.mxu0 0
        %2863 = vmatpush1.bf16.msra.mxu0 0
        %2864 = vmatprep.subr.bf16.mxu0 0
        %2865 = vmatpush1.bf16.msra.mxu0 0
        %2866 = vmatprep.subr.bf16.mxu0 0
        %2867 = vmatpush1.bf16.msra.mxu0 0
        %2868 = vmatprep.subr.bf16.mxu0 0
        %2869 = vmatpush1.bf16.msra.mxu0 0
        %2870 = vmatprep.subr.bf16.mxu0 0
        %2871 = vmatpush1.bf16.msra.mxu0 0
        %2872 = vmatprep.subr.bf16.mxu0 0
        %2873 = vmatpush1.bf16.msra.mxu0 0
        %2874 = vmatprep.subr.bf16.mxu0 0
        %2875 = vmatpush1.bf16.msra.mxu0 0
        %2876 = vmatprep.subr.bf16.mxu0 0
        %2877 = vmatpush1.bf16.msra.mxu0 0
        %2878 = vmatprep.subr.bf16.mxu0 0
        %2879 = vmatpush1.bf16.msra.mxu0 0
        %2880 = vmatprep.subr.bf16.mxu0 0
        %2881 = vmatpush1.bf16.msra.mxu0 0
        %2882 = vmatprep.subr.bf16.mxu0 0
        %2883 = vmatpush1.bf16.msra.mxu0 0
        %2884 = vmatprep.mubr.bf16.mxu0 0
        %2885 = vmatmul.mubr.bf16.gmra.mrb[0].mxu0 %v2847
        %v2886 = vpop.f32.mrb[0].mxu0
        %v2887 = vadd.f32 0.0, %v2886
        %v2888 = vpop.f32.mrb[0].mxu0
        %v2889 = vpop.f32.mrb[0].mxu0
        %v2890 = vpop.f32.mrb[0].mxu0
        %2891 = vdwg.mxu0
        %v2892 = vpack.c.bf16 %v2749, %v2749
        %v2894 = vunpack.c.l.s4 1983009808
        %v2895 = vunpack.c.0.s8 %v2894
        %v2896 = vlaneseq
        %v2897 = vshrl.u32 %v2896, 7
        %v2898 = vsub.s32 %v2895, %v2897
        %v2899 = vrot.slane %v2892, %v2898
        %v2900 = vpack.c.bf16 %v2841, %v2841
        %v2902 = vunpack.c.l.s4 1983009808
        %v2903 = vunpack.c.0.s8 %v2902
        %v2904 = vlaneseq
        %v2905 = vshrl.u32 %v2904, 7
        %v2906 = vsub.s32 %v2903, %v2905
        %v2907 = vrot.slane %v2900, %v2906
        %v2908 = vcombine.low %v2899, %v2907
        %v2909 = vcombine.high %v2899, %v2907
        %v2911 = vunpack.c.l.s4 1934713408
        %v2912 = vunpack.c.0.s8 %v2911
        %v2913 = vlaneseq
        %v2914 = vshrl.u32 %v2913, 7
        %v2915 = vsub.s32 %v2912, %v2914
        %v2916 = vrot.slane %v2908, %v2915
        %v2918 = vunpack.c.l.s4 1934713408
        %v2919 = vunpack.c.0.s8 %v2918
        %v2920 = vlaneseq
        %v2921 = vshrl.u32 %v2920, 7
        %v2922 = vsub.s32 %v2919, %v2921
        %v2923 = vrot.slane %v2909, %v2922
        %v2924 = vcombine.high %v2916, 0
        %v2925 = vcombine.high %v2923, 0
        %v2926 = vpack.c.bf16 %v2795, %v2795
        %v2928 = vunpack.c.l.s4 1983009808
        %v2929 = vunpack.c.0.s8 %v2928
        %v2930 = vlaneseq
        %v2931 = vshrl.u32 %v2930, 7
        %v2932 = vsub.s32 %v2929, %v2931
        %v2933 = vrot.slane %v2926, %v2932
        %v2934 = vpack.c.bf16 %v2887, %v2887
        %v2936 = vunpack.c.l.s4 1983009808
        %v2937 = vunpack.c.0.s8 %v2936
        %v2938 = vlaneseq
        %v2939 = vshrl.u32 %v2938, 7
        %v2940 = vsub.s32 %v2937, %v2939
        %v2941 = vrot.slane %v2934, %v2940
        %v2942 = vcombine.low %v2933, %v2941
        %v2943 = vcombine.high %v2933, %v2941
        %v2945 = vunpack.c.l.s4 1934713408
        %v2946 = vunpack.c.0.s8 %v2945
        %v2947 = vlaneseq
        %v2948 = vshrl.u32 %v2947, 7
        %v2949 = vsub.s32 %v2946, %v2948
        %v2950 = vrot.slane %v2942, %v2949
        %v2952 = vunpack.c.l.s4 1934713408
        %v2953 = vunpack.c.0.s8 %v2952
        %v2954 = vlaneseq
        %v2955 = vshrl.u32 %v2954, 7
        %v2956 = vsub.s32 %v2953, %v2955
        %v2957 = vrot.slane %v2943, %v2956
        %v2958 = vcombine.high %v2950, 0
        %v2959 = vcombine.high %v2957, 0
        %v2962 = vpack.i.b16 %v2950, %v2916
        %v2964 = vshrl.u32 %v2916, 16
        %v2965 = vshrl.u32 %v2950, 16
        %v2966 = vpack.i.b16 %v2965, %v2964
        %v2970 = vpack.i.b16 %v2958, %v2924
        %v2972 = vshrl.u32 %v2924, 16
        %v2973 = vshrl.u32 %v2958, 16
        %v2974 = vpack.i.b16 %v2973, %v2972
        %v2978 = vpack.i.b16 %v2957, %v2923
        %v2980 = vshrl.u32 %v2923, 16
        %v2981 = vshrl.u32 %v2957, 16
        %v2982 = vpack.i.b16 %v2981, %v2980
        %v2986 = vpack.i.b16 %v2959, %v2925
        %v2988 = vshrl.u32 %v2925, 16
        %v2989 = vshrl.u32 %v2959, 16
        %v2990 = vpack.i.b16 %v2989, %v2988
        %v2992 = vcombine.low %v2962, %v2978
        %v2994 = vunpack.c.l.s4 1983009808
        %v2995 = vunpack.c.0.s8 %v2994
        %v2996 = vlaneseq
        %v2997 = vshrl.u32 %v2996, 7
        %v2998 = vsub.s32 %v2995, %v2997
        %v2999 = vrot.slane %v2992, %v2998
        %v3000 = vcombine.low %v2970, %v2986
        %v3002 = vunpack.c.l.s4 1983009808
        %v3003 = vunpack.c.0.s8 %v3002
        %v3004 = vlaneseq
        %v3005 = vshrl.u32 %v3004, 7
        %v3006 = vsub.s32 %v3003, %v3005
        %v3007 = vrot.slane %v3000, %v3006
        %v3008 = vcombine.low %v2999, %v3007
        %v3010 = vunpack.c.l.s4 1934713408
        %v3011 = vunpack.c.0.s8 %v3010
        %v3012 = vlaneseq
        %v3013 = vshrl.u32 %v3012, 7
        %v3014 = vsub.s32 %v3011, %v3013
        %v3015 = vrot.slane %v3008, %v3014
        %v3016 = vcombine.high %v3015, 0
        %v3017 = vcombine.low %v2966, %v2982
        %v3019 = vunpack.c.l.s4 1983009808
        %v3020 = vunpack.c.0.s8 %v3019
        %v3021 = vlaneseq
        %v3022 = vshrl.u32 %v3021, 7
        %v3023 = vsub.s32 %v3020, %v3022
        %v3024 = vrot.slane %v3017, %v3023
        %v3025 = vcombine.low %v2974, %v2990
        %v3027 = vunpack.c.l.s4 1983009808
        %v3028 = vunpack.c.0.s8 %v3027
        %v3029 = vlaneseq
        %v3030 = vshrl.u32 %v3029, 7
        %v3031 = vsub.s32 %v3028, %v3030
        %v3032 = vrot.slane %v3025, %v3031
        %v3033 = vcombine.low %v3024, %v3032
        %v3035 = vunpack.c.l.s4 1934713408
        %v3036 = vunpack.c.0.s8 %v3035
        %v3037 = vlaneseq
        %v3038 = vshrl.u32 %v3037, 7
        %v3039 = vsub.s32 %v3036, %v3038
        %v3040 = vrot.slane %v3033, %v3039
        %v3041 = vcombine.high %v3040, 0
        %v3044 = vpack.i.b16 %v3040, %v3015
        %v3045 = vshrl.u32 %v3015, 16
        %v3046 = vshrl.u32 %v3040, 16
        %v3047 = vpack.i.b16 %v3046, %v3045
        %v3050 = vpack.i.b16 %v3041, %v3016
        %v3051 = vshrl.u32 %v3016, 16
        %v3052 = vshrl.u32 %v3041, 16
        %v3053 = vpack.i.b16 %v3052, %v3051
        %3054 = vrot.lane.b32.xlu0 %v3047, 8
        %v3055 = vpop.permute.xlu0 %3054
        %3056 = vrot.lane.b32.xlu0 %v3050, 16
        %v3057 = vpop.permute.xlu0 %3056
        %3058 = vrot.lane.b32.xlu0 %v3053, 24
        %v3059 = vpop.permute.xlu0 %3058
        %v3062 = vsel %vm1383, %v3044, %v3055
        %v3064 = vsel %vm1972, %v3062, %v3057
        %v3066 = vsel %vm1975, %v3064, %v3059
        %v3068 = vrot.slane %v3066, 4
        %v3070 = vsel %vm1619, %v1977, %v3068
        %v3071 = vld [vmem:[%s608] sm:$0xf]
        %v3072 = vld [vmem:[%s608 + $0x4] sm:$0xf]
        %v3073 = vld [vmem:[%s608 + $0x8] sm:$0xf]
        %v3074 = vld [vmem:[%s608 + $0xc] sm:$0xf]
        %v3075 = vlaneseq
        %v3076 = vshrl.u32 %v3075, 7
        %v3077 = vsub.s32 3, %v3076
        %v3078 = vrot.slane %v682, %v3077
        %v3083 = vunpack.c.l.b16 %v3071
        %v3084 = vunpack.c.l.b16 %v3072
        %v3085 = vunpack.c.l.b16 %v3073
        %v3086 = vunpack.c.l.b16 %v3074
        %v3087 = vpack.c.b16 %v3084, %v3083
        %v3088 = vpack.c.b16 %v3086, %v3085
        %v3091 = vsel %vm707, %v3070, 0
        %3093 = vmatprep.subr.bf16.mxu0 0
        %3094 = vmatpush1.bf16.msra.mxu0 %v3087
        %3095 = vmatprep.subr.bf16.mxu0 0
        %3096 = vmatpush1.bf16.msra.mxu0 %v3088
        %3097 = vmatprep.subr.bf16.mxu0 0
        %3098 = vmatpush1.bf16.msra.mxu0 0
        %3099 = vmatprep.subr.bf16.mxu0 0
        %3100 = vmatpush1.bf16.msra.mxu0 0
        %3101 = vmatprep.subr.bf16.mxu0 0
        %3102 = vmatpush1.bf16.msra.mxu0 0
        %3103 = vmatprep.subr.bf16.mxu0 0
        %3104 = vmatpush1.bf16.msra.mxu0 0
        %3105 = vmatprep.subr.bf16.mxu0 0
        %3106 = vmatpush1.bf16.msra.mxu0 0
        %3107 = vmatprep.subr.bf16.mxu0 0
        %3108 = vmatpush1.bf16.msra.mxu0 0
        %3109 = vmatprep.subr.bf16.mxu0 0
        %3110 = vmatpush1.bf16.msra.mxu0 0
        %3111 = vmatprep.subr.bf16.mxu0 0
        %3112 = vmatpush1.bf16.msra.mxu0 0
        %3113 = vmatprep.subr.bf16.mxu0 0
        %3114 = vmatpush1.bf16.msra.mxu0 0
        %3115 = vmatprep.subr.bf16.mxu0 0
        %3116 = vmatpush1.bf16.msra.mxu0 0
        %3117 = vmatprep.subr.bf16.mxu0 0
        %3118 = vmatpush1.bf16.msra.mxu0 0
        %3119 = vmatprep.subr.bf16.mxu0 0
        %3120 = vmatpush1.bf16.msra.mxu0 0
        %3121 = vmatprep.subr.bf16.mxu0 0
        %3122 = vmatpush1.bf16.msra.mxu0 0
        %3123 = vmatprep.subr.bf16.mxu0 0
        %3124 = vmatpush1.bf16.msra.mxu0 0
        %3125 = vmatprep.mubr.bf16.mxu0 0
        %3126 = vmatmul.mubr.bf16.gmra.mrb[0].mxu0 %v3091
        %v3127 = vpop.f32.mrb[0].mxu0
        %v3128 = vadd.f32 %v3078, %v3127
        %v3129 = vpop.f32.mrb[0].mxu0
        %v3130 = vpop.f32.mrb[0].mxu0
        %v3131 = vadd.f32 %v3078, %v3130
        %v3132 = vpop.f32.mrb[0].mxu0
        %3133 = vdwg.mxu0
        %v3134 = vadd.f32 %v684, %v3128
        %v3135 = vadd.f32 %v685, %v3131
        %v3136 = vsel %vm707, %v3134, 0.0
        %3137 = vadd.xlane.f32.xlu0 %v3136
        %v3138 = vpop.xlane.xlu0 %3137
        %v3139 = vsel %vm707, %v3135, 0.0
        %3140 = vadd.xlane.f32.xlu0 %v3139
        %v3141 = vpop.xlane.xlu0 %3140
        %v3142 = vrcp.pop 32.0
        %v3143 = vmul.f32 %v3138, %v3142
        %v3144 = vmul.f32 %v3141, %v3142
        %v3145 = vsub.f32 %v3134, %v3143
        %v3146 = vsub.f32 %v3135, %v3144
        %v3147 = vmul.f32 %v3145, %v3145
        %v3148 = vmul.f32 %v3146, %v3146
        %v3149 = vsel %vm707, %v3147, 0.0
        %3150 = vadd.xlane.f32.xlu0 %v3149
        %v3151 = vpop.xlane.xlu0 %3150
        %v3152 = vsel %vm707, %v3148, 0.0
        %3153 = vadd.xlane.f32.xlu0 %v3152
        %v3154 = vpop.xlane.xlu0 %3153
        %v3155 = vmul.f32 %v3151, %v3142
        %v3156 = vmul.f32 %v3154, %v3142
        %v3157 = vadd.f32 %v3155, 1e-12
        %v3158 = vadd.f32 %v3156, 1e-12
        %v3159 = vrsqrt.pop %v3157
        %v3160 = vrsqrt.pop %v3158
        %v3161 = vmul.f32 %v3145, %v3159
        %v3162 = vmul.f32 %v3146, %v3160
        %v3163 = vlaneseq
        %v3164 = vshrl.u32 %v3163, 7
        %v3165 = vsub.s32 4, %v3164
        %v3166 = vrot.slane %v682, %v3165
        %v3167 = vmul.f32 %v3161, %v3166
        %v3168 = vmul.f32 %v3162, %v3166
        %v3169 = vlaneseq
        %v3170 = vshrl.u32 %v3169, 7
        %v3171 = vsub.s32 5, %v3170
        %v3172 = vrot.slane %v682, %v3171
        %v3173 = vadd.f32 %v3167, %v3172
        %v3174 = vadd.f32 %v3168, %v3172
        %v3175 = vpack.c.bf16 %v3174, %v3173
        %v3176 = vld [vmem:[%s613] sm:$0xf]
        %v3177 = vld [vmem:[%s613 + $0x4] sm:$0xf]
        %v3178 = vld [vmem:[%s613 + $0x8] sm:$0xf]
        %v3179 = vld [vmem:[%s613 + $0xc] sm:$0xf]
        %v3180 = vld [vmem:[%s626] sm:$0x1]
        %v3182 = vlaneseq
        %v3183 = vshrl.u32 %v3182, 7
        %v3184 = vsub.s32 0, %v3183
        %v3185 = vrot.slane %v3180, %v3184
        %v3191 = vunpack.c.l.b16 %v3176
        %v3192 = vunpack.c.l.b16 %v3177
        %v3193 = vunpack.c.l.b16 %v3178
        %v3194 = vunpack.c.l.b16 %v3179
        %v3195 = vpack.c.b16 %v3192, %v3191
        %v3196 = vpack.c.b16 %v3194, %v3193
        %v3200 = vsel %vm707, %v3175, 0
        %3202 = vmatprep.subr.bf16.mxu0 0
        %3203 = vmatpush1.bf16.msra.mxu0 %v3195
        %3204 = vmatprep.subr.bf16.mxu0 0
        %3205 = vmatpush1.bf16.msra.mxu0 %v3196
        %3206 = vmatprep.subr.bf16.mxu0 0
        %3207 = vmatpush1.bf16.msra.mxu0 0
        %3208 = vmatprep.subr.bf16.mxu0 0
        %3209 = vmatpush1.bf16.msra.mxu0 0
        %3210 = vmatprep.subr.bf16.mxu0 0
        %3211 = vmatpush1.bf16.msra.mxu0 0
        %3212 = vmatprep.subr.bf16.mxu0 0
        %3213 = vmatpush1.bf16.msra.mxu0 0
        %3214 = vmatprep.subr.bf16.mxu0 0
        %3215 = vmatpush1.bf16.msra.mxu0 0
        %3216 = vmatprep.subr.bf16.mxu0 0
        %3217 = vmatpush1.bf16.msra.mxu0 0
        %3218 = vmatprep.subr.bf16.mxu0 0
        %3219 = vmatpush1.bf16.msra.mxu0 0
        %3220 = vmatprep.subr.bf16.mxu0 0
        %3221 = vmatpush1.bf16.msra.mxu0 0
        %3222 = vmatprep.subr.bf16.mxu0 0
        %3223 = vmatpush1.bf16.msra.mxu0 0
        %3224 = vmatprep.subr.bf16.mxu0 0
        %3225 = vmatpush1.bf16.msra.mxu0 0
        %3226 = vmatprep.subr.bf16.mxu0 0
        %3227 = vmatpush1.bf16.msra.mxu0 0
        %3228 = vmatprep.subr.bf16.mxu0 0
        %3229 = vmatpush1.bf16.msra.mxu0 0
        %3230 = vmatprep.subr.bf16.mxu0 0
        %3231 = vmatpush1.bf16.msra.mxu0 0
        %3232 = vmatprep.subr.bf16.mxu0 0
        %3233 = vmatpush1.bf16.msra.mxu0 0
        %3234 = vmatprep.mubr.bf16.mxu0 0
        %3235 = vmatmul.mubr.bf16.gmra.mrb[0].mxu0 %v3200
        %v3236 = vpop.f32.mrb[0].mxu0
        %v3237 = vadd.f32 %v3185, %v3236
        %v3238 = vpop.f32.mrb[0].mxu0
        %v3239 = vpop.f32.mrb[0].mxu0
        %v3240 = vadd.f32 %v3185, %v3239
        %v3241 = vpop.f32.mrb[0].mxu0
        %3242 = vdwg.mxu0
        %v3243 = vmul.f32 %v3237, %v3237
        %v3244 = vmul.f32 %v3240, %v3240
        %v3245 = vmul.f32 %v3237, %v3243
        %v3246 = vmul.f32 %v3240, %v3244
        %v3247 = vmul.f32 %v3245, 0.044715
        %v3248 = vmul.f32 %v3246, 0.044715
        %v3249 = vadd.f32 %v3237, %v3247
        %v3250 = vadd.f32 %v3240, %v3248
        %v3251 = vmul.f32 %v3249, 0.7978846
        %v3252 = vmul.f32 %v3250, 0.7978846
        %v3253 = vtanh.pop %v3251
        %v3254 = vtanh.pop %v3252
        %v3255 = vadd.f32 %v3253, 1.0
        %v3256 = vadd.f32 %v3254, 1.0
        %v3257 = vmul.f32 %v3255, 0.5
        %v3258 = vmul.f32 %v3256, 0.5
        %v3259 = vmul.f32 %v3237, %v3257
        %v3260 = vmul.f32 %v3240, %v3258
        %v3261 = vpack.c.bf16 %v3260, %v3259
        %v3262 = vld [vmem:[%s618] sm:$0xf]
        %v3263 = vld [vmem:[%s618 + $0x4] sm:$0xf]
        %v3264 = vld [vmem:[%s618 + $0x8] sm:$0xf]
        %v3265 = vld [vmem:[%s618 + $0xc] sm:$0xf]
        %v3266 = vld [vmem:[%s618 + $0x10] sm:$0xf]
        %v3267 = vld [vmem:[%s618 + $0x14] sm:$0xf]
        %v3268 = vld [vmem:[%s618 + $0x18] sm:$0xf]
        %v3269 = vld [vmem:[%s618 + $0x1c] sm:$0xf]
        %v3270 = vlaneseq
        %v3271 = vshrl.u32 %v3270, 7
        %v3272 = vsub.s32 6, %v3271
        %v3273 = vrot.slane %v682, %v3272
        %v3282 = vunpack.c.l.b16 %v3262
        %v3283 = vunpack.c.l.b16 %v3263
        %v3284 = vunpack.c.l.b16 %v3264
        %v3285 = vunpack.c.l.b16 %v3265
        %v3286 = vunpack.c.l.b16 %v3266
        %v3287 = vunpack.c.l.b16 %v3267
        %v3288 = vunpack.c.l.b16 %v3268
        %v3289 = vunpack.c.l.b16 %v3269
        %v3290 = vpack.c.b16 %v3283, %v3282
        %v3291 = vpack.c.b16 %v3285, %v3284
        %v3292 = vpack.c.b16 %v3287, %v3286
        %v3293 = vpack.c.b16 %v3289, %v3288
        %vm3298 = vcmask 523264
        %v3300 = vsel %vm3298, %v3261, 0
        %3302 = vmatprep.subr.bf16.mxu0 0
        %3303 = vmatpush1.bf16.msra.mxu0 %v3290
        %3304 = vmatprep.subr.bf16.mxu0 0
        %3305 = vmatpush1.bf16.msra.mxu0 %v3291
        %3306 = vmatprep.subr.bf16.mxu0 0
        %3307 = vmatpush1.bf16.msra.mxu0 %v3292
        %3308 = vmatprep.subr.bf16.mxu0 0
        %3309 = vmatpush1.bf16.msra.mxu0 %v3293
        %3310 = vmatprep.subr.bf16.mxu0 0
        %3311 = vmatpush1.bf16.msra.mxu0 0
        %3312 = vmatprep.subr.bf16.mxu0 0
        %3313 = vmatpush1.bf16.msra.mxu0 0
        %3314 = vmatprep.subr.bf16.mxu0 0
        %3315 = vmatpush1.bf16.msra.mxu0 0
        %3316 = vmatprep.subr.bf16.mxu0 0
        %3317 = vmatpush1.bf16.msra.mxu0 0
        %3318 = vmatprep.subr.bf16.mxu0 0
        %3319 = vmatpush1.bf16.msra.mxu0 0
        %3320 = vmatprep.subr.bf16.mxu0 0
        %3321 = vmatpush1.bf16.msra.mxu0 0
        %3322 = vmatprep.subr.bf16.mxu0 0
        %3323 = vmatpush1.bf16.msra.mxu0 0
        %3324 = vmatprep.subr.bf16.mxu0 0
        %3325 = vmatpush1.bf16.msra.mxu0 0
        %3326 = vmatprep.subr.bf16.mxu0 0
        %3327 = vmatpush1.bf16.msra.mxu0 0
        %3328 = vmatprep.subr.bf16.mxu0 0
        %3329 = vmatpush1.bf16.msra.mxu0 0
        %3330 = vmatprep.subr.bf16.mxu0 0
        %3331 = vmatpush1.bf16.msra.mxu0 0
        %3332 = vmatprep.subr.bf16.mxu0 0
        %3333 = vmatpush1.bf16.msra.mxu0 0
        %3334 = vmatprep.mubr.bf16.mxu0 0
        %3335 = vmatmul.mubr.bf16.gmra.mrb[0].mxu0 %v3300
        %v3336 = vpop.f32.mrb[0].mxu0
        %v3337 = vadd.f32 %v3273, %v3336
        %v3338 = vpop.f32.mrb[0].mxu0
        %v3339 = vpop.f32.mrb[0].mxu0
        %v3340 = vadd.f32 %v3273, %v3339
        %v3341 = vpop.f32.mrb[0].mxu0
        %3342 = vdwg.mxu0
        %v3343 = vadd.f32 %v3173, %v3337
        %v3344 = vadd.f32 %v3174, %v3340
        %v3345 = vsel %vm707, %v3343, 0.0
        %3346 = vadd.xlane.f32.xlu0 %v3345
        %v3347 = vpop.xlane.xlu0 %3346
        %v3348 = vsel %vm707, %v3344, 0.0
        %3349 = vadd.xlane.f32.xlu0 %v3348
        %v3350 = vpop.xlane.xlu0 %3349
        %v3351 = vmul.f32 %v3347, %v3142
        %v3352 = vmul.f32 %v3350, %v3142
        %v3353 = vsub.f32 %v3343, %v3351
        %v3354 = vsub.f32 %v3344, %v3352
        %v3355 = vmul.f32 %v3353, %v3353
        %v3356 = vmul.f32 %v3354, %v3354
        %v3357 = vsel %vm707, %v3355, 0.0
        %3358 = vadd.xlane.f32.xlu0 %v3357
        %v3359 = vpop.xlane.xlu0 %3358
        %v3360 = vsel %vm707, %v3356, 0.0
        %3361 = vadd.xlane.f32.xlu0 %v3360
        %v3362 = vpop.xlane.xlu0 %3361
        %v3363 = vmul.f32 %v3359, %v3142
        %v3364 = vmul.f32 %v3362, %v3142
        %v3365 = vadd.f32 %v3363, 1e-12
        %v3366 = vadd.f32 %v3364, 1e-12
        %v3367 = vrsqrt.pop %v3365
        %v3368 = vrsqrt.pop %v3366
        %v3369 = vmul.f32 %v3353, %v3367
        %v3370 = vmul.f32 %v3354, %v3368
        %v3371 = vlaneseq
        %v3372 = vshrl.u32 %v3371, 7
        %v3373 = vsub.s32 7, %v3372
        %v3374 = vrot.slane %v682, %v3373
        %v3375 = vmul.f32 %v3369, %v3374
        %v3376 = vmul.f32 %v3370, %v3374
        %v3377 = vlaneseq
        %v3378 = vshrl.u32 %v3377, 7
        %v3379 = vsub.s32 0, %v3378
        %v3380 = vrot.slane %v683, %v3379
        %v3381 = vadd.f32 %v3375, %v3380
        %v3382 = vadd.f32 %v3376, %v3380
        %3383 = vst.msk [vmem:[#allocation2] sm:$0xff] %vm707, %v3381
        %3384 = vst.msk [vmem:[#allocation2 + $0x8] sm:$0xff] %vm707, %v3382
        %p3385 = scmp.eq.s32.totalorder %s32, 1
        // Predicated region
        $region89: #{tpu_custom_call.1} parent=71 // pred_check
          %p3386 = pneg %p3385
        $region90: #{tpu_custom_call.1} parent=71 // pred_check_branch
          %3388 = sbr.rel (%p3386) target = $region92
        $region91: #{tpu_custom_call.1} parent=71 // pred_region
          %v3390 = vrot.slane %v3382, 7
          %vm3392 = vcmask 1040384
          %v3393 = vsel %vm3392, %v3381, %v3390
          %v3394 = vld [vmem:[%s11] sm:$0xff]
          %v3395 = vld [vmem:[%s11 + $0x8] sm:$0xff]
          %v3396 = vld [vmem:[%s11 + $0x10] sm:$0xff]
          %v3397 = vld [vmem:[%s11 + $0x18] sm:$0xff]
          %v3398 = vld [vmem:[%s12] sm:$0x1]
          %v3400 = vlaneseq
          %v3401 = vshrl.u32 %v3400, 7
          %v3402 = vsub.s32 0, %v3401
          %v3403 = vrot.slane %v3398, %v3402
          %v3406 = vsel %vm707, %v3393, 0
          %3408 = vmatprep.subr.mxu0 0.0
          %3409 = vmatpush1.msra.mxu0 %v3394
          %3410 = vmatprep.subr.mxu0 0.0
          %3411 = vmatpush1.msra.mxu0 %v3395
          %3412 = vmatprep.subr.mxu0 0.0
          %3413 = vmatpush1.msra.mxu0 %v3396
          %3414 = vmatprep.subr.mxu0 0.0
          %3415 = vmatpush1.msra.mxu0 %v3397
          %3416 = vmatprep.subr.mxu0 0.0
          %3417 = vmatpush1.msra.mxu0 0.0
          %3418 = vmatprep.subr.mxu0 0.0
          %3419 = vmatpush1.msra.mxu0 0.0
          %3420 = vmatprep.subr.mxu0 0.0
          %3421 = vmatpush1.msra.mxu0 0.0
          %3422 = vmatprep.subr.mxu0 0.0
          %3423 = vmatpush1.msra.mxu0 0.0
          %3424 = vmatprep.subr.mxu0 0.0
          %3425 = vmatpush1.msra.mxu0 0.0
          %3426 = vmatprep.subr.mxu0 0.0
          %3427 = vmatpush1.msra.mxu0 0.0
          %3428 = vmatprep.subr.mxu0 0.0
          %3429 = vmatpush1.msra.mxu0 0.0
          %3430 = vmatprep.subr.mxu0 0.0
          %3431 = vmatpush1.msra.mxu0 0.0
          %3432 = vmatprep.subr.mxu0 0.0
          %3433 = vmatpush1.msra.mxu0 0.0
          %3434 = vmatprep.subr.mxu0 0.0
          %3435 = vmatpush1.msra.mxu0 0.0
          %3436 = vmatprep.subr.mxu0 0.0
          %3437 = vmatpush1.msra.mxu0 0.0
          %3438 = vmatprep.subr.mxu0 0.0
          %3439 = vmatpush1.msra.mxu0 0.0
          %3440 = vmatprep.subr.mxu0 0.0
          %3441 = vmatpush1.msra.mxu0 0.0
          %3442 = vmatprep.subr.mxu0 0.0
          %3443 = vmatpush1.msra.mxu0 0.0
          %3444 = vmatprep.subr.mxu0 0.0
          %3445 = vmatpush1.msra.mxu0 0.0
          %3446 = vmatprep.subr.mxu0 0.0
          %3447 = vmatpush1.msra.mxu0 0.0
          %3448 = vmatprep.subr.mxu0 0.0
          %3449 = vmatpush1.msra.mxu0 0.0
          %3450 = vmatprep.subr.mxu0 0.0
          %3451 = vmatpush1.msra.mxu0 0.0
          %3452 = vmatprep.subr.mxu0 0.0
          %3453 = vmatpush1.msra.mxu0 0.0
          %3454 = vmatprep.subr.mxu0 0.0
          %3455 = vmatpush1.msra.mxu0 0.0
          %3456 = vmatprep.subr.mxu0 0.0
          %3457 = vmatpush1.msra.mxu0 0.0
          %3458 = vmatprep.subr.mxu0 0.0
          %3459 = vmatpush1.msra.mxu0 0.0
          %3460 = vmatprep.subr.mxu0 0.0
          %3461 = vmatpush1.msra.mxu0 0.0
          %3462 = vmatprep.subr.mxu0 0.0
          %3463 = vmatpush1.msra.mxu0 0.0
          %3464 = vmatprep.subr.mxu0 0.0
          %3465 = vmatpush1.msra.mxu0 0.0
          %3466 = vmatprep.subr.mxu0 0.0
          %3467 = vmatpush1.msra.mxu0 0.0
          %3468 = vmatprep.subr.mxu0 0.0
          %3469 = vmatpush1.msra.mxu0 0.0
          %3470 = vmatprep.subr.mxu0 0.0
          %3471 = vmatpush1.msra.mxu0 0.0
          %3472 = vmatprep.mubr.f32.mxu0 0.0
          %3473 = vmatmul.mubr.f32.gmra.mrb[0].mxu0 %v3406
          %v3474 = vpop.f32.mrb[0].mxu0
          %v3475 = vadd.f32 %v3403, %v3474
          %v3476 = vpop.f32.mrb[0].mxu0
          %3477 = vdwg.mxu0
          %vm3478 = vcmask 9216
          %3479 = vst.msk [vmem:[#allocation9] sm:$0x3] %vm3478, %v3475
        $region92: #{tpu_custom_call.1} parent=71 // pred_fallthru
          _
        // Predicated region
        $region93: #{tpu_custom_call.1} parent=71 // pred_check
          %p3480 = pneg %p375
        $region94: #{tpu_custom_call.1} parent=71 // pred_check_branch
          %3482 = sbr.rel (%p3480) target = $region96
        $region95: #{tpu_custom_call.1} parent=71 // pred_region
          %s3484 = ssub.s32 32, 32
          %3485 = vsyncadd [#allocation5], %s3484
          %s3486 = smul.addr %s31, 32
          %s3487 = scalar_lea.hbm %s13, %s3486
          %s3489 = sshll.u32 [#allocation9], 4
          %s3490 = int_to_ptr.vmem [resolvable:$true] %s3489
          %3492 = dma.vmem_to_hbm [thread:$0]  %s3490, 32, %s3487, [#allocation5]
        $region96: #{tpu_custom_call.1} parent=71 // pred_fallthru
          _
        // Predicated region
        $region97: #{tpu_custom_call.1} parent=71 // pred_check
          %p3493 = pneg %p375
        $region98: #{tpu_custom_call.1} parent=71 // pred_check_branch
          %3495 = sbr.rel (%p3493) target = $region100
        $region99: #{tpu_custom_call.1} parent=71 // pred_region
          %3496 = dma.done [#allocation5], 32
        $region100: #{tpu_custom_call.1} parent=71 // pred_fallthru
          _
      $region72: #{tpu_custom_call.1} parent=5 // pred_fallthru
        _
      %p3497 = scmp.le.s32.totalorder 2, %s22
      // Predicated region
      $region101: #{tpu_custom_call.1} parent=5 // pred_check
        %p3498 = pneg %p3497
      $region102: #{tpu_custom_call.1} parent=5 // pred_check_branch
        %3500 = sbr.rel (%p3498) target = $region104
      $region103: #{tpu_custom_call.1} parent=5 // pred_region
        %s3501 = ssub.s32 %s22, 2
      $region104: #{tpu_custom_call.1} parent=5 // pred_fallthru
        _
    $region6: #{tpu_custom_call.1} parent=1 // loop_footer
      %s26 = sadd.s32 1, %s22
    $region7: #{tpu_custom_call.1} parent=1 // loop_footer_branch
      %21 = sbr.rel target = $region3
    $region8: #{tpu_custom_call.1} parent=1 // loop_exit
      _
    %3502 = vsyncpa [#allocation4], 1
    %s3503 = scalar_lea.sflag [#allocation4], 1
    %3504 = vsyncpa %s3503, 1
    %3505 = vsyncpa [#allocation7], 1
    %3506 = vsyncpa [#allocation5], 1
    %s3507 = scalar_lea.sflag [#allocation5], 1
    %3508 = vsyncpa %s3507, 1

</llo_original>
